<compile_context>
chip_gen: v6e
topology: v6e:2x2x1
jax: 0.10.0
libtpu: 0.0.40
codegen_flags: <defaults>
</compile_context>

<pallas_src>
import jax
import jax.numpy as jnp
from jax.experimental import pallas as pl
from jax.experimental.pallas import tpu as pltpu

BN_EPS = 1e-5
MXU_DTYPE = jnp.bfloat16          # MXU operand dtype (accumulation stays f32)
_LAYERS = ("stem", "b1a", "b1b", "b1s", "b1c", "b2a", "b2b", "b2c", "h1")


# ----------------------------------------------------------------------------
# Fused Pallas kernel: whole DiscriminatorBlock forward
# ----------------------------------------------------------------------------
def _make_kernel(layer_meta, h2_off, h2_cin, npts):
    """layer_meta: tuple of (row_offset, cin, cout) per conv+BN layer (static).
    h2_off/h2_cin: row offset / input width of the final head conv in the weight slab.
    npts: points per cloud (static)."""
    n_layers = len(layer_meta)

    def kernel(x_ref, mask_ref, w_ref, gb_ref, head_ref, o_ref):
        # x_ref   : (Cin_pad, M) f32, channels on sublanes, M = B*N points on lanes.
        # mask_ref: (1, M) f32 point-validity mask.
        # w_ref   : (R_pad, Cin_max) bf16 slab of all conv weights (sublane-stacked).
        # gb_ref  : (Cin_max, 2*n_layers) f32 slab: col i = gamma_i, col n+i = beta_i.
        # head_ref: (2, B) f32: row 0 = 1/point-count per cloud, row 1 = head conv bias.
        # o_ref   : (1, B) f32 discriminator scores.

        def conv_bn(x_bf, idx, relu=True, res=None):
            roff, cin, cout = layer_meta[idx]
            w = w_ref[roff:roff + cout, 0:cin]                         # (Cout, Cin) bf16
            # 1x1 Conv1d == channel matmul: bf16 operands on MXU, f32 accumulation.
            # Conv bias omitted: cancelled exactly by training-mode BN mean subtraction
            # (would NOT hold for eval-mode / running-stats BN).
            y = jnp.dot(w, x_bf, preferred_element_type=jnp.float32)   # (Cout, M) f32
            # Training-mode BatchNorm1d, one-pass biased batch stats, folded into one
            # per-channel scale/shift so the full-width work is a single FMA pass.
            # TODO(synk): one-pass E[y^2]-E[y]^2 can lose precision if |mean| >> std;
            #             switch to the two-pass estimator if training proves sensitive.
            mean = jnp.mean(y, axis=1, keepdims=True)
            mean_sq = jnp.mean(y * y, axis=1, keepdims=True)
            var = jnp.maximum(mean_sq - mean * mean, 0.0)
            gamma = gb_ref[0:cout, idx:idx + 1]                        # (Cout, 1)
            beta = gb_ref[0:cout, n_layers + idx:n_layers + idx + 1]   # (Cout, 1)
            scale = gamma * jax.lax.rsqrt(var + BN_EPS)
            shift = beta - mean * scale
            y = y * scale + shift
            if res is not None:
                y = y + res
            if relu:
                y = jnp.maximum(y, 0.0)
            return y

        x_bf = x_ref[...].astype(MXU_DTYPE)                            # (Cin_pad, M)

        # --- backbone: stem + two pointwise bottleneck residual blocks --------
        x0 = conv_bn(x_bf, 0)                          # stem                -> (half,  M)
        x0_bf = x0.astype(MXU_DTYPE)                   # hoisted: feeds b1a AND b1s
        a1 = conv_bn(x0_bf, 1)                         # b1a                 -> (bneck, M)
        b1 = conv_bn(a1.astype(MXU_DTYPE), 2)          # b1b                 -> (bneck, M)
        s1 = conv_bn(x0_bf, 3, relu=False)             # b1s (proj shortcut) -> (width, M)
        o1 = conv_bn(b1.astype(MXU_DTYPE), 4, relu=True, res=s1)   # b1c + shortcut
        a2 = conv_bn(o1.astype(MXU_DTYPE), 5)          # b2a
        b2 = conv_bn(a2.astype(MXU_DTYPE), 6)          # b2b
        o2 = conv_bn(b2.astype(MXU_DTYPE), 7, relu=True, res=o1)   # b2c + identity
        h = conv_bn(o2.astype(MXU_DTYPE), 8)           # h1                  -> (half,  M)

        # --- discriminator head ------------------------------------------------
        # Final 1x1 conv is linear, so project-then-pool == pool-then-project; the
        # mask multiply then touches a (1, M) row instead of a (half, M) slab.
        hw = w_ref[h2_off:h2_off + 1, 0:h2_cin]                        # (1, half) bf16
        s = jnp.dot(hw, h.astype(MXU_DTYPE),
                    preferred_element_type=jnp.float32)                # (1, M)
        s = s * mask_ref[...]                                          # masked scores
        # Block-diagonal 0/1 selection matrix built in-kernel (no (M, B) HBM DMA).
        m_pts = mask_ref.shape[1]
        bsz = o_ref.shape[1]
        pt = jax.lax.broadcasted_iota(jnp.int32, (m_pts, bsz), 0)      # point index
        cl = jax.lax.broadcasted_iota(jnp.int32, (m_pts, bsz), 1)      # cloud index
        lo = cl * npts
        sel = ((pt >= lo) & (pt < lo + npts)).astype(MXU_DTYPE)        # (M, B) 0/1
        pooled = jnp.dot(s.astype(MXU_DTYPE), sel,
                         preferred_element_type=jnp.float32)           # (1, B)
        inv_cnt = head_ref[0:1, :]
        h2_bias = head_ref[1:2, :]
        o_ref[...] = (pooled * inv_cnt + h2_bias).astype(o_ref.dtype)

    return kernel


# ----------------------------------------------------------------------------
# Wrapper
# ----------------------------------------------------------------------------
def _vmem_spec():
    return pl.BlockSpec(memory_space=pltpu.MemorySpace.VMEM)


def _vmem_limit_bytes():
    # Derive the scoped-VMEM limit from the actual part (64 MiB on v7x vs 128 MiB on
    # v5e/v6e) instead of hard-coding; leave headroom for compiler-internal scratch.
    try:
        cap = pltpu.get_tpu_info().vmem_capacity_bytes
    except Exception:  # pragma: no cover - conservative fallback
        cap = 64 * 1024 * 1024
    return max(32 * 1024 * 1024, min((cap * 5) // 8, 100 * 1024 * 1024))


def discriminator_block_forward(params, xyz, mask, features):
    """xyz: (B, N, 3), mask: (B, N) float, features: (B, C_in, N) (PyTorch NCL)."""
    del xyz  # consumed only by the (omitted) ball-query local aggregation
    bsz, cin, npts = features.shape
    m = bsz * npts

    # NCL -> channels-first flat (Cin, B*N); pad channels to a sublane multiple.
    cin_pad = max(8, cin + (-cin) % 8)
    x = jnp.transpose(features, (1, 0, 2)).reshape(cin, m)
    x = jnp.pad(x, ((0, cin_pad - cin), (0, 0)))

    mask_f = mask.astype(jnp.float32)
    mask_row = mask_f.reshape(1, m)                                    # (1, M)

    # ---- pack parameters into two slabs + one tiny head array ---------------
    # (Cheap pad/concat ops; can be hoisted/cached outside the step in real use.)
    width = params["b1s"][0].shape[0]
    cin_max = max(width, cin_pad)

    w_rows, layer_meta, roff = [], [], 0
    for name in _LAYERS:
        w = params[name][0]                    # (Cout, Cin); conv bias skipped (no-op
        cout, wcin = w.shape                   # under training-mode BN).
        kcin = cin_pad if name == "stem" else wcin
        layer_meta.append((roff, kcin, cout))
        w_rows.append(jnp.pad(w, ((0, 0), (0, cin_max - wcin))))
        roff += cout
    hw, hb = params["h2"]                      # (1, half) weight, (1, 1) bias
    h2_off, h2_cin = roff, hw.shape[1]
    w_rows.append(jnp.pad(hw, ((0, 0), (0, cin_max - h2_cin))))
    roff += 1
    w_slab = jnp.concatenate(w_rows, axis=0)
    w_slab = jnp.pad(w_slab, ((0, (-roff) % 8), (0, 0))).astype(MXU_DTYPE)

    g_cols, b_cols = [], []
    for name in _LAYERS:
        _, _, g, be = params[name]
        g_cols.append(jnp.pad(g, ((0, cin_max - g.shape[0]), (0, 0))))
        b_cols.append(jnp.pad(be, ((0, cin_max - be.shape[0]), (0, 0))))
    gb_slab = jnp.concatenate(g_cols + b_cols, axis=1)                 # (Cmax, 18) f32

    counts = jnp.maximum(jnp.sum(mask_f, axis=1), 1.0)                 # (B,)
    head = jnp.concatenate([(1.0 / counts)[None, :],
                            jnp.broadcast_to(hb, (1, bsz))], axis=0)   # (2, B)

    kernel = _make_kernel(tuple(layer_meta), h2_off, h2_cin, npts)
    inputs = [x, mask_row, w_slab, gb_slab, head]
    out = pl.pallas_call(
        kernel,
        out_shape=jax.ShapeDtypeStruct((1, bsz), jnp.float32),
        in_specs=[_vmem_spec() for _ in inputs],
        out_specs=_vmem_spec(),
        compiler_params=pltpu.CompilerParams(
            vmem_limit_bytes=_vmem_limit_bytes()),
    )(*inputs)
    return out.reshape(bsz, 1)                  # (B, 1) discriminator scores


# ----------------------------------------------------------------------------
# Parameter init (matches DiscriminatorBlock.init_weights semantics)
# ----------------------------------------------------------------------------
def _conv_params(key, cin, cout):
    # nn.init.normal_(conv.weight, 0.0, 0.02); bias zeros.  Stored (Cout, Cin).
    w = 0.02 * jax.random.normal(key, (cout, cin), jnp.float32)
    b = jnp.zeros((cout, 1), jnp.float32)
    return w, b


def _bn_params(key, c):
    # nn.init.normal_(bn.weight, 1.0, 0.02); bias zeros.
    g = 1.0 + 0.02 * jax.random.normal(key, (c, 1), jnp.float32)
    be = jnp.zeros((c, 1), jnp.float32)
    return g, be


def init_params(key, in_dim=3, width=144, bottleneck_ratio=2):
    half = width // 2
    bneck = width // bottleneck_ratio
    dims = {
        "stem": (in_dim, half),
        "b1a": (half, bneck), "b1b": (bneck, bneck),
        "b1s": (half, width), "b1c": (bneck, width),
        "b2a": (width, bneck), "b2b": (bneck, bneck), "b2c": (bneck, width),
        "h1": (width, half),
    }
    keys = jax.random.split(key, 2 * len(_LAYERS) + 1)
    p = {}
    for i, name in enumerate(_LAYERS):
        cin, cout = dims[name]
        p[name] = _conv_params(keys[2 * i], cin, cout) + _bn_params(keys[2 * i + 1], cout)
    hw = 0.02 * jax.random.normal(keys[-1], (1, half), jnp.float32)    # (Cout=1, Cin=half)
    hb = jnp.zeros((1, 1), jnp.float32)
    p["h2"] = (hw, hb)
    return p


# ----------------------------------------------------------------------------
if __name__ == "__main__":
    key = jax.random.PRNGKey(0)
    B, N = 2, 128
    input_features_dim = 0          # -> 3 channels (xyz), per the module
    width, depth, bottleneck_ratio = 144, 2, 2

    k_xyz, k_params = jax.random.split(key)
    xyz = jax.random.normal(k_xyz, (B, N, 3), jnp.float32)
    features = jnp.transpose(xyz, (0, 2, 1))                    # (B, 3, N), NCL
    mask = (jnp.arange(N)[None, :] < (N - 5)).astype(jnp.float32)
    mask = jnp.broadcast_to(mask, (B, N))

    params = init_params(k_params, in_dim=3, width=width,
                         bottleneck_ratio=bottleneck_ratio)

    scores = discriminator_block_forward(params, xyz, mask, features)
    scores = jax.block_until_ready(scores)
    assert scores.shape == (B, 1) and bool(jnp.all(jnp.isfinite(scores)))
    print("KERNEL_OK")
</pallas_src>

<mosaic_0001>
module attributes {stable_mosaic.version = 11 : i64} {
  func.func @kernel(%arg0: memref<8x256xf32, #tpu.memory_space<vmem>>, %arg1: memref<1x256xf32, #tpu.memory_space<vmem>>, %arg2: memref<872x144xbf16, #tpu.memory_space<vmem>>, %arg3: memref<144x18xf32, #tpu.memory_space<vmem>>, %arg4: memref<2x2xf32, #tpu.memory_space<vmem>>, %arg5: memref<1x2xf32, #tpu.memory_space<vmem>>) attributes {dimension_semantics = [], scalar_prefetch = 0 : i64, scratch_operands = 0 : i64, tpu.core_type = #tpu.core_type<tc>} {
    %c0 = arith.constant 0 : index
    %c0_0 = arith.constant 0 : index
    %0 = vector.load %arg0[%c0, %c0_0] : memref<8x256xf32, #tpu.memory_space<vmem>>, vector<8x256xf32>
    %1 = arith.truncf %0 : vector<8x256xf32> to vector<8x256xbf16>
    %c0_1 = arith.constant 0 : index
    %c0_2 = arith.constant 0 : index
    %2 = vector.load %arg2[%c0_1, %c0_2] : memref<872x144xbf16, #tpu.memory_space<vmem>>, vector<72x8xbf16>
    %cst = arith.constant dense<0.000000e+00> : vector<72x256xf32>
    %3 = tpu.matmul %2, %1, %cst {dimension_numbers = #tpu.dot_dimension_numbers<[1], [0], [0], [1], [0, 0, 1, 1], [], []>} : vector<72x8xbf16>, vector<8x256xbf16>, vector<72x256xf32> -> vector<72x256xf32>
    %cst_3 = arith.constant dense<0.000000e+00> : vector<72xf32>
    %4 = vector.multi_reduction <add>, %3, %cst_3 [1] : vector<72x256xf32> to vector<72xf32>
    %5 = vector.shape_cast %4 : vector<72xf32> to vector<72x1xf32>
    %cst_4 = arith.constant 2.560000e+02 : f32
    %6 = vector.broadcast %cst_4 : f32 to vector<72x1xf32>
    %7 = arith.divf %5, %6 : vector<72x1xf32>
    %8 = arith.mulf %3, %3 : vector<72x256xf32>
    %cst_5 = arith.constant dense<0.000000e+00> : vector<72xf32>
    %9 = vector.multi_reduction <add>, %8, %cst_5 [1] : vector<72x256xf32> to vector<72xf32>
    %10 = vector.shape_cast %9 : vector<72xf32> to vector<72x1xf32>
    %cst_6 = arith.constant 2.560000e+02 : f32
    %11 = vector.broadcast %cst_6 : f32 to vector<72x1xf32>
    %12 = arith.divf %10, %11 : vector<72x1xf32>
    %13 = arith.mulf %7, %7 : vector<72x1xf32>
    %14 = arith.subf %12, %13 : vector<72x1xf32>
    %cst_7 = arith.constant 0.000000e+00 : f32
    %15 = vector.broadcast %cst_7 : f32 to vector<72x1xf32>
    %16 = arith.maximumf %14, %15 : vector<72x1xf32>
    %c0_8 = arith.constant 0 : index
    %c0_9 = arith.constant 0 : index
    %17 = vector.load %arg3[%c0_8, %c0_9] : memref<144x18xf32, #tpu.memory_space<vmem>>, vector<72x1xf32>
    %c0_10 = arith.constant 0 : index
    %c9 = arith.constant 9 : index
    %18 = vector.load %arg3[%c0_10, %c9] : memref<144x18xf32, #tpu.memory_space<vmem>>, vector<72x1xf32>
    %cst_11 = arith.constant 9.99999974E-6 : f32
    %19 = vector.broadcast %cst_11 : f32 to vector<72x1xf32>
    %20 = arith.addf %16, %19 : vector<72x1xf32>
    %21 = math.rsqrt %20 : vector<72x1xf32>
    %22 = arith.mulf %17, %21 : vector<72x1xf32>
    %23 = arith.mulf %7, %22 : vector<72x1xf32>
    %24 = arith.subf %18, %23 : vector<72x1xf32>
    %25 = vector.broadcast %22 : vector<72x1xf32> to vector<72x256xf32>
    %26 = arith.mulf %3, %25 : vector<72x256xf32>
    %27 = vector.broadcast %24 : vector<72x1xf32> to vector<72x256xf32>
    %28 = arith.addf %26, %27 : vector<72x256xf32>
    %cst_12 = arith.constant 0.000000e+00 : f32
    %29 = vector.broadcast %cst_12 : f32 to vector<72x256xf32>
    %30 = arith.maximumf %28, %29 : vector<72x256xf32>
    %31 = arith.truncf %30 : vector<72x256xf32> to vector<72x256xbf16>
    %c72 = arith.constant 72 : index
    %c0_13 = arith.constant 0 : index
    %32 = vector.load %arg2[%c72, %c0_13] : memref<872x144xbf16, #tpu.memory_space<vmem>>, vector<72x72xbf16>
    %cst_14 = arith.constant dense<0.000000e+00> : vector<72x256xf32>
    %33 = tpu.matmul %32, %31, %cst_14 {dimension_numbers = #tpu.dot_dimension_numbers<[1], [0], [0], [1], [0, 0, 1, 1], [], []>} : vector<72x72xbf16>, vector<72x256xbf16>, vector<72x256xf32> -> vector<72x256xf32>
    %cst_15 = arith.constant dense<0.000000e+00> : vector<72xf32>
    %34 = vector.multi_reduction <add>, %33, %cst_15 [1] : vector<72x256xf32> to vector<72xf32>
    %35 = vector.shape_cast %34 : vector<72xf32> to vector<72x1xf32>
    %cst_16 = arith.constant 2.560000e+02 : f32
    %36 = vector.broadcast %cst_16 : f32 to vector<72x1xf32>
    %37 = arith.divf %35, %36 : vector<72x1xf32>
    %38 = arith.mulf %33, %33 : vector<72x256xf32>
    %cst_17 = arith.constant dense<0.000000e+00> : vector<72xf32>
    %39 = vector.multi_reduction <add>, %38, %cst_17 [1] : vector<72x256xf32> to vector<72xf32>
    %40 = vector.shape_cast %39 : vector<72xf32> to vector<72x1xf32>
    %cst_18 = arith.constant 2.560000e+02 : f32
    %41 = vector.broadcast %cst_18 : f32 to vector<72x1xf32>
    %42 = arith.divf %40, %41 : vector<72x1xf32>
    %43 = arith.mulf %37, %37 : vector<72x1xf32>
    %44 = arith.subf %42, %43 : vector<72x1xf32>
    %cst_19 = arith.constant 0.000000e+00 : f32
    %45 = vector.broadcast %cst_19 : f32 to vector<72x1xf32>
    %46 = arith.maximumf %44, %45 : vector<72x1xf32>
    %c0_20 = arith.constant 0 : index
    %c1 = arith.constant 1 : index
    %47 = vector.load %arg3[%c0_20, %c1] : memref<144x18xf32, #tpu.memory_space<vmem>>, vector<72x1xf32>
    %c0_21 = arith.constant 0 : index
    %c10 = arith.constant 10 : index
    %48 = vector.load %arg3[%c0_21, %c10] : memref<144x18xf32, #tpu.memory_space<vmem>>, vector<72x1xf32>
    %cst_22 = arith.constant 9.99999974E-6 : f32
    %49 = vector.broadcast %cst_22 : f32 to vector<72x1xf32>
    %50 = arith.addf %46, %49 : vector<72x1xf32>
    %51 = math.rsqrt %50 : vector<72x1xf32>
    %52 = arith.mulf %47, %51 : vector<72x1xf32>
    %53 = arith.mulf %37, %52 : vector<72x1xf32>
    %54 = arith.subf %48, %53 : vector<72x1xf32>
    %55 = vector.broadcast %52 : vector<72x1xf32> to vector<72x256xf32>
    %56 = arith.mulf %33, %55 : vector<72x256xf32>
    %57 = vector.broadcast %54 : vector<72x1xf32> to vector<72x256xf32>
    %58 = arith.addf %56, %57 : vector<72x256xf32>
    %cst_23 = arith.constant 0.000000e+00 : f32
    %59 = vector.broadcast %cst_23 : f32 to vector<72x256xf32>
    %60 = arith.maximumf %58, %59 : vector<72x256xf32>
    %61 = arith.truncf %60 : vector<72x256xf32> to vector<72x256xbf16>
    %c144 = arith.constant 144 : index
    %c0_24 = arith.constant 0 : index
    %62 = vector.load %arg2[%c144, %c0_24] : memref<872x144xbf16, #tpu.memory_space<vmem>>, vector<72x72xbf16>
    %cst_25 = arith.constant dense<0.000000e+00> : vector<72x256xf32>
    %63 = tpu.matmul %62, %61, %cst_25 {dimension_numbers = #tpu.dot_dimension_numbers<[1], [0], [0], [1], [0, 0, 1, 1], [], []>} : vector<72x72xbf16>, vector<72x256xbf16>, vector<72x256xf32> -> vector<72x256xf32>
    %cst_26 = arith.constant dense<0.000000e+00> : vector<72xf32>
    %64 = vector.multi_reduction <add>, %63, %cst_26 [1] : vector<72x256xf32> to vector<72xf32>
    %65 = vector.shape_cast %64 : vector<72xf32> to vector<72x1xf32>
    %cst_27 = arith.constant 2.560000e+02 : f32
    %66 = vector.broadcast %cst_27 : f32 to vector<72x1xf32>
    %67 = arith.divf %65, %66 : vector<72x1xf32>
    %68 = arith.mulf %63, %63 : vector<72x256xf32>
    %cst_28 = arith.constant dense<0.000000e+00> : vector<72xf32>
    %69 = vector.multi_reduction <add>, %68, %cst_28 [1] : vector<72x256xf32> to vector<72xf32>
    %70 = vector.shape_cast %69 : vector<72xf32> to vector<72x1xf32>
    %cst_29 = arith.constant 2.560000e+02 : f32
    %71 = vector.broadcast %cst_29 : f32 to vector<72x1xf32>
    %72 = arith.divf %70, %71 : vector<72x1xf32>
    %73 = arith.mulf %67, %67 : vector<72x1xf32>
    %74 = arith.subf %72, %73 : vector<72x1xf32>
    %cst_30 = arith.constant 0.000000e+00 : f32
    %75 = vector.broadcast %cst_30 : f32 to vector<72x1xf32>
    %76 = arith.maximumf %74, %75 : vector<72x1xf32>
    %c0_31 = arith.constant 0 : index
    %c2 = arith.constant 2 : index
    %77 = vector.load %arg3[%c0_31, %c2] : memref<144x18xf32, #tpu.memory_space<vmem>>, vector<72x1xf32>
    %c0_32 = arith.constant 0 : index
    %c11 = arith.constant 11 : index
    %78 = vector.load %arg3[%c0_32, %c11] : memref<144x18xf32, #tpu.memory_space<vmem>>, vector<72x1xf32>
    %cst_33 = arith.constant 9.99999974E-6 : f32
    %79 = vector.broadcast %cst_33 : f32 to vector<72x1xf32>
    %80 = arith.addf %76, %79 : vector<72x1xf32>
    %81 = math.rsqrt %80 : vector<72x1xf32>
    %82 = arith.mulf %77, %81 : vector<72x1xf32>
    %83 = arith.mulf %67, %82 : vector<72x1xf32>
    %84 = arith.subf %78, %83 : vector<72x1xf32>
    %85 = vector.broadcast %82 : vector<72x1xf32> to vector<72x256xf32>
    %86 = arith.mulf %63, %85 : vector<72x256xf32>
    %87 = vector.broadcast %84 : vector<72x1xf32> to vector<72x256xf32>
    %88 = arith.addf %86, %87 : vector<72x256xf32>
    %cst_34 = arith.constant 0.000000e+00 : f32
    %89 = vector.broadcast %cst_34 : f32 to vector<72x256xf32>
    %90 = arith.maximumf %88, %89 : vector<72x256xf32>
    %c216 = arith.constant 216 : index
    %c0_35 = arith.constant 0 : index
    %91 = vector.load %arg2[%c216, %c0_35] : memref<872x144xbf16, #tpu.memory_space<vmem>>, vector<144x72xbf16>
    %cst_36 = arith.constant dense<0.000000e+00> : vector<144x256xf32>
    %92 = tpu.matmul %91, %31, %cst_36 {dimension_numbers = #tpu.dot_dimension_numbers<[1], [0], [0], [1], [0, 0, 1, 1], [], []>} : vector<144x72xbf16>, vector<72x256xbf16>, vector<144x256xf32> -> vector<144x256xf32>
    %cst_37 = arith.constant dense<0.000000e+00> : vector<144xf32>
    %93 = vector.multi_reduction <add>, %92, %cst_37 [1] : vector<144x256xf32> to vector<144xf32>
    %94 = vector.shape_cast %93 : vector<144xf32> to vector<144x1xf32>
    %cst_38 = arith.constant 2.560000e+02 : f32
    %95 = vector.broadcast %cst_38 : f32 to vector<144x1xf32>
    %96 = arith.divf %94, %95 : vector<144x1xf32>
    %97 = arith.mulf %92, %92 : vector<144x256xf32>
    %cst_39 = arith.constant dense<0.000000e+00> : vector<144xf32>
    %98 = vector.multi_reduction <add>, %97, %cst_39 [1] : vector<144x256xf32> to vector<144xf32>
    %99 = vector.shape_cast %98 : vector<144xf32> to vector<144x1xf32>
    %cst_40 = arith.constant 2.560000e+02 : f32
    %100 = vector.broadcast %cst_40 : f32 to vector<144x1xf32>
    %101 = arith.divf %99, %100 : vector<144x1xf32>
    %102 = arith.mulf %96, %96 : vector<144x1xf32>
    %103 = arith.subf %101, %102 : vector<144x1xf32>
    %cst_41 = arith.constant 0.000000e+00 : f32
    %104 = vector.broadcast %cst_41 : f32 to vector<144x1xf32>
    %105 = arith.maximumf %103, %104 : vector<144x1xf32>
    %c0_42 = arith.constant 0 : index
    %c3 = arith.constant 3 : index
    %106 = vector.load %arg3[%c0_42, %c3] : memref<144x18xf32, #tpu.memory_space<vmem>>, vector<144x1xf32>
    %c0_43 = arith.constant 0 : index
    %c12 = arith.constant 12 : index
    %107 = vector.load %arg3[%c0_43, %c12] : memref<144x18xf32, #tpu.memory_space<vmem>>, vector<144x1xf32>
    %cst_44 = arith.constant 9.99999974E-6 : f32
    %108 = vector.broadcast %cst_44 : f32 to vector<144x1xf32>
    %109 = arith.addf %105, %108 : vector<144x1xf32>
    %110 = math.rsqrt %109 : vector<144x1xf32>
    %111 = arith.mulf %106, %110 : vector<144x1xf32>
    %112 = arith.mulf %96, %111 : vector<144x1xf32>
    %113 = arith.subf %107, %112 : vector<144x1xf32>
    %114 = vector.broadcast %111 : vector<144x1xf32> to vector<144x256xf32>
    %115 = arith.mulf %92, %114 : vector<144x256xf32>
    %116 = vector.broadcast %113 : vector<144x1xf32> to vector<144x256xf32>
    %117 = arith.addf %115, %116 : vector<144x256xf32>
    %118 = arith.truncf %90 : vector<72x256xf32> to vector<72x256xbf16>
    %c360 = arith.constant 360 : index
    %c0_45 = arith.constant 0 : index
    %119 = vector.load %arg2[%c360, %c0_45] : memref<872x144xbf16, #tpu.memory_space<vmem>>, vector<144x72xbf16>
    %cst_46 = arith.constant dense<0.000000e+00> : vector<144x256xf32>
    %120 = tpu.matmul %119, %118, %cst_46 {dimension_numbers = #tpu.dot_dimension_numbers<[1], [0], [0], [1], [0, 0, 1, 1], [], []>} : vector<144x72xbf16>, vector<72x256xbf16>, vector<144x256xf32> -> vector<144x256xf32>
    %cst_47 = arith.constant dense<0.000000e+00> : vector<144xf32>
    %121 = vector.multi_reduction <add>, %120, %cst_47 [1] : vector<144x256xf32> to vector<144xf32>
    %122 = vector.shape_cast %121 : vector<144xf32> to vector<144x1xf32>
    %cst_48 = arith.constant 2.560000e+02 : f32
    %123 = vector.broadcast %cst_48 : f32 to vector<144x1xf32>
    %124 = arith.divf %122, %123 : vector<144x1xf32>
    %125 = arith.mulf %120, %120 : vector<144x256xf32>
    %cst_49 = arith.constant dense<0.000000e+00> : vector<144xf32>
    %126 = vector.multi_reduction <add>, %125, %cst_49 [1] : vector<144x256xf32> to vector<144xf32>
    %127 = vector.shape_cast %126 : vector<144xf32> to vector<144x1xf32>
    %cst_50 = arith.constant 2.560000e+02 : f32
    %128 = vector.broadcast %cst_50 : f32 to vector<144x1xf32>
    %129 = arith.divf %127, %128 : vector<144x1xf32>
    %130 = arith.mulf %124, %124 : vector<144x1xf32>
    %131 = arith.subf %129, %130 : vector<144x1xf32>
    %cst_51 = arith.constant 0.000000e+00 : f32
    %132 = vector.broadcast %cst_51 : f32 to vector<144x1xf32>
    %133 = arith.maximumf %131, %132 : vector<144x1xf32>
    %c0_52 = arith.constant 0 : index
    %c4 = arith.constant 4 : index
    %134 = vector.load %arg3[%c0_52, %c4] : memref<144x18xf32, #tpu.memory_space<vmem>>, vector<144x1xf32>
    %c0_53 = arith.constant 0 : index
    %c13 = arith.constant 13 : index
    %135 = vector.load %arg3[%c0_53, %c13] : memref<144x18xf32, #tpu.memory_space<vmem>>, vector<144x1xf32>
    %cst_54 = arith.constant 9.99999974E-6 : f32
    %136 = vector.broadcast %cst_54 : f32 to vector<144x1xf32>
    %137 = arith.addf %133, %136 : vector<144x1xf32>
    %138 = math.rsqrt %137 : vector<144x1xf32>
    %139 = arith.mulf %134, %138 : vector<144x1xf32>
    %140 = arith.mulf %124, %139 : vector<144x1xf32>
    %141 = arith.subf %135, %140 : vector<144x1xf32>
    %142 = vector.broadcast %139 : vector<144x1xf32> to vector<144x256xf32>
    %143 = arith.mulf %120, %142 : vector<144x256xf32>
    %144 = vector.broadcast %141 : vector<144x1xf32> to vector<144x256xf32>
    %145 = arith.addf %143, %144 : vector<144x256xf32>
    %146 = arith.addf %145, %117 : vector<144x256xf32>
    %cst_55 = arith.constant 0.000000e+00 : f32
    %147 = vector.broadcast %cst_55 : f32 to vector<144x256xf32>
    %148 = arith.maximumf %146, %147 : vector<144x256xf32>
    %149 = arith.truncf %148 : vector<144x256xf32> to vector<144x256xbf16>
    %c504 = arith.constant 504 : index
    %c0_56 = arith.constant 0 : index
    %150 = vector.load %arg2[%c504, %c0_56] : memref<872x144xbf16, #tpu.memory_space<vmem>>, vector<72x144xbf16>
    %cst_57 = arith.constant dense<0.000000e+00> : vector<72x256xf32>
    %151 = tpu.matmul %150, %149, %cst_57 {dimension_numbers = #tpu.dot_dimension_numbers<[1], [0], [0], [1], [0, 0, 1, 1], [], []>} : vector<72x144xbf16>, vector<144x256xbf16>, vector<72x256xf32> -> vector<72x256xf32>
    %cst_58 = arith.constant dense<0.000000e+00> : vector<72xf32>
    %152 = vector.multi_reduction <add>, %151, %cst_58 [1] : vector<72x256xf32> to vector<72xf32>
    %153 = vector.shape_cast %152 : vector<72xf32> to vector<72x1xf32>
    %cst_59 = arith.constant 2.560000e+02 : f32
    %154 = vector.broadcast %cst_59 : f32 to vector<72x1xf32>
    %155 = arith.divf %153, %154 : vector<72x1xf32>
    %156 = arith.mulf %151, %151 : vector<72x256xf32>
    %cst_60 = arith.constant dense<0.000000e+00> : vector<72xf32>
    %157 = vector.multi_reduction <add>, %156, %cst_60 [1] : vector<72x256xf32> to vector<72xf32>
    %158 = vector.shape_cast %157 : vector<72xf32> to vector<72x1xf32>
    %cst_61 = arith.constant 2.560000e+02 : f32
    %159 = vector.broadcast %cst_61 : f32 to vector<72x1xf32>
    %160 = arith.divf %158, %159 : vector<72x1xf32>
    %161 = arith.mulf %155, %155 : vector<72x1xf32>
    %162 = arith.subf %160, %161 : vector<72x1xf32>
    %cst_62 = arith.constant 0.000000e+00 : f32
    %163 = vector.broadcast %cst_62 : f32 to vector<72x1xf32>
    %164 = arith.maximumf %162, %163 : vector<72x1xf32>
    %c0_63 = arith.constant 0 : index
    %c5 = arith.constant 5 : index
    %165 = vector.load %arg3[%c0_63, %c5] : memref<144x18xf32, #tpu.memory_space<vmem>>, vector<72x1xf32>
    %c0_64 = arith.constant 0 : index
    %c14 = arith.constant 14 : index
    %166 = vector.load %arg3[%c0_64, %c14] : memref<144x18xf32, #tpu.memory_space<vmem>>, vector<72x1xf32>
    %cst_65 = arith.constant 9.99999974E-6 : f32
    %167 = vector.broadcast %cst_65 : f32 to vector<72x1xf32>
    %168 = arith.addf %164, %167 : vector<72x1xf32>
    %169 = math.rsqrt %168 : vector<72x1xf32>
    %170 = arith.mulf %165, %169 : vector<72x1xf32>
    %171 = arith.mulf %155, %170 : vector<72x1xf32>
    %172 = arith.subf %166, %171 : vector<72x1xf32>
    %173 = vector.broadcast %170 : vector<72x1xf32> to vector<72x256xf32>
    %174 = arith.mulf %151, %173 : vector<72x256xf32>
    %175 = vector.broadcast %172 : vector<72x1xf32> to vector<72x256xf32>
    %176 = arith.addf %174, %175 : vector<72x256xf32>
    %cst_66 = arith.constant 0.000000e+00 : f32
    %177 = vector.broadcast %cst_66 : f32 to vector<72x256xf32>
    %178 = arith.maximumf %176, %177 : vector<72x256xf32>
    %179 = arith.truncf %178 : vector<72x256xf32> to vector<72x256xbf16>
    %c576 = arith.constant 576 : index
    %c0_67 = arith.constant 0 : index
    %180 = vector.load %arg2[%c576, %c0_67] : memref<872x144xbf16, #tpu.memory_space<vmem>>, vector<72x72xbf16>
    %cst_68 = arith.constant dense<0.000000e+00> : vector<72x256xf32>
    %181 = tpu.matmul %180, %179, %cst_68 {dimension_numbers = #tpu.dot_dimension_numbers<[1], [0], [0], [1], [0, 0, 1, 1], [], []>} : vector<72x72xbf16>, vector<72x256xbf16>, vector<72x256xf32> -> vector<72x256xf32>
    %cst_69 = arith.constant dense<0.000000e+00> : vector<72xf32>
    %182 = vector.multi_reduction <add>, %181, %cst_69 [1] : vector<72x256xf32> to vector<72xf32>
    %183 = vector.shape_cast %182 : vector<72xf32> to vector<72x1xf32>
    %cst_70 = arith.constant 2.560000e+02 : f32
    %184 = vector.broadcast %cst_70 : f32 to vector<72x1xf32>
    %185 = arith.divf %183, %184 : vector<72x1xf32>
    %186 = arith.mulf %181, %181 : vector<72x256xf32>
    %cst_71 = arith.constant dense<0.000000e+00> : vector<72xf32>
    %187 = vector.multi_reduction <add>, %186, %cst_71 [1] : vector<72x256xf32> to vector<72xf32>
    %188 = vector.shape_cast %187 : vector<72xf32> to vector<72x1xf32>
    %cst_72 = arith.constant 2.560000e+02 : f32
    %189 = vector.broadcast %cst_72 : f32 to vector<72x1xf32>
    %190 = arith.divf %188, %189 : vector<72x1xf32>
    %191 = arith.mulf %185, %185 : vector<72x1xf32>
    %192 = arith.subf %190, %191 : vector<72x1xf32>
    %cst_73 = arith.constant 0.000000e+00 : f32
    %193 = vector.broadcast %cst_73 : f32 to vector<72x1xf32>
    %194 = arith.maximumf %192, %193 : vector<72x1xf32>
    %c0_74 = arith.constant 0 : index
    %c6 = arith.constant 6 : index
    %195 = vector.load %arg3[%c0_74, %c6] : memref<144x18xf32, #tpu.memory_space<vmem>>, vector<72x1xf32>
    %c0_75 = arith.constant 0 : index
    %c15 = arith.constant 15 : index
    %196 = vector.load %arg3[%c0_75, %c15] : memref<144x18xf32, #tpu.memory_space<vmem>>, vector<72x1xf32>
    %cst_76 = arith.constant 9.99999974E-6 : f32
    %197 = vector.broadcast %cst_76 : f32 to vector<72x1xf32>
    %198 = arith.addf %194, %197 : vector<72x1xf32>
    %199 = math.rsqrt %198 : vector<72x1xf32>
    %200 = arith.mulf %195, %199 : vector<72x1xf32>
    %201 = arith.mulf %185, %200 : vector<72x1xf32>
    %202 = arith.subf %196, %201 : vector<72x1xf32>
    %203 = vector.broadcast %200 : vector<72x1xf32> to vector<72x256xf32>
    %204 = arith.mulf %181, %203 : vector<72x256xf32>
    %205 = vector.broadcast %202 : vector<72x1xf32> to vector<72x256xf32>
    %206 = arith.addf %204, %205 : vector<72x256xf32>
    %cst_77 = arith.constant 0.000000e+00 : f32
    %207 = vector.broadcast %cst_77 : f32 to vector<72x256xf32>
    %208 = arith.maximumf %206, %207 : vector<72x256xf32>
    %209 = arith.truncf %208 : vector<72x256xf32> to vector<72x256xbf16>
    %c648 = arith.constant 648 : index
    %c0_78 = arith.constant 0 : index
    %210 = vector.load %arg2[%c648, %c0_78] : memref<872x144xbf16, #tpu.memory_space<vmem>>, vector<144x72xbf16>
    %cst_79 = arith.constant dense<0.000000e+00> : vector<144x256xf32>
    %211 = tpu.matmul %210, %209, %cst_79 {dimension_numbers = #tpu.dot_dimension_numbers<[1], [0], [0], [1], [0, 0, 1, 1], [], []>} : vector<144x72xbf16>, vector<72x256xbf16>, vector<144x256xf32> -> vector<144x256xf32>
    %cst_80 = arith.constant dense<0.000000e+00> : vector<144xf32>
    %212 = vector.multi_reduction <add>, %211, %cst_80 [1] : vector<144x256xf32> to vector<144xf32>
    %213 = vector.shape_cast %212 : vector<144xf32> to vector<144x1xf32>
    %cst_81 = arith.constant 2.560000e+02 : f32
    %214 = vector.broadcast %cst_81 : f32 to vector<144x1xf32>
    %215 = arith.divf %213, %214 : vector<144x1xf32>
    %216 = arith.mulf %211, %211 : vector<144x256xf32>
    %cst_82 = arith.constant dense<0.000000e+00> : vector<144xf32>
    %217 = vector.multi_reduction <add>, %216, %cst_82 [1] : vector<144x256xf32> to vector<144xf32>
    %218 = vector.shape_cast %217 : vector<144xf32> to vector<144x1xf32>
    %cst_83 = arith.constant 2.560000e+02 : f32
    %219 = vector.broadcast %cst_83 : f32 to vector<144x1xf32>
    %220 = arith.divf %218, %219 : vector<144x1xf32>
    %221 = arith.mulf %215, %215 : vector<144x1xf32>
    %222 = arith.subf %220, %221 : vector<144x1xf32>
    %cst_84 = arith.constant 0.000000e+00 : f32
    %223 = vector.broadcast %cst_84 : f32 to vector<144x1xf32>
    %224 = arith.maximumf %222, %223 : vector<144x1xf32>
    %c0_85 = arith.constant 0 : index
    %c7 = arith.constant 7 : index
    %225 = vector.load %arg3[%c0_85, %c7] : memref<144x18xf32, #tpu.memory_space<vmem>>, vector<144x1xf32>
    %c0_86 = arith.constant 0 : index
    %c16 = arith.constant 16 : index
    %226 = vector.load %arg3[%c0_86, %c16] : memref<144x18xf32, #tpu.memory_space<vmem>>, vector<144x1xf32>
    %cst_87 = arith.constant 9.99999974E-6 : f32
    %227 = vector.broadcast %cst_87 : f32 to vector<144x1xf32>
    %228 = arith.addf %224, %227 : vector<144x1xf32>
    %229 = math.rsqrt %228 : vector<144x1xf32>
    %230 = arith.mulf %225, %229 : vector<144x1xf32>
    %231 = arith.mulf %215, %230 : vector<144x1xf32>
    %232 = arith.subf %226, %231 : vector<144x1xf32>
    %233 = vector.broadcast %230 : vector<144x1xf32> to vector<144x256xf32>
    %234 = arith.mulf %211, %233 : vector<144x256xf32>
    %235 = vector.broadcast %232 : vector<144x1xf32> to vector<144x256xf32>
    %236 = arith.addf %234, %235 : vector<144x256xf32>
    %237 = arith.addf %236, %148 : vector<144x256xf32>
    %cst_88 = arith.constant 0.000000e+00 : f32
    %238 = vector.broadcast %cst_88 : f32 to vector<144x256xf32>
    %239 = arith.maximumf %237, %238 : vector<144x256xf32>
    %240 = arith.truncf %239 : vector<144x256xf32> to vector<144x256xbf16>
    %c792 = arith.constant 792 : index
    %c0_89 = arith.constant 0 : index
    %241 = vector.load %arg2[%c792, %c0_89] : memref<872x144xbf16, #tpu.memory_space<vmem>>, vector<72x144xbf16>
    %cst_90 = arith.constant dense<0.000000e+00> : vector<72x256xf32>
    %242 = tpu.matmul %241, %240, %cst_90 {dimension_numbers = #tpu.dot_dimension_numbers<[1], [0], [0], [1], [0, 0, 1, 1], [], []>} : vector<72x144xbf16>, vector<144x256xbf16>, vector<72x256xf32> -> vector<72x256xf32>
    %cst_91 = arith.constant dense<0.000000e+00> : vector<72xf32>
    %243 = vector.multi_reduction <add>, %242, %cst_91 [1] : vector<72x256xf32> to vector<72xf32>
    %244 = vector.shape_cast %243 : vector<72xf32> to vector<72x1xf32>
    %cst_92 = arith.constant 2.560000e+02 : f32
    %245 = vector.broadcast %cst_92 : f32 to vector<72x1xf32>
    %246 = arith.divf %244, %245 : vector<72x1xf32>
    %247 = arith.mulf %242, %242 : vector<72x256xf32>
    %cst_93 = arith.constant dense<0.000000e+00> : vector<72xf32>
    %248 = vector.multi_reduction <add>, %247, %cst_93 [1] : vector<72x256xf32> to vector<72xf32>
    %249 = vector.shape_cast %248 : vector<72xf32> to vector<72x1xf32>
    %cst_94 = arith.constant 2.560000e+02 : f32
    %250 = vector.broadcast %cst_94 : f32 to vector<72x1xf32>
    %251 = arith.divf %249, %250 : vector<72x1xf32>
    %252 = arith.mulf %246, %246 : vector<72x1xf32>
    %253 = arith.subf %251, %252 : vector<72x1xf32>
    %cst_95 = arith.constant 0.000000e+00 : f32
    %254 = vector.broadcast %cst_95 : f32 to vector<72x1xf32>
    %255 = arith.maximumf %253, %254 : vector<72x1xf32>
    %c0_96 = arith.constant 0 : index
    %c8 = arith.constant 8 : index
    %256 = vector.load %arg3[%c0_96, %c8] : memref<144x18xf32, #tpu.memory_space<vmem>>, vector<72x1xf32>
    %c0_97 = arith.constant 0 : index
    %c17 = arith.constant 17 : index
    %257 = vector.load %arg3[%c0_97, %c17] : memref<144x18xf32, #tpu.memory_space<vmem>>, vector<72x1xf32>
    %cst_98 = arith.constant 9.99999974E-6 : f32
    %258 = vector.broadcast %cst_98 : f32 to vector<72x1xf32>
    %259 = arith.addf %255, %258 : vector<72x1xf32>
    %260 = math.rsqrt %259 : vector<72x1xf32>
    %261 = arith.mulf %256, %260 : vector<72x1xf32>
    %262 = arith.mulf %246, %261 : vector<72x1xf32>
    %263 = arith.subf %257, %262 : vector<72x1xf32>
    %264 = vector.broadcast %261 : vector<72x1xf32> to vector<72x256xf32>
    %265 = arith.mulf %242, %264 : vector<72x256xf32>
    %266 = vector.broadcast %263 : vector<72x1xf32> to vector<72x256xf32>
    %267 = arith.addf %265, %266 : vector<72x256xf32>
    %cst_99 = arith.constant 0.000000e+00 : f32
    %268 = vector.broadcast %cst_99 : f32 to vector<72x256xf32>
    %269 = arith.maximumf %267, %268 : vector<72x256xf32>
    %c864 = arith.constant 864 : index
    %c0_100 = arith.constant 0 : index
    %270 = vector.load %arg2[%c864, %c0_100] : memref<872x144xbf16, #tpu.memory_space<vmem>>, vector<1x72xbf16>
    %271 = arith.truncf %269 : vector<72x256xf32> to vector<72x256xbf16>
    %cst_101 = arith.constant dense<0.000000e+00> : vector<1x256xf32>
    %272 = tpu.matmul %270, %271, %cst_101 {dimension_numbers = #tpu.dot_dimension_numbers<[1], [0], [0], [1], [0, 0, 1, 1], [], []>} : vector<1x72xbf16>, vector<72x256xbf16>, vector<1x256xf32> -> vector<1x256xf32>
    %c0_102 = arith.constant 0 : index
    %c0_103 = arith.constant 0 : index
    %273 = vector.load %arg1[%c0_102, %c0_103] : memref<1x256xf32, #tpu.memory_space<vmem>>, vector<1x256xf32>
    %274 = arith.mulf %272, %273 : vector<1x256xf32>
    %275 = tpu.iota {dimensions = array<i32: 0>} : vector<256x2xi32>
    %276 = tpu.iota {dimensions = array<i32: 1>} : vector<256x2xi32>
    %c128_i32 = arith.constant 128 : i32
    %277 = vector.broadcast %c128_i32 : i32 to vector<256x2xi32>
    %278 = arith.muli %276, %277 : vector<256x2xi32>
    %279 = arith.cmpi sge, %275, %278 : vector<256x2xi32>
    %c128_i32_104 = arith.constant 128 : i32
    %280 = vector.broadcast %c128_i32_104 : i32 to vector<256x2xi32>
    %281 = arith.addi %278, %280 : vector<256x2xi32>
    %282 = arith.cmpi slt, %275, %281 : vector<256x2xi32>
    %283 = arith.andi %279, %282 : vector<256x2xi1>
    %284 = arith.extui %283 : vector<256x2xi1> to vector<256x2xi32>
    %285 = arith.sitofp %284 : vector<256x2xi32> to vector<256x2xf32>
    %286 = arith.truncf %285 : vector<256x2xf32> to vector<256x2xbf16>
    %287 = arith.truncf %274 : vector<1x256xf32> to vector<1x256xbf16>
    %cst_105 = arith.constant dense<0.000000e+00> : vector<1x2xf32>
    %288 = tpu.matmul %287, %286, %cst_105 {dimension_numbers = #tpu.dot_dimension_numbers<[1], [0], [0], [1], [0, 0, 1, 1], [], []>} : vector<1x256xbf16>, vector<256x2xbf16>, vector<1x2xf32> -> vector<1x2xf32>
    %c0_106 = arith.constant 0 : index
    %c0_107 = arith.constant 0 : index
    %289 = vector.load %arg4[%c0_106, %c0_107] : memref<2x2xf32, #tpu.memory_space<vmem>>, vector<1x2xf32>
    %c1_108 = arith.constant 1 : index
    %c0_109 = arith.constant 0 : index
    %290 = vector.load %arg4[%c1_108, %c0_109] : memref<2x2xf32, #tpu.memory_space<vmem>>, vector<1x2xf32>
    %291 = arith.mulf %288, %289 : vector<1x2xf32>
    %292 = arith.addf %291, %290 : vector<1x2xf32>
    %c0_110 = arith.constant 0 : index
    %c0_111 = arith.constant 0 : index
    %293 = vector.load %arg5[%c0_110, %c0_111] : memref<1x2xf32, #tpu.memory_space<vmem>>, vector<1x2xf32>
    tpu.vector_store %arg5[%c0_110, %c0_111], %292 {strides = array<i32>} : memref<1x2xf32, #tpu.memory_space<vmem>>, vector<1x2xf32>,
    return
  }
}

</mosaic_0001>

<llo_original>
// kernel: tpu_custom_call.1
$region0: #{tpu_custom_call.1}
  #allocation0 [shape = 'u32[]', space=smem, size = 0x4, offset = 0x4, fixed_abs, tag = 'smem constant byte address 0x4 - core index']
  #allocation1 [shape = 'u32[144,128]{1,0:T(1,128)}', space=vmem, size = 0x12000, scoped, tag = 'internal scratch']
  %s0 = inlined_call_operand.vmem [shape: f32[8,256], index: 0, kind: input, shape index: {}]
  %s1 = inlined_call_operand.vmem [shape: f32[1,256], index: 1, kind: input, shape index: {}]
  %s2 = inlined_call_operand.vmem [shape: bf16[872,144], index: 2, kind: input, shape index: {}]
  %s3 = inlined_call_operand.vmem [shape: f32[144,18], index: 3, kind: input, shape index: {}]
  %s4 = inlined_call_operand.vmem [shape: f32[2,2], index: 4, kind: input, shape index: {}]
  %s5 = inlined_call_operand.hbm [shape: f32[1,2], index: 5, kind: output, shape index: {}]
  %s6 = sld [smem:[#allocation0]]
  $region30: #{tpu_custom_call.1} parent=0
    _
  %s8 = ssub.s32 1, %s6
  %s9 = scalar_select 0, %s8, %s6
  $region1: #{tpu_custom_call.1} parent=0
    #allocation2 [shape = 'u8[512]{0}', space=vmem, size = 0x400, scoped, tag = 'output window, operand 0, single buffered']
    #allocation3 [shape = 's32[1]{0}', space=sflag, size = 0x4, scoped, tag = 'scoped memory for tpu_custom_call.1']
    %10 = vsyncpa [#allocation3], 0
    // Predicated region
    $region2: #{tpu_custom_call.1} parent=1 // pred_check
      _
    $region3: #{tpu_custom_call.1} parent=1 // pred_check_branch
      %12 = sbr.rel (0) target = $region5
    $region4: #{tpu_custom_call.1} parent=1 // pred_region
      _
    $region5: #{tpu_custom_call.1} parent=1 // pred_fallthru
      _
    // Predicated region
    $region6: #{tpu_custom_call.1} parent=1 // pred_check
      _
    $region7: #{tpu_custom_call.1} parent=1 // pred_check_branch
      %14 = sbr.rel (0) target = $region9
    $region8: #{tpu_custom_call.1} parent=1 // pred_region
      _
    $region9: #{tpu_custom_call.1} parent=1 // pred_fallthru
      _
    // Predicated region
    $region10: #{tpu_custom_call.1} parent=1 // pred_check
      _
    $region11: #{tpu_custom_call.1} parent=1 // pred_check_branch
      %16 = sbr.rel (0) target = $region13
    $region12: #{tpu_custom_call.1} parent=1 // pred_region
      _
    $region13: #{tpu_custom_call.1} parent=1 // pred_fallthru
      _
    // Predicated region
    $region14: #{tpu_custom_call.1} parent=1 // pred_check
      _
    $region15: #{tpu_custom_call.1} parent=1 // pred_check_branch
      %18 = sbr.rel (0) target = $region17
    $region16: #{tpu_custom_call.1} parent=1 // pred_region
      _
    $region17: #{tpu_custom_call.1} parent=1 // pred_fallthru
      _
    // Predicated region
    $region18: #{tpu_custom_call.1} parent=1 // pred_check
      _
    $region19: #{tpu_custom_call.1} parent=1 // pred_check_branch
      %20 = sbr.rel (0) target = $region21
    $region20: #{tpu_custom_call.1} parent=1 // pred_region
      _
    $region21: #{tpu_custom_call.1} parent=1 // pred_fallthru
      _
    %v22 = vld [vmem:[%s0] sm:$0xff]
    %v23 = vld [vmem:[%s0 + $0x8] sm:$0xff]
    %v24 = vpack.c.bf16 %v22, %v22
    %v25 = vpack.c.bf16 %v23, %v23
    %v26 = vld [vmem:[%s2] sm:$0xf]
    %v27 = vld [vmem:[%s2 + $0x8] sm:$0xf]
    %v28 = vld [vmem:[%s2 + $0x10] sm:$0xf]
    %v29 = vld [vmem:[%s2 + $0x18] sm:$0xf]
    %v30 = vld [vmem:[%s2 + $0x20] sm:$0xf]
    %v31 = vld [vmem:[%s2 + $0x28] sm:$0xf]
    %v32 = vld [vmem:[%s2 + $0x30] sm:$0xf]
    %v33 = vld [vmem:[%s2 + $0x38] sm:$0xf]
    %v34 = vld [vmem:[%s2 + $0x40] sm:$0xf]
    %v44 = vunpack.c.l.b16 %v26
    %v45 = vunpack.c.l.b16 %v27
    %v46 = vunpack.c.l.b16 %v28
    %v47 = vunpack.c.l.b16 %v29
    %v48 = vunpack.c.l.b16 %v30
    %v49 = vunpack.c.l.b16 %v31
    %v50 = vunpack.c.l.b16 %v32
    %v51 = vunpack.c.l.b16 %v33
    %v52 = vunpack.c.l.b16 %v34
    %v53 = vpack.c.b16 %v45, %v44
    %v54 = vpack.c.b16 %v47, %v46
    %v55 = vpack.c.b16 %v49, %v48
    %v56 = vpack.c.b16 %v51, %v50
    %v57 = vpack.c.b16 %v52, %v52
    %vm58 = vcmask 64512
    %v60 = vsel %vm58, %v53, 0
    %v63 = vsel %vm58, %v54, 0
    %v66 = vsel %vm58, %v55, 0
    %v69 = vsel %vm58, %v56, 0
    %v72 = vsel %vm58, %v57, 0
    %vm74 = vcmask 1043456
    %v76 = vsel %vm74, %v24, 0
    %v79 = vsel %vm74, %v25, 0
    %81 = vmatprep.subr.bf16.mxu0 0
    %82 = vmatpush1.bf16.msra.mxu0 0
    %83 = vmatprep.subr.bf16.mxu0 0
    %84 = vmatpush1.bf16.msra.mxu0 0
    %85 = vmatprep.subr.bf16.mxu0 0
    %86 = vmatpush1.bf16.msra.mxu0 0
    %87 = vmatprep.subr.bf16.mxu0 0
    %88 = vmatpush1.bf16.msra.mxu0 0
    %89 = vmatprep.subr.bf16.mxu0 0
    %90 = vmatpush1.bf16.msra.mxu0 0
    %91 = vmatprep.subr.bf16.mxu0 0
    %92 = vmatpush1.bf16.msra.mxu0 0
    %93 = vmatprep.subr.bf16.mxu0 0
    %94 = vmatpush1.bf16.msra.mxu0 0
    %95 = vmatprep.subr.bf16.mxu0 %v79
    %96 = vmatpush1.bf16.msra.mxu0 %v76
    %97 = vmatprep.subr.bf16.mxu0 0
    %98 = vmatpush2.bf16.msra.mxu0 0
    %99 = vmatprep.subr.bf16.mxu0 0
    %100 = vmatpush2.bf16.msra.mxu0 0
    %101 = vmatprep.subr.bf16.mxu0 0
    %102 = vmatpush2.bf16.msra.mxu0 0
    %103 = vmatprep.subr.bf16.mxu0 0
    %104 = vmatpush2.bf16.msra.mxu0 0
    %105 = vmatprep.subr.bf16.mxu0 0
    %106 = vmatpush2.bf16.msra.mxu0 0
    %107 = vmatprep.subr.bf16.mxu0 0
    %108 = vmatpush2.bf16.msra.mxu0 0
    %109 = vmatprep.subr.bf16.mxu0 0
    %110 = vmatpush2.bf16.msra.mxu0 0
    %111 = vmatprep.subr.bf16.mxu0 0
    %112 = vmatpush2.bf16.msra.mxu0 0
    %113 = vmatprep.mubr.bf16.mxu0 0
    %114 = vmatmul.mubr.bf16.gmra.mxu0 %v60
    %v115 = vpop.f32.mrf.mxu0
    %v116 = vadd.f32 0.0, %v115
    %v117 = vpop.f32.mrf.mxu0
    %v118 = vadd.f32 0.0, %v117
    %v119 = vpop.f32.mrf.mxu0
    %v120 = vadd.f32 0.0, %v119
    %v121 = vpop.f32.mrf.mxu0
    %v122 = vadd.f32 0.0, %v121
    %123 = vmatprep.mubr.bf16.mxu0 0
    %124 = vmatmul.mubr.bf16.gmra.mxu0 %v63
    %v125 = vpop.f32.mrf.mxu0
    %v126 = vadd.f32 0.0, %v125
    %v127 = vpop.f32.mrf.mxu0
    %v128 = vadd.f32 0.0, %v127
    %v129 = vpop.f32.mrf.mxu0
    %v130 = vadd.f32 0.0, %v129
    %v131 = vpop.f32.mrf.mxu0
    %v132 = vadd.f32 0.0, %v131
    %133 = vmatprep.mubr.bf16.mxu0 0
    %134 = vmatmul.mubr.bf16.gmra.mxu0 %v66
    %v135 = vpop.f32.mrf.mxu0
    %v136 = vadd.f32 0.0, %v135
    %v137 = vpop.f32.mrf.mxu0
    %v138 = vadd.f32 0.0, %v137
    %v139 = vpop.f32.mrf.mxu0
    %v140 = vadd.f32 0.0, %v139
    %v141 = vpop.f32.mrf.mxu0
    %v142 = vadd.f32 0.0, %v141
    %143 = vmatprep.mubr.bf16.mxu0 0
    %144 = vmatmul.mubr.bf16.gmra.mxu0 %v69
    %v145 = vpop.f32.mrf.mxu0
    %v146 = vadd.f32 0.0, %v145
    %v147 = vpop.f32.mrf.mxu0
    %v148 = vadd.f32 0.0, %v147
    %v149 = vpop.f32.mrf.mxu0
    %v150 = vadd.f32 0.0, %v149
    %v151 = vpop.f32.mrf.mxu0
    %v152 = vadd.f32 0.0, %v151
    %153 = vmatprep.mubr.bf16.mxu0 0
    %154 = vmatmul.mubr.bf16.gmra.mxu0 %v72
    %v155 = vpop.f32.mrf.mxu0
    %v156 = vadd.f32 0.0, %v155
    %v157 = vpop.f32.mrf.mxu0
    %v158 = vadd.f32 0.0, %v157
    %v159 = vpop.f32.mrf.mxu0
    %v160 = vpop.f32.mrf.mxu0
    %161 = vdwg.mxu0
    %v162 = vadd.f32 %v116, %v118
    %163 = vadd.xlane.f32.xlu0 %v162
    %v164 = vpop.xlane.xlu0 %163
    %v165 = vadd.f32 %v120, %v122
    %166 = vadd.xlane.f32.xlu0 %v165
    %v167 = vpop.xlane.xlu0 %166
    %v168 = vadd.f32 %v126, %v128
    %169 = vadd.xlane.f32.xlu0 %v168
    %v170 = vpop.xlane.xlu0 %169
    %v171 = vadd.f32 %v130, %v132
    %172 = vadd.xlane.f32.xlu0 %v171
    %v173 = vpop.xlane.xlu0 %172
    %v174 = vadd.f32 %v136, %v138
    %175 = vadd.xlane.f32.xlu0 %v174
    %v176 = vpop.xlane.xlu0 %175
    %v177 = vadd.f32 %v140, %v142
    %178 = vadd.xlane.f32.xlu0 %v177
    %v179 = vpop.xlane.xlu0 %178
    %v180 = vadd.f32 %v146, %v148
    %181 = vadd.xlane.f32.xlu0 %v180
    %v182 = vpop.xlane.xlu0 %181
    %v183 = vadd.f32 %v150, %v152
    %184 = vadd.xlane.f32.xlu0 %v183
    %v185 = vpop.xlane.xlu0 %184
    %v186 = vadd.f32 %v156, %v158
    %187 = vadd.xlane.f32.xlu0 %v186
    %v188 = vpop.xlane.xlu0 %187
    %v189 = vrcp.pop 256.0
    %v190 = vmul.f32 %v164, %v189
    %v191 = vmul.f32 %v167, %v189
    %v192 = vmul.f32 %v170, %v189
    %v193 = vmul.f32 %v173, %v189
    %v194 = vmul.f32 %v176, %v189
    %v195 = vmul.f32 %v179, %v189
    %v196 = vmul.f32 %v182, %v189
    %v197 = vmul.f32 %v185, %v189
    %v198 = vmul.f32 %v188, %v189
    %v199 = vmul.f32 %v116, %v116
    %v200 = vmul.f32 %v118, %v118
    %v201 = vmul.f32 %v120, %v120
    %v202 = vmul.f32 %v122, %v122
    %v203 = vmul.f32 %v126, %v126
    %v204 = vmul.f32 %v128, %v128
    %v205 = vmul.f32 %v130, %v130
    %v206 = vmul.f32 %v132, %v132
    %v207 = vmul.f32 %v136, %v136
    %v208 = vmul.f32 %v138, %v138
    %v209 = vmul.f32 %v140, %v140
    %v210 = vmul.f32 %v142, %v142
    %v211 = vmul.f32 %v146, %v146
    %v212 = vmul.f32 %v148, %v148
    %v213 = vmul.f32 %v150, %v150
    %v214 = vmul.f32 %v152, %v152
    %v215 = vmul.f32 %v156, %v156
    %v216 = vmul.f32 %v158, %v158
    %v217 = vadd.f32 %v199, %v200
    %218 = vadd.xlane.f32.xlu0 %v217
    %v219 = vpop.xlane.xlu0 %218
    %v220 = vadd.f32 %v201, %v202
    %221 = vadd.xlane.f32.xlu0 %v220
    %v222 = vpop.xlane.xlu0 %221
    %v223 = vadd.f32 %v203, %v204
    %224 = vadd.xlane.f32.xlu0 %v223
    %v225 = vpop.xlane.xlu0 %224
    %v226 = vadd.f32 %v205, %v206
    %227 = vadd.xlane.f32.xlu0 %v226
    %v228 = vpop.xlane.xlu0 %227
    %v229 = vadd.f32 %v207, %v208
    %230 = vadd.xlane.f32.xlu0 %v229
    %v231 = vpop.xlane.xlu0 %230
    %v232 = vadd.f32 %v209, %v210
    %233 = vadd.xlane.f32.xlu0 %v232
    %v234 = vpop.xlane.xlu0 %233
    %v235 = vadd.f32 %v211, %v212
    %236 = vadd.xlane.f32.xlu0 %v235
    %v237 = vpop.xlane.xlu0 %236
    %v238 = vadd.f32 %v213, %v214
    %239 = vadd.xlane.f32.xlu0 %v238
    %v240 = vpop.xlane.xlu0 %239
    %v241 = vadd.f32 %v215, %v216
    %242 = vadd.xlane.f32.xlu0 %v241
    %v243 = vpop.xlane.xlu0 %242
    %v244 = vmul.f32 %v219, %v189
    %v245 = vmul.f32 %v222, %v189
    %v246 = vmul.f32 %v225, %v189
    %v247 = vmul.f32 %v228, %v189
    %v248 = vmul.f32 %v231, %v189
    %v249 = vmul.f32 %v234, %v189
    %v250 = vmul.f32 %v237, %v189
    %v251 = vmul.f32 %v240, %v189
    %v252 = vmul.f32 %v243, %v189
    %v253 = vmul.f32 %v190, %v190
    %v254 = vmul.f32 %v191, %v191
    %v255 = vmul.f32 %v192, %v192
    %v256 = vmul.f32 %v193, %v193
    %v257 = vmul.f32 %v194, %v194
    %v258 = vmul.f32 %v195, %v195
    %v259 = vmul.f32 %v196, %v196
    %v260 = vmul.f32 %v197, %v197
    %v261 = vmul.f32 %v198, %v198
    %v262 = vsub.f32 %v244, %v253
    %v263 = vsub.f32 %v245, %v254
    %v264 = vsub.f32 %v246, %v255
    %v265 = vsub.f32 %v247, %v256
    %v266 = vsub.f32 %v248, %v257
    %v267 = vsub.f32 %v249, %v258
    %v268 = vsub.f32 %v250, %v259
    %v269 = vsub.f32 %v251, %v260
    %v270 = vsub.f32 %v252, %v261
    %v271 = vmax.f32 %v262, 0.0
    %v272 = vmax.f32 %v263, 0.0
    %v273 = vmax.f32 %v264, 0.0
    %v274 = vmax.f32 %v265, 0.0
    %v275 = vmax.f32 %v266, 0.0
    %v276 = vmax.f32 %v267, 0.0
    %v277 = vmax.f32 %v268, 0.0
    %v278 = vmax.f32 %v269, 0.0
    %v279 = vmax.f32 %v270, 0.0
    %v280 = vld [vmem:[%s3] sm:$0xff]
    %v281 = vld [vmem:[%s3 + $0x8] sm:$0xff]
    %v282 = vld [vmem:[%s3 + $0x10] sm:$0xff]
    %v283 = vld [vmem:[%s3 + $0x18] sm:$0xff]
    %v284 = vld [vmem:[%s3 + $0x20] sm:$0xff]
    %v285 = vld [vmem:[%s3 + $0x28] sm:$0xff]
    %v286 = vld [vmem:[%s3 + $0x30] sm:$0xff]
    %v287 = vld [vmem:[%s3 + $0x38] sm:$0xff]
    %v288 = vld [vmem:[%s3 + $0x40] sm:$0xff]
    %v289 = vadd.f32 %v271, 1e-05
    %v290 = vadd.f32 %v272, 1e-05
    %v291 = vadd.f32 %v273, 1e-05
    %v292 = vadd.f32 %v274, 1e-05
    %v293 = vadd.f32 %v275, 1e-05
    %v294 = vadd.f32 %v276, 1e-05
    %v295 = vadd.f32 %v277, 1e-05
    %v296 = vadd.f32 %v278, 1e-05
    %v297 = vadd.f32 %v279, 1e-05
    %v298 = vrsqrt.pop %v289
    %v299 = vrsqrt.pop %v290
    %v300 = vrsqrt.pop %v291
    %v301 = vrsqrt.pop %v292
    %v302 = vrsqrt.pop %v293
    %v303 = vrsqrt.pop %v294
    %v304 = vrsqrt.pop %v295
    %v305 = vrsqrt.pop %v296
    %v306 = vrsqrt.pop %v297
    %v307 = vmul.f32 %v280, %v298
    %v308 = vmul.f32 %v281, %v299
    %v309 = vmul.f32 %v282, %v300
    %v310 = vmul.f32 %v283, %v301
    %v311 = vmul.f32 %v284, %v302
    %v312 = vmul.f32 %v285, %v303
    %v313 = vmul.f32 %v286, %v304
    %v314 = vmul.f32 %v287, %v305
    %v315 = vmul.f32 %v288, %v306
    %v316 = vmul.f32 %v190, %v307
    %v317 = vmul.f32 %v191, %v308
    %v318 = vmul.f32 %v192, %v309
    %v319 = vmul.f32 %v193, %v310
    %v320 = vmul.f32 %v194, %v311
    %v321 = vmul.f32 %v195, %v312
    %v322 = vmul.f32 %v196, %v313
    %v323 = vmul.f32 %v197, %v314
    %v324 = vmul.f32 %v198, %v315
    %334 = vrot.lane.b32.xlu0 %v316, 9
    %v335 = vpop.permute.xlu0 %334
    %336 = vrot.lane.b32.xlu0 %v317, 9
    %v337 = vpop.permute.xlu0 %336
    %338 = vrot.lane.b32.xlu0 %v318, 9
    %v339 = vpop.permute.xlu0 %338
    %340 = vrot.lane.b32.xlu0 %v319, 9
    %v341 = vpop.permute.xlu0 %340
    %342 = vrot.lane.b32.xlu0 %v320, 9
    %v343 = vpop.permute.xlu0 %342
    %344 = vrot.lane.b32.xlu0 %v321, 9
    %v345 = vpop.permute.xlu0 %344
    %346 = vrot.lane.b32.xlu0 %v322, 9
    %v347 = vpop.permute.xlu0 %346
    %348 = vrot.lane.b32.xlu0 %v323, 9
    %v349 = vpop.permute.xlu0 %348
    %350 = vrot.lane.b32.xlu0 %v324, 9
    %v351 = vpop.permute.xlu0 %350
    %v361 = vsub.f32 %v280, %v335
    %v362 = vsub.f32 %v281, %v337
    %v363 = vsub.f32 %v282, %v339
    %v364 = vsub.f32 %v283, %v341
    %v365 = vsub.f32 %v284, %v343
    %v366 = vsub.f32 %v285, %v345
    %v367 = vsub.f32 %v286, %v347
    %v368 = vsub.f32 %v287, %v349
    %v369 = vsub.f32 %v288, %v351
    %371 = vset.pattern.permute.xlu0 0
    %372 = vperm.xlu0 %371, %v307
    %v373 = vpop.permute.xlu0 %372
    %376 = vset.pattern.permute.xlu0 0
    %377 = vperm.xlu0 %376, %v308
    %v378 = vpop.permute.xlu0 %377
    %381 = vset.pattern.permute.xlu0 0
    %382 = vperm.xlu0 %381, %v309
    %v383 = vpop.permute.xlu0 %382
    %386 = vset.pattern.permute.xlu0 0
    %387 = vperm.xlu0 %386, %v310
    %v388 = vpop.permute.xlu0 %387
    %391 = vset.pattern.permute.xlu0 0
    %392 = vperm.xlu0 %391, %v311
    %v393 = vpop.permute.xlu0 %392
    %396 = vset.pattern.permute.xlu0 0
    %397 = vperm.xlu0 %396, %v312
    %v398 = vpop.permute.xlu0 %397
    %401 = vset.pattern.permute.xlu0 0
    %402 = vperm.xlu0 %401, %v313
    %v403 = vpop.permute.xlu0 %402
    %406 = vset.pattern.permute.xlu0 0
    %407 = vperm.xlu0 %406, %v314
    %v408 = vpop.permute.xlu0 %407
    %411 = vset.pattern.permute.xlu0 0
    %412 = vperm.xlu0 %411, %v315
    %v413 = vpop.permute.xlu0 %412
    %v415 = vmul.f32 %v116, %v373
    %v416 = vmul.f32 %v118, %v373
    %v417 = vmul.f32 %v120, %v378
    %v418 = vmul.f32 %v122, %v378
    %v419 = vmul.f32 %v126, %v383
    %v420 = vmul.f32 %v128, %v383
    %v421 = vmul.f32 %v130, %v388
    %v422 = vmul.f32 %v132, %v388
    %v423 = vmul.f32 %v136, %v393
    %v424 = vmul.f32 %v138, %v393
    %v425 = vmul.f32 %v140, %v398
    %v426 = vmul.f32 %v142, %v398
    %v427 = vmul.f32 %v146, %v403
    %v428 = vmul.f32 %v148, %v403
    %v429 = vmul.f32 %v150, %v408
    %v430 = vmul.f32 %v152, %v408
    %v431 = vmul.f32 %v156, %v413
    %v432 = vmul.f32 %v158, %v413
    %434 = vset.pattern.permute.xlu0 9
    %435 = vperm.xlu0 %434, %v361
    %v436 = vpop.permute.xlu0 %435
    %439 = vset.pattern.permute.xlu0 9
    %440 = vperm.xlu0 %439, %v362
    %v441 = vpop.permute.xlu0 %440
    %444 = vset.pattern.permute.xlu0 9
    %445 = vperm.xlu0 %444, %v363
    %v446 = vpop.permute.xlu0 %445
    %449 = vset.pattern.permute.xlu0 9
    %450 = vperm.xlu0 %449, %v364
    %v451 = vpop.permute.xlu0 %450
    %454 = vset.pattern.permute.xlu0 9
    %455 = vperm.xlu0 %454, %v365
    %v456 = vpop.permute.xlu0 %455
    %459 = vset.pattern.permute.xlu0 9
    %460 = vperm.xlu0 %459, %v366
    %v461 = vpop.permute.xlu0 %460
    %464 = vset.pattern.permute.xlu0 9
    %465 = vperm.xlu0 %464, %v367
    %v466 = vpop.permute.xlu0 %465
    %469 = vset.pattern.permute.xlu0 9
    %470 = vperm.xlu0 %469, %v368
    %v471 = vpop.permute.xlu0 %470
    %474 = vset.pattern.permute.xlu0 9
    %475 = vperm.xlu0 %474, %v369
    %v476 = vpop.permute.xlu0 %475
    %v478 = vadd.f32 %v415, %v436
    %v479 = vadd.f32 %v416, %v436
    %v480 = vadd.f32 %v417, %v441
    %v481 = vadd.f32 %v418, %v441
    %v482 = vadd.f32 %v419, %v446
    %v483 = vadd.f32 %v420, %v446
    %v484 = vadd.f32 %v421, %v451
    %v485 = vadd.f32 %v422, %v451
    %v486 = vadd.f32 %v423, %v456
    %v487 = vadd.f32 %v424, %v456
    %v488 = vadd.f32 %v425, %v461
    %v489 = vadd.f32 %v426, %v461
    %v490 = vadd.f32 %v427, %v466
    %v491 = vadd.f32 %v428, %v466
    %v492 = vadd.f32 %v429, %v471
    %v493 = vadd.f32 %v430, %v471
    %v494 = vadd.f32 %v431, %v476
    %v495 = vadd.f32 %v432, %v476
    %v496 = vmax.f32 %v478, 0.0
    %v497 = vmax.f32 %v479, 0.0
    %v498 = vmax.f32 %v480, 0.0
    %v499 = vmax.f32 %v481, 0.0
    %v500 = vmax.f32 %v482, 0.0
    %v501 = vmax.f32 %v483, 0.0
    %v502 = vmax.f32 %v484, 0.0
    %v503 = vmax.f32 %v485, 0.0
    %v504 = vmax.f32 %v486, 0.0
    %v505 = vmax.f32 %v487, 0.0
    %v506 = vmax.f32 %v488, 0.0
    %v507 = vmax.f32 %v489, 0.0
    %v508 = vmax.f32 %v490, 0.0
    %v509 = vmax.f32 %v491, 0.0
    %v510 = vmax.f32 %v492, 0.0
    %v511 = vmax.f32 %v493, 0.0
    %v512 = vmax.f32 %v494, 0.0
    %v513 = vmax.f32 %v495, 0.0
    %v514 = vpack.c.bf16 %v498, %v496
    %v515 = vpack.c.bf16 %v499, %v497
    %v516 = vpack.c.bf16 %v502, %v500
    %v517 = vpack.c.bf16 %v503, %v501
    %v518 = vpack.c.bf16 %v506, %v504
    %v519 = vpack.c.bf16 %v507, %v505
    %v520 = vpack.c.bf16 %v510, %v508
    %v521 = vpack.c.bf16 %v511, %v509
    %v522 = vpack.c.bf16 %v512, %v512
    %v523 = vpack.c.bf16 %v513, %v513
    %v524 = vld [vmem:[%s2 + $0x48] sm:$0xf]
    %v525 = vld [vmem:[%s2 + $0x50] sm:$0xf]
    %v526 = vld [vmem:[%s2 + $0x58] sm:$0xf]
    %v527 = vld [vmem:[%s2 + $0x60] sm:$0xf]
    %v528 = vld [vmem:[%s2 + $0x68] sm:$0xf]
    %v529 = vld [vmem:[%s2 + $0x70] sm:$0xf]
    %v530 = vld [vmem:[%s2 + $0x78] sm:$0xf]
    %v531 = vld [vmem:[%s2 + $0x80] sm:$0xf]
    %v532 = vld [vmem:[%s2 + $0x88] sm:$0xf]
    %v542 = vunpack.c.l.b16 %v524
    %v543 = vunpack.c.l.b16 %v525
    %v544 = vunpack.c.l.b16 %v526
    %v545 = vunpack.c.l.b16 %v527
    %v546 = vunpack.c.l.b16 %v528
    %v547 = vunpack.c.l.b16 %v529
    %v548 = vunpack.c.l.b16 %v530
    %v549 = vunpack.c.l.b16 %v531
    %v550 = vunpack.c.l.b16 %v532
    %v551 = vpack.c.b16 %v543, %v542
    %v552 = vpack.c.b16 %v545, %v544
    %v553 = vpack.c.b16 %v547, %v546
    %v554 = vpack.c.b16 %v549, %v548
    %v555 = vpack.c.b16 %v550, %v550
    %vm556 = vcmask 588800
    %v558 = vsel %vm556, %v551, 0
    %v561 = vsel %vm556, %v552, 0
    %v564 = vsel %vm556, %v553, 0
    %v567 = vsel %vm556, %v554, 0
    %v570 = vsel %vm556, %v555, 0
    %v573 = vsel %vm74, %v522, 0
    %v576 = vsel %vm74, %v523, 0
    %578 = vmatprep.subr.bf16.mxu0 0
    %579 = vmatpush1.bf16.msra.mxu0 0
    %580 = vmatprep.subr.bf16.mxu0 0
    %581 = vmatpush1.bf16.msra.mxu0 0
    %582 = vmatprep.subr.bf16.mxu0 0
    %583 = vmatpush1.bf16.msra.mxu0 0
    %584 = vmatprep.subr.bf16.mxu0 %v576
    %585 = vmatpush1.bf16.msra.mxu0 %v573
    %586 = vmatprep.subr.bf16.mxu0 %v521
    %587 = vmatpush1.bf16.msra.mxu0 %v520
    %588 = vmatprep.subr.bf16.mxu0 %v519
    %589 = vmatpush1.bf16.msra.mxu0 %v518
    %590 = vmatprep.subr.bf16.mxu0 %v517
    %591 = vmatpush1.bf16.msra.mxu0 %v516
    %592 = vmatprep.subr.bf16.mxu0 %v515
    %593 = vmatpush1.bf16.msra.mxu0 %v514
    %594 = vmatprep.subr.bf16.mxu0 0
    %595 = vmatpush2.bf16.msra.mxu0 0
    %596 = vmatprep.subr.bf16.mxu0 0
    %597 = vmatpush2.bf16.msra.mxu0 0
    %598 = vmatprep.subr.bf16.mxu0 0
    %599 = vmatpush2.bf16.msra.mxu0 0
    %600 = vmatprep.subr.bf16.mxu0 0
    %601 = vmatpush2.bf16.msra.mxu0 0
    %602 = vmatprep.subr.bf16.mxu0 0
    %603 = vmatpush2.bf16.msra.mxu0 0
    %604 = vmatprep.subr.bf16.mxu0 0
    %605 = vmatpush2.bf16.msra.mxu0 0
    %606 = vmatprep.subr.bf16.mxu0 0
    %607 = vmatpush2.bf16.msra.mxu0 0
    %608 = vmatprep.subr.bf16.mxu0 0
    %609 = vmatpush2.bf16.msra.mxu0 0
    %610 = vmatprep.mubr.bf16.mxu0 0
    %611 = vmatmul.mubr.bf16.gmra.mxu0 %v558
    %v612 = vpop.f32.mrf.mxu0
    %v613 = vadd.f32 0.0, %v612
    %v614 = vpop.f32.mrf.mxu0
    %v615 = vadd.f32 0.0, %v614
    %v616 = vpop.f32.mrf.mxu0
    %v617 = vadd.f32 0.0, %v616
    %v618 = vpop.f32.mrf.mxu0
    %v619 = vadd.f32 0.0, %v618
    %620 = vmatprep.mubr.bf16.mxu0 0
    %621 = vmatmul.mubr.bf16.gmra.mxu0 %v561
    %v622 = vpop.f32.mrf.mxu0
    %v623 = vadd.f32 0.0, %v622
    %v624 = vpop.f32.mrf.mxu0
    %v625 = vadd.f32 0.0, %v624
    %v626 = vpop.f32.mrf.mxu0
    %v627 = vadd.f32 0.0, %v626
    %v628 = vpop.f32.mrf.mxu0
    %v629 = vadd.f32 0.0, %v628
    %630 = vmatprep.mubr.bf16.mxu0 0
    %631 = vmatmul.mubr.bf16.gmra.mxu0 %v564
    %v632 = vpop.f32.mrf.mxu0
    %v633 = vadd.f32 0.0, %v632
    %v634 = vpop.f32.mrf.mxu0
    %v635 = vadd.f32 0.0, %v634
    %v636 = vpop.f32.mrf.mxu0
    %v637 = vadd.f32 0.0, %v636
    %v638 = vpop.f32.mrf.mxu0
    %v639 = vadd.f32 0.0, %v638
    %640 = vmatprep.mubr.bf16.mxu0 0
    %641 = vmatmul.mubr.bf16.gmra.mxu0 %v567
    %v642 = vpop.f32.mrf.mxu0
    %v643 = vadd.f32 0.0, %v642
    %v644 = vpop.f32.mrf.mxu0
    %v645 = vadd.f32 0.0, %v644
    %v646 = vpop.f32.mrf.mxu0
    %v647 = vadd.f32 0.0, %v646
    %v648 = vpop.f32.mrf.mxu0
    %v649 = vadd.f32 0.0, %v648
    %650 = vmatprep.mubr.bf16.mxu0 0
    %651 = vmatmul.mubr.bf16.gmra.mxu0 %v570
    %v652 = vpop.f32.mrf.mxu0
    %v653 = vadd.f32 0.0, %v652
    %v654 = vpop.f32.mrf.mxu0
    %v655 = vadd.f32 0.0, %v654
    %v656 = vpop.f32.mrf.mxu0
    %v657 = vpop.f32.mrf.mxu0
    %658 = vdwg.mxu0
    %v659 = vadd.f32 %v613, %v615
    %660 = vadd.xlane.f32.xlu0 %v659
    %v661 = vpop.xlane.xlu0 %660
    %v662 = vadd.f32 %v617, %v619
    %663 = vadd.xlane.f32.xlu0 %v662
    %v664 = vpop.xlane.xlu0 %663
    %v665 = vadd.f32 %v623, %v625
    %666 = vadd.xlane.f32.xlu0 %v665
    %v667 = vpop.xlane.xlu0 %666
    %v668 = vadd.f32 %v627, %v629
    %669 = vadd.xlane.f32.xlu0 %v668
    %v670 = vpop.xlane.xlu0 %669
    %v671 = vadd.f32 %v633, %v635
    %672 = vadd.xlane.f32.xlu0 %v671
    %v673 = vpop.xlane.xlu0 %672
    %v674 = vadd.f32 %v637, %v639
    %675 = vadd.xlane.f32.xlu0 %v674
    %v676 = vpop.xlane.xlu0 %675
    %v677 = vadd.f32 %v643, %v645
    %678 = vadd.xlane.f32.xlu0 %v677
    %v679 = vpop.xlane.xlu0 %678
    %v680 = vadd.f32 %v647, %v649
    %681 = vadd.xlane.f32.xlu0 %v680
    %v682 = vpop.xlane.xlu0 %681
    %v683 = vadd.f32 %v653, %v655
    %684 = vadd.xlane.f32.xlu0 %v683
    %v685 = vpop.xlane.xlu0 %684
    %v686 = vmul.f32 %v661, %v189
    %v687 = vmul.f32 %v664, %v189
    %v688 = vmul.f32 %v667, %v189
    %v689 = vmul.f32 %v670, %v189
    %v690 = vmul.f32 %v673, %v189
    %v691 = vmul.f32 %v676, %v189
    %v692 = vmul.f32 %v679, %v189
    %v693 = vmul.f32 %v682, %v189
    %v694 = vmul.f32 %v685, %v189
    %v695 = vmul.f32 %v613, %v613
    %v696 = vmul.f32 %v615, %v615
    %v697 = vmul.f32 %v617, %v617
    %v698 = vmul.f32 %v619, %v619
    %v699 = vmul.f32 %v623, %v623
    %v700 = vmul.f32 %v625, %v625
    %v701 = vmul.f32 %v627, %v627
    %v702 = vmul.f32 %v629, %v629
    %v703 = vmul.f32 %v633, %v633
    %v704 = vmul.f32 %v635, %v635
    %v705 = vmul.f32 %v637, %v637
    %v706 = vmul.f32 %v639, %v639
    %v707 = vmul.f32 %v643, %v643
    %v708 = vmul.f32 %v645, %v645
    %v709 = vmul.f32 %v647, %v647
    %v710 = vmul.f32 %v649, %v649
    %v711 = vmul.f32 %v653, %v653
    %v712 = vmul.f32 %v655, %v655
    %v713 = vadd.f32 %v695, %v696
    %714 = vadd.xlane.f32.xlu0 %v713
    %v715 = vpop.xlane.xlu0 %714
    %v716 = vadd.f32 %v697, %v698
    %717 = vadd.xlane.f32.xlu0 %v716
    %v718 = vpop.xlane.xlu0 %717
    %v719 = vadd.f32 %v699, %v700
    %720 = vadd.xlane.f32.xlu0 %v719
    %v721 = vpop.xlane.xlu0 %720
    %v722 = vadd.f32 %v701, %v702
    %723 = vadd.xlane.f32.xlu0 %v722
    %v724 = vpop.xlane.xlu0 %723
    %v725 = vadd.f32 %v703, %v704
    %726 = vadd.xlane.f32.xlu0 %v725
    %v727 = vpop.xlane.xlu0 %726
    %v728 = vadd.f32 %v705, %v706
    %729 = vadd.xlane.f32.xlu0 %v728
    %v730 = vpop.xlane.xlu0 %729
    %v731 = vadd.f32 %v707, %v708
    %732 = vadd.xlane.f32.xlu0 %v731
    %v733 = vpop.xlane.xlu0 %732
    %v734 = vadd.f32 %v709, %v710
    %735 = vadd.xlane.f32.xlu0 %v734
    %v736 = vpop.xlane.xlu0 %735
    %v737 = vadd.f32 %v711, %v712
    %738 = vadd.xlane.f32.xlu0 %v737
    %v739 = vpop.xlane.xlu0 %738
    %v740 = vmul.f32 %v715, %v189
    %v741 = vmul.f32 %v718, %v189
    %v742 = vmul.f32 %v721, %v189
    %v743 = vmul.f32 %v724, %v189
    %v744 = vmul.f32 %v727, %v189
    %v745 = vmul.f32 %v730, %v189
    %v746 = vmul.f32 %v733, %v189
    %v747 = vmul.f32 %v736, %v189
    %v748 = vmul.f32 %v739, %v189
    %v749 = vmul.f32 %v686, %v686
    %v750 = vmul.f32 %v687, %v687
    %v751 = vmul.f32 %v688, %v688
    %v752 = vmul.f32 %v689, %v689
    %v753 = vmul.f32 %v690, %v690
    %v754 = vmul.f32 %v691, %v691
    %v755 = vmul.f32 %v692, %v692
    %v756 = vmul.f32 %v693, %v693
    %v757 = vmul.f32 %v694, %v694
    %v758 = vsub.f32 %v740, %v749
    %v759 = vsub.f32 %v741, %v750
    %v760 = vsub.f32 %v742, %v751
    %v761 = vsub.f32 %v743, %v752
    %v762 = vsub.f32 %v744, %v753
    %v763 = vsub.f32 %v745, %v754
    %v764 = vsub.f32 %v746, %v755
    %v765 = vsub.f32 %v747, %v756
    %v766 = vsub.f32 %v748, %v757
    %v767 = vmax.f32 %v758, 0.0
    %v768 = vmax.f32 %v759, 0.0
    %v769 = vmax.f32 %v760, 0.0
    %v770 = vmax.f32 %v761, 0.0
    %v771 = vmax.f32 %v762, 0.0
    %v772 = vmax.f32 %v763, 0.0
    %v773 = vmax.f32 %v764, 0.0
    %v774 = vmax.f32 %v765, 0.0
    %v775 = vmax.f32 %v766, 0.0
    %v776 = vadd.f32 %v767, 1e-05
    %v777 = vadd.f32 %v768, 1e-05
    %v778 = vadd.f32 %v769, 1e-05
    %v779 = vadd.f32 %v770, 1e-05
    %v780 = vadd.f32 %v771, 1e-05
    %v781 = vadd.f32 %v772, 1e-05
    %v782 = vadd.f32 %v773, 1e-05
    %v783 = vadd.f32 %v774, 1e-05
    %v784 = vadd.f32 %v775, 1e-05
    %v785 = vrsqrt.pop %v776
    %v786 = vrsqrt.pop %v777
    %v787 = vrsqrt.pop %v778
    %v788 = vrsqrt.pop %v779
    %v789 = vrsqrt.pop %v780
    %v790 = vrsqrt.pop %v781
    %v791 = vrsqrt.pop %v782
    %v792 = vrsqrt.pop %v783
    %v793 = vrsqrt.pop %v784
    %v794 = vmul.f32 %v280, %v785
    %v795 = vmul.f32 %v281, %v786
    %v796 = vmul.f32 %v282, %v787
    %v797 = vmul.f32 %v283, %v788
    %v798 = vmul.f32 %v284, %v789
    %v799 = vmul.f32 %v285, %v790
    %v800 = vmul.f32 %v286, %v791
    %v801 = vmul.f32 %v287, %v792
    %v802 = vmul.f32 %v288, %v793
    %v803 = vmul.f32 %v686, %v794
    %v804 = vmul.f32 %v687, %v795
    %v805 = vmul.f32 %v688, %v796
    %v806 = vmul.f32 %v689, %v797
    %v807 = vmul.f32 %v690, %v798
    %v808 = vmul.f32 %v691, %v799
    %v809 = vmul.f32 %v692, %v800
    %v810 = vmul.f32 %v693, %v801
    %v811 = vmul.f32 %v694, %v802
    %821 = vrot.lane.b32.xlu0 %v803, 9
    %v822 = vpop.permute.xlu0 %821
    %823 = vrot.lane.b32.xlu0 %v804, 9
    %v824 = vpop.permute.xlu0 %823
    %825 = vrot.lane.b32.xlu0 %v805, 9
    %v826 = vpop.permute.xlu0 %825
    %827 = vrot.lane.b32.xlu0 %v806, 9
    %v828 = vpop.permute.xlu0 %827
    %829 = vrot.lane.b32.xlu0 %v807, 9
    %v830 = vpop.permute.xlu0 %829
    %831 = vrot.lane.b32.xlu0 %v808, 9
    %v832 = vpop.permute.xlu0 %831
    %833 = vrot.lane.b32.xlu0 %v809, 9
    %v834 = vpop.permute.xlu0 %833
    %835 = vrot.lane.b32.xlu0 %v810, 9
    %v836 = vpop.permute.xlu0 %835
    %837 = vrot.lane.b32.xlu0 %v811, 9
    %v838 = vpop.permute.xlu0 %837
    %v848 = vsub.f32 %v280, %v822
    %v849 = vsub.f32 %v281, %v824
    %v850 = vsub.f32 %v282, %v826
    %v851 = vsub.f32 %v283, %v828
    %v852 = vsub.f32 %v284, %v830
    %v853 = vsub.f32 %v285, %v832
    %v854 = vsub.f32 %v286, %v834
    %v855 = vsub.f32 %v287, %v836
    %v856 = vsub.f32 %v288, %v838
    %858 = vset.pattern.permute.xlu0 1
    %859 = vperm.xlu0 %858, %v794
    %v860 = vpop.permute.xlu0 %859
    %863 = vset.pattern.permute.xlu0 1
    %864 = vperm.xlu0 %863, %v795
    %v865 = vpop.permute.xlu0 %864
    %868 = vset.pattern.permute.xlu0 1
    %869 = vperm.xlu0 %868, %v796
    %v870 = vpop.permute.xlu0 %869
    %873 = vset.pattern.permute.xlu0 1
    %874 = vperm.xlu0 %873, %v797
    %v875 = vpop.permute.xlu0 %874
    %878 = vset.pattern.permute.xlu0 1
    %879 = vperm.xlu0 %878, %v798
    %v880 = vpop.permute.xlu0 %879
    %883 = vset.pattern.permute.xlu0 1
    %884 = vperm.xlu0 %883, %v799
    %v885 = vpop.permute.xlu0 %884
    %888 = vset.pattern.permute.xlu0 1
    %889 = vperm.xlu0 %888, %v800
    %v890 = vpop.permute.xlu0 %889
    %893 = vset.pattern.permute.xlu0 1
    %894 = vperm.xlu0 %893, %v801
    %v895 = vpop.permute.xlu0 %894
    %898 = vset.pattern.permute.xlu0 1
    %899 = vperm.xlu0 %898, %v802
    %v900 = vpop.permute.xlu0 %899
    %v902 = vmul.f32 %v613, %v860
    %v903 = vmul.f32 %v615, %v860
    %v904 = vmul.f32 %v617, %v865
    %v905 = vmul.f32 %v619, %v865
    %v906 = vmul.f32 %v623, %v870
    %v907 = vmul.f32 %v625, %v870
    %v908 = vmul.f32 %v627, %v875
    %v909 = vmul.f32 %v629, %v875
    %v910 = vmul.f32 %v633, %v880
    %v911 = vmul.f32 %v635, %v880
    %v912 = vmul.f32 %v637, %v885
    %v913 = vmul.f32 %v639, %v885
    %v914 = vmul.f32 %v643, %v890
    %v915 = vmul.f32 %v645, %v890
    %v916 = vmul.f32 %v647, %v895
    %v917 = vmul.f32 %v649, %v895
    %v918 = vmul.f32 %v653, %v900
    %v919 = vmul.f32 %v655, %v900
    %921 = vset.pattern.permute.xlu0 10
    %922 = vperm.xlu0 %921, %v848
    %v923 = vpop.permute.xlu0 %922
    %926 = vset.pattern.permute.xlu0 10
    %927 = vperm.xlu0 %926, %v849
    %v928 = vpop.permute.xlu0 %927
    %931 = vset.pattern.permute.xlu0 10
    %932 = vperm.xlu0 %931, %v850
    %v933 = vpop.permute.xlu0 %932
    %936 = vset.pattern.permute.xlu0 10
    %937 = vperm.xlu0 %936, %v851
    %v938 = vpop.permute.xlu0 %937
    %941 = vset.pattern.permute.xlu0 10
    %942 = vperm.xlu0 %941, %v852
    %v943 = vpop.permute.xlu0 %942
    %946 = vset.pattern.permute.xlu0 10
    %947 = vperm.xlu0 %946, %v853
    %v948 = vpop.permute.xlu0 %947
    %951 = vset.pattern.permute.xlu0 10
    %952 = vperm.xlu0 %951, %v854
    %v953 = vpop.permute.xlu0 %952
    %956 = vset.pattern.permute.xlu0 10
    %957 = vperm.xlu0 %956, %v855
    %v958 = vpop.permute.xlu0 %957
    %961 = vset.pattern.permute.xlu0 10
    %962 = vperm.xlu0 %961, %v856
    %v963 = vpop.permute.xlu0 %962
    %v965 = vadd.f32 %v902, %v923
    %v966 = vadd.f32 %v903, %v923
    %v967 = vadd.f32 %v904, %v928
    %v968 = vadd.f32 %v905, %v928
    %v969 = vadd.f32 %v906, %v933
    %v970 = vadd.f32 %v907, %v933
    %v971 = vadd.f32 %v908, %v938
    %v972 = vadd.f32 %v909, %v938
    %v973 = vadd.f32 %v910, %v943
    %v974 = vadd.f32 %v911, %v943
    %v975 = vadd.f32 %v912, %v948
    %v976 = vadd.f32 %v913, %v948
    %v977 = vadd.f32 %v914, %v953
    %v978 = vadd.f32 %v915, %v953
    %v979 = vadd.f32 %v916, %v958
    %v980 = vadd.f32 %v917, %v958
    %v981 = vadd.f32 %v918, %v963
    %v982 = vadd.f32 %v919, %v963
    %v983 = vmax.f32 %v965, 0.0
    %v984 = vmax.f32 %v966, 0.0
    %v985 = vmax.f32 %v967, 0.0
    %v986 = vmax.f32 %v968, 0.0
    %v987 = vmax.f32 %v969, 0.0
    %v988 = vmax.f32 %v970, 0.0
    %v989 = vmax.f32 %v971, 0.0
    %v990 = vmax.f32 %v972, 0.0
    %v991 = vmax.f32 %v973, 0.0
    %v992 = vmax.f32 %v974, 0.0
    %v993 = vmax.f32 %v975, 0.0
    %v994 = vmax.f32 %v976, 0.0
    %v995 = vmax.f32 %v977, 0.0
    %v996 = vmax.f32 %v978, 0.0
    %v997 = vmax.f32 %v979, 0.0
    %v998 = vmax.f32 %v980, 0.0
    %v999 = vmax.f32 %v981, 0.0
    %v1000 = vmax.f32 %v982, 0.0
    %v1001 = vpack.c.bf16 %v985, %v983
    %v1002 = vpack.c.bf16 %v986, %v984
    %v1003 = vpack.c.bf16 %v989, %v987
    %v1004 = vpack.c.bf16 %v990, %v988
    %v1005 = vpack.c.bf16 %v993, %v991
    %v1006 = vpack.c.bf16 %v994, %v992
    %v1007 = vpack.c.bf16 %v997, %v995
    %v1008 = vpack.c.bf16 %v998, %v996
    %v1009 = vpack.c.bf16 %v999, %v999
    %v1010 = vpack.c.bf16 %v1000, %v1000
    %v1011 = vld [vmem:[%s2 + $0x90] sm:$0xf]
    %v1012 = vld [vmem:[%s2 + $0x98] sm:$0xf]
    %v1013 = vld [vmem:[%s2 + $0xa0] sm:$0xf]
    %v1014 = vld [vmem:[%s2 + $0xa8] sm:$0xf]
    %v1015 = vld [vmem:[%s2 + $0xb0] sm:$0xf]
    %v1016 = vld [vmem:[%s2 + $0xb8] sm:$0xf]
    %v1017 = vld [vmem:[%s2 + $0xc0] sm:$0xf]
    %v1018 = vld [vmem:[%s2 + $0xc8] sm:$0xf]
    %v1019 = vld [vmem:[%s2 + $0xd0] sm:$0xf]
    %v1029 = vunpack.c.l.b16 %v1011
    %v1030 = vunpack.c.l.b16 %v1012
    %v1031 = vunpack.c.l.b16 %v1013
    %v1032 = vunpack.c.l.b16 %v1014
    %v1033 = vunpack.c.l.b16 %v1015
    %v1034 = vunpack.c.l.b16 %v1016
    %v1035 = vunpack.c.l.b16 %v1017
    %v1036 = vunpack.c.l.b16 %v1018
    %v1037 = vunpack.c.l.b16 %v1019
    %v1038 = vpack.c.b16 %v1030, %v1029
    %v1039 = vpack.c.b16 %v1032, %v1031
    %v1040 = vpack.c.b16 %v1034, %v1033
    %v1041 = vpack.c.b16 %v1036, %v1035
    %v1042 = vpack.c.b16 %v1037, %v1037
    %v1044 = vsel %vm556, %v1038, 0
    %v1047 = vsel %vm556, %v1039, 0
    %v1050 = vsel %vm556, %v1040, 0
    %v1053 = vsel %vm556, %v1041, 0
    %v1056 = vsel %vm556, %v1042, 0
    %v1059 = vsel %vm74, %v1009, 0
    %v1062 = vsel %vm74, %v1010, 0
    %1064 = vmatprep.subr.bf16.mxu0 0
    %1065 = vmatpush1.bf16.msra.mxu0 0
    %1066 = vmatprep.subr.bf16.mxu0 0
    %1067 = vmatpush1.bf16.msra.mxu0 0
    %1068 = vmatprep.subr.bf16.mxu0 0
    %1069 = vmatpush1.bf16.msra.mxu0 0
    %1070 = vmatprep.subr.bf16.mxu0 %v1062
    %1071 = vmatpush1.bf16.msra.mxu0 %v1059
    %1072 = vmatprep.subr.bf16.mxu0 %v1008
    %1073 = vmatpush1.bf16.msra.mxu0 %v1007
    %1074 = vmatprep.subr.bf16.mxu0 %v1006
    %1075 = vmatpush1.bf16.msra.mxu0 %v1005
    %1076 = vmatprep.subr.bf16.mxu0 %v1004
    %1077 = vmatpush1.bf16.msra.mxu0 %v1003
    %1078 = vmatprep.subr.bf16.mxu0 %v1002
    %1079 = vmatpush1.bf16.msra.mxu0 %v1001
    %1080 = vmatprep.subr.bf16.mxu0 0
    %1081 = vmatpush2.bf16.msra.mxu0 0
    %1082 = vmatprep.subr.bf16.mxu0 0
    %1083 = vmatpush2.bf16.msra.mxu0 0
    %1084 = vmatprep.subr.bf16.mxu0 0
    %1085 = vmatpush2.bf16.msra.mxu0 0
    %1086 = vmatprep.subr.bf16.mxu0 0
    %1087 = vmatpush2.bf16.msra.mxu0 0
    %1088 = vmatprep.subr.bf16.mxu0 0
    %1089 = vmatpush2.bf16.msra.mxu0 0
    %1090 = vmatprep.subr.bf16.mxu0 0
    %1091 = vmatpush2.bf16.msra.mxu0 0
    %1092 = vmatprep.subr.bf16.mxu0 0
    %1093 = vmatpush2.bf16.msra.mxu0 0
    %1094 = vmatprep.subr.bf16.mxu0 0
    %1095 = vmatpush2.bf16.msra.mxu0 0
    %1096 = vmatprep.mubr.bf16.mxu0 0
    %1097 = vmatmul.mubr.bf16.gmra.mxu0 %v1044
    %v1098 = vpop.f32.mrf.mxu0
    %v1099 = vadd.f32 0.0, %v1098
    %v1100 = vpop.f32.mrf.mxu0
    %v1101 = vadd.f32 0.0, %v1100
    %v1102 = vpop.f32.mrf.mxu0
    %v1103 = vadd.f32 0.0, %v1102
    %v1104 = vpop.f32.mrf.mxu0
    %v1105 = vadd.f32 0.0, %v1104
    %1106 = vmatprep.mubr.bf16.mxu0 0
    %1107 = vmatmul.mubr.bf16.gmra.mxu0 %v1047
    %v1108 = vpop.f32.mrf.mxu0
    %v1109 = vadd.f32 0.0, %v1108
    %v1110 = vpop.f32.mrf.mxu0
    %v1111 = vadd.f32 0.0, %v1110
    %v1112 = vpop.f32.mrf.mxu0
    %v1113 = vadd.f32 0.0, %v1112
    %v1114 = vpop.f32.mrf.mxu0
    %v1115 = vadd.f32 0.0, %v1114
    %1116 = vmatprep.mubr.bf16.mxu0 0
    %1117 = vmatmul.mubr.bf16.gmra.mxu0 %v1050
    %v1118 = vpop.f32.mrf.mxu0
    %v1119 = vadd.f32 0.0, %v1118
    %v1120 = vpop.f32.mrf.mxu0
    %v1121 = vadd.f32 0.0, %v1120
    %v1122 = vpop.f32.mrf.mxu0
    %v1123 = vadd.f32 0.0, %v1122
    %v1124 = vpop.f32.mrf.mxu0
    %v1125 = vadd.f32 0.0, %v1124
    %1126 = vmatprep.mubr.bf16.mxu0 0
    %1127 = vmatmul.mubr.bf16.gmra.mxu0 %v1053
    %v1128 = vpop.f32.mrf.mxu0
    %v1129 = vadd.f32 0.0, %v1128
    %v1130 = vpop.f32.mrf.mxu0
    %v1131 = vadd.f32 0.0, %v1130
    %v1132 = vpop.f32.mrf.mxu0
    %v1133 = vadd.f32 0.0, %v1132
    %v1134 = vpop.f32.mrf.mxu0
    %v1135 = vadd.f32 0.0, %v1134
    %1136 = vmatprep.mubr.bf16.mxu0 0
    %1137 = vmatmul.mubr.bf16.gmra.mxu0 %v1056
    %v1138 = vpop.f32.mrf.mxu0
    %v1139 = vadd.f32 0.0, %v1138
    %v1140 = vpop.f32.mrf.mxu0
    %v1141 = vadd.f32 0.0, %v1140
    %v1142 = vpop.f32.mrf.mxu0
    %v1143 = vpop.f32.mrf.mxu0
    %1144 = vdwg.mxu0
    %v1145 = vadd.f32 %v1099, %v1101
    %1146 = vadd.xlane.f32.xlu0 %v1145
    %v1147 = vpop.xlane.xlu0 %1146
    %v1148 = vadd.f32 %v1103, %v1105
    %1149 = vadd.xlane.f32.xlu0 %v1148
    %v1150 = vpop.xlane.xlu0 %1149
    %v1151 = vadd.f32 %v1109, %v1111
    %1152 = vadd.xlane.f32.xlu0 %v1151
    %v1153 = vpop.xlane.xlu0 %1152
    %v1154 = vadd.f32 %v1113, %v1115
    %1155 = vadd.xlane.f32.xlu0 %v1154
    %v1156 = vpop.xlane.xlu0 %1155
    %v1157 = vadd.f32 %v1119, %v1121
    %1158 = vadd.xlane.f32.xlu0 %v1157
    %v1159 = vpop.xlane.xlu0 %1158
    %v1160 = vadd.f32 %v1123, %v1125
    %1161 = vadd.xlane.f32.xlu0 %v1160
    %v1162 = vpop.xlane.xlu0 %1161
    %v1163 = vadd.f32 %v1129, %v1131
    %1164 = vadd.xlane.f32.xlu0 %v1163
    %v1165 = vpop.xlane.xlu0 %1164
    %v1166 = vadd.f32 %v1133, %v1135
    %1167 = vadd.xlane.f32.xlu0 %v1166
    %v1168 = vpop.xlane.xlu0 %1167
    %v1169 = vadd.f32 %v1139, %v1141
    %1170 = vadd.xlane.f32.xlu0 %v1169
    %v1171 = vpop.xlane.xlu0 %1170
    %v1172 = vmul.f32 %v1147, %v189
    %v1173 = vmul.f32 %v1150, %v189
    %v1174 = vmul.f32 %v1153, %v189
    %v1175 = vmul.f32 %v1156, %v189
    %v1176 = vmul.f32 %v1159, %v189
    %v1177 = vmul.f32 %v1162, %v189
    %v1178 = vmul.f32 %v1165, %v189
    %v1179 = vmul.f32 %v1168, %v189
    %v1180 = vmul.f32 %v1171, %v189
    %v1181 = vmul.f32 %v1099, %v1099
    %v1182 = vmul.f32 %v1101, %v1101
    %v1183 = vmul.f32 %v1103, %v1103
    %v1184 = vmul.f32 %v1105, %v1105
    %v1185 = vmul.f32 %v1109, %v1109
    %v1186 = vmul.f32 %v1111, %v1111
    %v1187 = vmul.f32 %v1113, %v1113
    %v1188 = vmul.f32 %v1115, %v1115
    %v1189 = vmul.f32 %v1119, %v1119
    %v1190 = vmul.f32 %v1121, %v1121
    %v1191 = vmul.f32 %v1123, %v1123
    %v1192 = vmul.f32 %v1125, %v1125
    %v1193 = vmul.f32 %v1129, %v1129
    %v1194 = vmul.f32 %v1131, %v1131
    %v1195 = vmul.f32 %v1133, %v1133
    %v1196 = vmul.f32 %v1135, %v1135
    %v1197 = vmul.f32 %v1139, %v1139
    %v1198 = vmul.f32 %v1141, %v1141
    %v1199 = vadd.f32 %v1181, %v1182
    %1200 = vadd.xlane.f32.xlu0 %v1199
    %v1201 = vpop.xlane.xlu0 %1200
    %v1202 = vadd.f32 %v1183, %v1184
    %1203 = vadd.xlane.f32.xlu0 %v1202
    %v1204 = vpop.xlane.xlu0 %1203
    %v1205 = vadd.f32 %v1185, %v1186
    %1206 = vadd.xlane.f32.xlu0 %v1205
    %v1207 = vpop.xlane.xlu0 %1206
    %v1208 = vadd.f32 %v1187, %v1188
    %1209 = vadd.xlane.f32.xlu0 %v1208
    %v1210 = vpop.xlane.xlu0 %1209
    %v1211 = vadd.f32 %v1189, %v1190
    %1212 = vadd.xlane.f32.xlu0 %v1211
    %v1213 = vpop.xlane.xlu0 %1212
    %v1214 = vadd.f32 %v1191, %v1192
    %1215 = vadd.xlane.f32.xlu0 %v1214
    %v1216 = vpop.xlane.xlu0 %1215
    %v1217 = vadd.f32 %v1193, %v1194
    %1218 = vadd.xlane.f32.xlu0 %v1217
    %v1219 = vpop.xlane.xlu0 %1218
    %v1220 = vadd.f32 %v1195, %v1196
    %1221 = vadd.xlane.f32.xlu0 %v1220
    %v1222 = vpop.xlane.xlu0 %1221
    %v1223 = vadd.f32 %v1197, %v1198
    %1224 = vadd.xlane.f32.xlu0 %v1223
    %v1225 = vpop.xlane.xlu0 %1224
    %v1226 = vmul.f32 %v1201, %v189
    %v1227 = vmul.f32 %v1204, %v189
    %v1228 = vmul.f32 %v1207, %v189
    %v1229 = vmul.f32 %v1210, %v189
    %v1230 = vmul.f32 %v1213, %v189
    %v1231 = vmul.f32 %v1216, %v189
    %v1232 = vmul.f32 %v1219, %v189
    %v1233 = vmul.f32 %v1222, %v189
    %v1234 = vmul.f32 %v1225, %v189
    %v1235 = vmul.f32 %v1172, %v1172
    %v1236 = vmul.f32 %v1173, %v1173
    %v1237 = vmul.f32 %v1174, %v1174
    %v1238 = vmul.f32 %v1175, %v1175
    %v1239 = vmul.f32 %v1176, %v1176
    %v1240 = vmul.f32 %v1177, %v1177
    %v1241 = vmul.f32 %v1178, %v1178
    %v1242 = vmul.f32 %v1179, %v1179
    %v1243 = vmul.f32 %v1180, %v1180
    %v1244 = vsub.f32 %v1226, %v1235
    %v1245 = vsub.f32 %v1227, %v1236
    %v1246 = vsub.f32 %v1228, %v1237
    %v1247 = vsub.f32 %v1229, %v1238
    %v1248 = vsub.f32 %v1230, %v1239
    %v1249 = vsub.f32 %v1231, %v1240
    %v1250 = vsub.f32 %v1232, %v1241
    %v1251 = vsub.f32 %v1233, %v1242
    %v1252 = vsub.f32 %v1234, %v1243
    %v1253 = vmax.f32 %v1244, 0.0
    %v1254 = vmax.f32 %v1245, 0.0
    %v1255 = vmax.f32 %v1246, 0.0
    %v1256 = vmax.f32 %v1247, 0.0
    %v1257 = vmax.f32 %v1248, 0.0
    %v1258 = vmax.f32 %v1249, 0.0
    %v1259 = vmax.f32 %v1250, 0.0
    %v1260 = vmax.f32 %v1251, 0.0
    %v1261 = vmax.f32 %v1252, 0.0
    %v1262 = vadd.f32 %v1253, 1e-05
    %v1263 = vadd.f32 %v1254, 1e-05
    %v1264 = vadd.f32 %v1255, 1e-05
    %v1265 = vadd.f32 %v1256, 1e-05
    %v1266 = vadd.f32 %v1257, 1e-05
    %v1267 = vadd.f32 %v1258, 1e-05
    %v1268 = vadd.f32 %v1259, 1e-05
    %v1269 = vadd.f32 %v1260, 1e-05
    %v1270 = vadd.f32 %v1261, 1e-05
    %v1271 = vrsqrt.pop %v1262
    %v1272 = vrsqrt.pop %v1263
    %v1273 = vrsqrt.pop %v1264
    %v1274 = vrsqrt.pop %v1265
    %v1275 = vrsqrt.pop %v1266
    %v1276 = vrsqrt.pop %v1267
    %v1277 = vrsqrt.pop %v1268
    %v1278 = vrsqrt.pop %v1269
    %v1279 = vrsqrt.pop %v1270
    %v1280 = vmul.f32 %v280, %v1271
    %v1281 = vmul.f32 %v281, %v1272
    %v1282 = vmul.f32 %v282, %v1273
    %v1283 = vmul.f32 %v283, %v1274
    %v1284 = vmul.f32 %v284, %v1275
    %v1285 = vmul.f32 %v285, %v1276
    %v1286 = vmul.f32 %v286, %v1277
    %v1287 = vmul.f32 %v287, %v1278
    %v1288 = vmul.f32 %v288, %v1279
    %v1289 = vmul.f32 %v1172, %v1280
    %v1290 = vmul.f32 %v1173, %v1281
    %v1291 = vmul.f32 %v1174, %v1282
    %v1292 = vmul.f32 %v1175, %v1283
    %v1293 = vmul.f32 %v1176, %v1284
    %v1294 = vmul.f32 %v1177, %v1285
    %v1295 = vmul.f32 %v1178, %v1286
    %v1296 = vmul.f32 %v1179, %v1287
    %v1297 = vmul.f32 %v1180, %v1288
    %1307 = vrot.lane.b32.xlu0 %v1289, 9
    %v1308 = vpop.permute.xlu0 %1307
    %1309 = vrot.lane.b32.xlu0 %v1290, 9
    %v1310 = vpop.permute.xlu0 %1309
    %1311 = vrot.lane.b32.xlu0 %v1291, 9
    %v1312 = vpop.permute.xlu0 %1311
    %1313 = vrot.lane.b32.xlu0 %v1292, 9
    %v1314 = vpop.permute.xlu0 %1313
    %1315 = vrot.lane.b32.xlu0 %v1293, 9
    %v1316 = vpop.permute.xlu0 %1315
    %1317 = vrot.lane.b32.xlu0 %v1294, 9
    %v1318 = vpop.permute.xlu0 %1317
    %1319 = vrot.lane.b32.xlu0 %v1295, 9
    %v1320 = vpop.permute.xlu0 %1319
    %1321 = vrot.lane.b32.xlu0 %v1296, 9
    %v1322 = vpop.permute.xlu0 %1321
    %1323 = vrot.lane.b32.xlu0 %v1297, 9
    %v1324 = vpop.permute.xlu0 %1323
    %v1334 = vsub.f32 %v280, %v1308
    %v1335 = vsub.f32 %v281, %v1310
    %v1336 = vsub.f32 %v282, %v1312
    %v1337 = vsub.f32 %v283, %v1314
    %v1338 = vsub.f32 %v284, %v1316
    %v1339 = vsub.f32 %v285, %v1318
    %v1340 = vsub.f32 %v286, %v1320
    %v1341 = vsub.f32 %v287, %v1322
    %v1342 = vsub.f32 %v288, %v1324
    %1344 = vset.pattern.permute.xlu0 2
    %1345 = vperm.xlu0 %1344, %v1280
    %v1346 = vpop.permute.xlu0 %1345
    %1349 = vset.pattern.permute.xlu0 2
    %1350 = vperm.xlu0 %1349, %v1281
    %v1351 = vpop.permute.xlu0 %1350
    %1354 = vset.pattern.permute.xlu0 2
    %1355 = vperm.xlu0 %1354, %v1282
    %v1356 = vpop.permute.xlu0 %1355
    %1359 = vset.pattern.permute.xlu0 2
    %1360 = vperm.xlu0 %1359, %v1283
    %v1361 = vpop.permute.xlu0 %1360
    %1364 = vset.pattern.permute.xlu0 2
    %1365 = vperm.xlu0 %1364, %v1284
    %v1366 = vpop.permute.xlu0 %1365
    %1369 = vset.pattern.permute.xlu0 2
    %1370 = vperm.xlu0 %1369, %v1285
    %v1371 = vpop.permute.xlu0 %1370
    %1374 = vset.pattern.permute.xlu0 2
    %1375 = vperm.xlu0 %1374, %v1286
    %v1376 = vpop.permute.xlu0 %1375
    %1379 = vset.pattern.permute.xlu0 2
    %1380 = vperm.xlu0 %1379, %v1287
    %v1381 = vpop.permute.xlu0 %1380
    %1384 = vset.pattern.permute.xlu0 2
    %1385 = vperm.xlu0 %1384, %v1288
    %v1386 = vpop.permute.xlu0 %1385
    %v1388 = vmul.f32 %v1099, %v1346
    %v1389 = vmul.f32 %v1101, %v1346
    %v1390 = vmul.f32 %v1103, %v1351
    %v1391 = vmul.f32 %v1105, %v1351
    %v1392 = vmul.f32 %v1109, %v1356
    %v1393 = vmul.f32 %v1111, %v1356
    %v1394 = vmul.f32 %v1113, %v1361
    %v1395 = vmul.f32 %v1115, %v1361
    %v1396 = vmul.f32 %v1119, %v1366
    %v1397 = vmul.f32 %v1121, %v1366
    %v1398 = vmul.f32 %v1123, %v1371
    %v1399 = vmul.f32 %v1125, %v1371
    %v1400 = vmul.f32 %v1129, %v1376
    %v1401 = vmul.f32 %v1131, %v1376
    %v1402 = vmul.f32 %v1133, %v1381
    %v1403 = vmul.f32 %v1135, %v1381
    %v1404 = vmul.f32 %v1139, %v1386
    %v1405 = vmul.f32 %v1141, %v1386
    %1407 = vset.pattern.permute.xlu0 11
    %1408 = vperm.xlu0 %1407, %v1334
    %v1409 = vpop.permute.xlu0 %1408
    %1412 = vset.pattern.permute.xlu0 11
    %1413 = vperm.xlu0 %1412, %v1335
    %v1414 = vpop.permute.xlu0 %1413
    %1417 = vset.pattern.permute.xlu0 11
    %1418 = vperm.xlu0 %1417, %v1336
    %v1419 = vpop.permute.xlu0 %1418
    %1422 = vset.pattern.permute.xlu0 11
    %1423 = vperm.xlu0 %1422, %v1337
    %v1424 = vpop.permute.xlu0 %1423
    %1427 = vset.pattern.permute.xlu0 11
    %1428 = vperm.xlu0 %1427, %v1338
    %v1429 = vpop.permute.xlu0 %1428
    %1432 = vset.pattern.permute.xlu0 11
    %1433 = vperm.xlu0 %1432, %v1339
    %v1434 = vpop.permute.xlu0 %1433
    %1437 = vset.pattern.permute.xlu0 11
    %1438 = vperm.xlu0 %1437, %v1340
    %v1439 = vpop.permute.xlu0 %1438
    %1442 = vset.pattern.permute.xlu0 11
    %1443 = vperm.xlu0 %1442, %v1341
    %v1444 = vpop.permute.xlu0 %1443
    %1447 = vset.pattern.permute.xlu0 11
    %1448 = vperm.xlu0 %1447, %v1342
    %v1449 = vpop.permute.xlu0 %1448
    %v1451 = vadd.f32 %v1388, %v1409
    %v1452 = vadd.f32 %v1389, %v1409
    %v1453 = vadd.f32 %v1390, %v1414
    %v1454 = vadd.f32 %v1391, %v1414
    %v1455 = vadd.f32 %v1392, %v1419
    %v1456 = vadd.f32 %v1393, %v1419
    %v1457 = vadd.f32 %v1394, %v1424
    %v1458 = vadd.f32 %v1395, %v1424
    %v1459 = vadd.f32 %v1396, %v1429
    %v1460 = vadd.f32 %v1397, %v1429
    %v1461 = vadd.f32 %v1398, %v1434
    %v1462 = vadd.f32 %v1399, %v1434
    %v1463 = vadd.f32 %v1400, %v1439
    %v1464 = vadd.f32 %v1401, %v1439
    %v1465 = vadd.f32 %v1402, %v1444
    %v1466 = vadd.f32 %v1403, %v1444
    %v1467 = vadd.f32 %v1404, %v1449
    %v1468 = vadd.f32 %v1405, %v1449
    %v1469 = vmax.f32 %v1451, 0.0
    %v1470 = vmax.f32 %v1452, 0.0
    %v1471 = vmax.f32 %v1453, 0.0
    %v1472 = vmax.f32 %v1454, 0.0
    %v1473 = vmax.f32 %v1455, 0.0
    %v1474 = vmax.f32 %v1456, 0.0
    %v1475 = vmax.f32 %v1457, 0.0
    %v1476 = vmax.f32 %v1458, 0.0
    %v1477 = vmax.f32 %v1459, 0.0
    %v1478 = vmax.f32 %v1460, 0.0
    %v1479 = vmax.f32 %v1461, 0.0
    %v1480 = vmax.f32 %v1462, 0.0
    %v1481 = vmax.f32 %v1463, 0.0
    %v1482 = vmax.f32 %v1464, 0.0
    %v1483 = vmax.f32 %v1465, 0.0
    %v1484 = vmax.f32 %v1466, 0.0
    %v1485 = vmax.f32 %v1467, 0.0
    %v1486 = vmax.f32 %v1468, 0.0
    %v1487 = vld [vmem:[%s2 + $0xd8] sm:$0xf]
    %v1488 = vld [vmem:[%s2 + $0xe0] sm:$0xf]
    %v1489 = vld [vmem:[%s2 + $0xe8] sm:$0xf]
    %v1490 = vld [vmem:[%s2 + $0xf0] sm:$0xf]
    %v1491 = vld [vmem:[%s2 + $0xf8] sm:$0xf]
    %v1492 = vld [vmem:[%s2 + $0x100] sm:$0xf]
    %v1493 = vld [vmem:[%s2 + $0x108] sm:$0xf]
    %v1494 = vld [vmem:[%s2 + $0x110] sm:$0xf]
    %v1495 = vld [vmem:[%s2 + $0x118] sm:$0xf]
    %v1496 = vld [vmem:[%s2 + $0x120] sm:$0xf]
    %v1497 = vld [vmem:[%s2 + $0x128] sm:$0xf]
    %v1498 = vld [vmem:[%s2 + $0x130] sm:$0xf]
    %v1499 = vld [vmem:[%s2 + $0x138] sm:$0xf]
    %v1500 = vld [vmem:[%s2 + $0x140] sm:$0xf]
    %v1501 = vld [vmem:[%s2 + $0x148] sm:$0xf]
    %v1502 = vld [vmem:[%s2 + $0x150] sm:$0xf]
    %v1503 = vld [vmem:[%s2 + $0x158] sm:$0xf]
    %v1504 = vld [vmem:[%s2 + $0x160] sm:$0xf]
    %v1523 = vunpack.c.l.b16 %v1487
    %v1524 = vunpack.c.l.b16 %v1488
    %v1525 = vunpack.c.l.b16 %v1489
    %v1526 = vunpack.c.l.b16 %v1490
    %v1527 = vunpack.c.l.b16 %v1491
    %v1528 = vunpack.c.l.b16 %v1492
    %v1529 = vunpack.c.l.b16 %v1493
    %v1530 = vunpack.c.l.b16 %v1494
    %v1531 = vunpack.c.l.b16 %v1495
    %v1532 = vunpack.c.l.b16 %v1496
    %v1533 = vunpack.c.l.b16 %v1497
    %v1534 = vunpack.c.l.b16 %v1498
    %v1535 = vunpack.c.l.b16 %v1499
    %v1536 = vunpack.c.l.b16 %v1500
    %v1537 = vunpack.c.l.b16 %v1501
    %v1538 = vunpack.c.l.b16 %v1502
    %v1539 = vunpack.c.l.b16 %v1503
    %v1540 = vunpack.c.l.b16 %v1504
    %v1541 = vpack.c.b16 %v1524, %v1523
    %v1542 = vpack.c.b16 %v1526, %v1525
    %v1543 = vpack.c.b16 %v1528, %v1527
    %v1544 = vpack.c.b16 %v1530, %v1529
    %v1545 = vpack.c.b16 %v1532, %v1531
    %v1546 = vpack.c.b16 %v1534, %v1533
    %v1547 = vpack.c.b16 %v1536, %v1535
    %v1548 = vpack.c.b16 %v1538, %v1537
    %v1549 = vpack.c.b16 %v1540, %v1539
    %v1551 = vsel %vm556, %v1541, 0
    %v1554 = vsel %vm556, %v1542, 0
    %v1557 = vsel %vm556, %v1543, 0
    %v1560 = vsel %vm556, %v1544, 0
    %v1563 = vsel %vm556, %v1545, 0
    %v1566 = vsel %vm556, %v1546, 0
    %v1569 = vsel %vm556, %v1547, 0
    %v1572 = vsel %vm556, %v1548, 0
    %v1575 = vsel %vm556, %v1549, 0
    %1577 = vmatprep.subr.bf16.mxu0 0
    %1578 = vmatpush1.bf16.msra.mxu0 0
    %1579 = vmatprep.subr.bf16.mxu0 0
    %1580 = vmatpush1.bf16.msra.mxu0 0
    %1581 = vmatprep.subr.bf16.mxu0 0
    %1582 = vmatpush1.bf16.msra.mxu0 0
    %1583 = vmatprep.subr.bf16.mxu0 %v576
    %1584 = vmatpush1.bf16.msra.mxu0 %v573
    %1585 = vmatprep.subr.bf16.mxu0 %v521
    %1586 = vmatpush1.bf16.msra.mxu0 %v520
    %1587 = vmatprep.subr.bf16.mxu0 %v519
    %1588 = vmatpush1.bf16.msra.mxu0 %v518
    %1589 = vmatprep.subr.bf16.mxu0 %v517
    %1590 = vmatpush1.bf16.msra.mxu0 %v516
    %1591 = vmatprep.subr.bf16.mxu0 %v515
    %1592 = vmatpush1.bf16.msra.mxu0 %v514
    %1593 = vmatprep.subr.bf16.mxu0 0
    %1594 = vmatpush2.bf16.msra.mxu0 0
    %1595 = vmatprep.subr.bf16.mxu0 0
    %1596 = vmatpush2.bf16.msra.mxu0 0
    %1597 = vmatprep.subr.bf16.mxu0 0
    %1598 = vmatpush2.bf16.msra.mxu0 0
    %1599 = vmatprep.subr.bf16.mxu0 0
    %1600 = vmatpush2.bf16.msra.mxu0 0
    %1601 = vmatprep.subr.bf16.mxu0 0
    %1602 = vmatpush2.bf16.msra.mxu0 0
    %1603 = vmatprep.subr.bf16.mxu0 0
    %1604 = vmatpush2.bf16.msra.mxu0 0
    %1605 = vmatprep.subr.bf16.mxu0 0
    %1606 = vmatpush2.bf16.msra.mxu0 0
    %1607 = vmatprep.subr.bf16.mxu0 0
    %1608 = vmatpush2.bf16.msra.mxu0 0
    %1609 = vmatprep.mubr.bf16.mxu0 0
    %1610 = vmatmul.mubr.bf16.gmra.mxu0 %v1551
    %v1611 = vpop.f32.mrf.mxu0
    %v1612 = vadd.f32 0.0, %v1611
    %v1613 = vpop.f32.mrf.mxu0
    %v1614 = vadd.f32 0.0, %v1613
    %v1615 = vpop.f32.mrf.mxu0
    %v1616 = vadd.f32 0.0, %v1615
    %v1617 = vpop.f32.mrf.mxu0
    %v1618 = vadd.f32 0.0, %v1617
    %1619 = vmatprep.mubr.bf16.mxu0 0
    %1620 = vmatmul.mubr.bf16.gmra.mxu0 %v1554
    %v1621 = vpop.f32.mrf.mxu0
    %v1622 = vadd.f32 0.0, %v1621
    %v1623 = vpop.f32.mrf.mxu0
    %v1624 = vadd.f32 0.0, %v1623
    %v1625 = vpop.f32.mrf.mxu0
    %v1626 = vadd.f32 0.0, %v1625
    %v1627 = vpop.f32.mrf.mxu0
    %v1628 = vadd.f32 0.0, %v1627
    %1629 = vmatprep.mubr.bf16.mxu0 0
    %1630 = vmatmul.mubr.bf16.gmra.mxu0 %v1557
    %v1631 = vpop.f32.mrf.mxu0
    %v1632 = vadd.f32 0.0, %v1631
    %v1633 = vpop.f32.mrf.mxu0
    %v1634 = vadd.f32 0.0, %v1633
    %v1635 = vpop.f32.mrf.mxu0
    %v1636 = vadd.f32 0.0, %v1635
    %v1637 = vpop.f32.mrf.mxu0
    %v1638 = vadd.f32 0.0, %v1637
    %1639 = vmatprep.mubr.bf16.mxu0 0
    %1640 = vmatmul.mubr.bf16.gmra.mxu0 %v1560
    %v1641 = vpop.f32.mrf.mxu0
    %v1642 = vadd.f32 0.0, %v1641
    %v1643 = vpop.f32.mrf.mxu0
    %v1644 = vadd.f32 0.0, %v1643
    %v1645 = vpop.f32.mrf.mxu0
    %v1646 = vadd.f32 0.0, %v1645
    %v1647 = vpop.f32.mrf.mxu0
    %v1648 = vadd.f32 0.0, %v1647
    %1649 = vmatprep.mubr.bf16.mxu0 0
    %1650 = vmatmul.mubr.bf16.gmra.mxu0 %v1563
    %v1651 = vpop.f32.mrf.mxu0
    %v1652 = vadd.f32 0.0, %v1651
    %v1653 = vpop.f32.mrf.mxu0
    %v1654 = vadd.f32 0.0, %v1653
    %v1655 = vpop.f32.mrf.mxu0
    %v1656 = vadd.f32 0.0, %v1655
    %v1657 = vpop.f32.mrf.mxu0
    %v1658 = vadd.f32 0.0, %v1657
    %1659 = vmatprep.mubr.bf16.mxu0 0
    %1660 = vmatmul.mubr.bf16.gmra.mxu0 %v1566
    %v1661 = vpop.f32.mrf.mxu0
    %v1662 = vadd.f32 0.0, %v1661
    %v1663 = vpop.f32.mrf.mxu0
    %v1664 = vadd.f32 0.0, %v1663
    %v1665 = vpop.f32.mrf.mxu0
    %v1666 = vadd.f32 0.0, %v1665
    %v1667 = vpop.f32.mrf.mxu0
    %v1668 = vadd.f32 0.0, %v1667
    %1669 = vmatprep.mubr.bf16.mxu0 0
    %1670 = vmatmul.mubr.bf16.gmra.mxu0 %v1569
    %v1671 = vpop.f32.mrf.mxu0
    %v1672 = vadd.f32 0.0, %v1671
    %v1673 = vpop.f32.mrf.mxu0
    %v1674 = vadd.f32 0.0, %v1673
    %v1675 = vpop.f32.mrf.mxu0
    %v1676 = vadd.f32 0.0, %v1675
    %v1677 = vpop.f32.mrf.mxu0
    %v1678 = vadd.f32 0.0, %v1677
    %1679 = vmatprep.mubr.bf16.mxu0 0
    %1680 = vmatmul.mubr.bf16.gmra.mxu0 %v1572
    %v1681 = vpop.f32.mrf.mxu0
    %v1682 = vadd.f32 0.0, %v1681
    %v1683 = vpop.f32.mrf.mxu0
    %v1684 = vadd.f32 0.0, %v1683
    %v1685 = vpop.f32.mrf.mxu0
    %v1686 = vadd.f32 0.0, %v1685
    %v1687 = vpop.f32.mrf.mxu0
    %v1688 = vadd.f32 0.0, %v1687
    %1689 = vmatprep.mubr.bf16.mxu0 0
    %1690 = vmatmul.mubr.bf16.gmra.mxu0 %v1575
    %v1691 = vpop.f32.mrf.mxu0
    %v1692 = vadd.f32 0.0, %v1691
    %v1693 = vpop.f32.mrf.mxu0
    %v1694 = vadd.f32 0.0, %v1693
    %v1695 = vpop.f32.mrf.mxu0
    %v1696 = vadd.f32 0.0, %v1695
    %v1697 = vpop.f32.mrf.mxu0
    %v1698 = vadd.f32 0.0, %v1697
    %1699 = vdwg.mxu0
    %v1700 = vadd.f32 %v1612, %v1614
    %1701 = vadd.xlane.f32.xlu0 %v1700
    %v1702 = vpop.xlane.xlu0 %1701
    %v1703 = vadd.f32 %v1616, %v1618
    %1704 = vadd.xlane.f32.xlu0 %v1703
    %v1705 = vpop.xlane.xlu0 %1704
    %v1706 = vadd.f32 %v1622, %v1624
    %1707 = vadd.xlane.f32.xlu0 %v1706
    %v1708 = vpop.xlane.xlu0 %1707
    %v1709 = vadd.f32 %v1626, %v1628
    %1710 = vadd.xlane.f32.xlu0 %v1709
    %v1711 = vpop.xlane.xlu0 %1710
    %v1712 = vadd.f32 %v1632, %v1634
    %1713 = vadd.xlane.f32.xlu0 %v1712
    %v1714 = vpop.xlane.xlu0 %1713
    %v1715 = vadd.f32 %v1636, %v1638
    %1716 = vadd.xlane.f32.xlu0 %v1715
    %v1717 = vpop.xlane.xlu0 %1716
    %v1718 = vadd.f32 %v1642, %v1644
    %1719 = vadd.xlane.f32.xlu0 %v1718
    %v1720 = vpop.xlane.xlu0 %1719
    %v1721 = vadd.f32 %v1646, %v1648
    %1722 = vadd.xlane.f32.xlu0 %v1721
    %v1723 = vpop.xlane.xlu0 %1722
    %v1724 = vadd.f32 %v1652, %v1654
    %1725 = vadd.xlane.f32.xlu0 %v1724
    %v1726 = vpop.xlane.xlu0 %1725
    %v1727 = vadd.f32 %v1656, %v1658
    %1728 = vadd.xlane.f32.xlu0 %v1727
    %v1729 = vpop.xlane.xlu0 %1728
    %v1730 = vadd.f32 %v1662, %v1664
    %1731 = vadd.xlane.f32.xlu0 %v1730
    %v1732 = vpop.xlane.xlu0 %1731
    %v1733 = vadd.f32 %v1666, %v1668
    %1734 = vadd.xlane.f32.xlu0 %v1733
    %v1735 = vpop.xlane.xlu0 %1734
    %v1736 = vadd.f32 %v1672, %v1674
    %1737 = vadd.xlane.f32.xlu0 %v1736
    %v1738 = vpop.xlane.xlu0 %1737
    %v1739 = vadd.f32 %v1676, %v1678
    %1740 = vadd.xlane.f32.xlu0 %v1739
    %v1741 = vpop.xlane.xlu0 %1740
    %v1742 = vadd.f32 %v1682, %v1684
    %1743 = vadd.xlane.f32.xlu0 %v1742
    %v1744 = vpop.xlane.xlu0 %1743
    %v1745 = vadd.f32 %v1686, %v1688
    %1746 = vadd.xlane.f32.xlu0 %v1745
    %v1747 = vpop.xlane.xlu0 %1746
    %v1748 = vadd.f32 %v1692, %v1694
    %1749 = vadd.xlane.f32.xlu0 %v1748
    %v1750 = vpop.xlane.xlu0 %1749
    %v1751 = vadd.f32 %v1696, %v1698
    %1752 = vadd.xlane.f32.xlu0 %v1751
    %v1753 = vpop.xlane.xlu0 %1752
    %v1754 = vmul.f32 %v1702, %v189
    %v1755 = vmul.f32 %v1705, %v189
    %v1756 = vmul.f32 %v1708, %v189
    %v1757 = vmul.f32 %v1711, %v189
    %v1758 = vmul.f32 %v1714, %v189
    %v1759 = vmul.f32 %v1717, %v189
    %v1760 = vmul.f32 %v1720, %v189
    %v1761 = vmul.f32 %v1723, %v189
    %v1762 = vmul.f32 %v1726, %v189
    %v1763 = vmul.f32 %v1729, %v189
    %v1764 = vmul.f32 %v1732, %v189
    %v1765 = vmul.f32 %v1735, %v189
    %v1766 = vmul.f32 %v1738, %v189
    %v1767 = vmul.f32 %v1741, %v189
    %v1768 = vmul.f32 %v1744, %v189
    %v1769 = vmul.f32 %v1747, %v189
    %v1770 = vmul.f32 %v1750, %v189
    %v1771 = vmul.f32 %v1753, %v189
    %v1772 = vmul.f32 %v1612, %v1612
    %v1773 = vmul.f32 %v1614, %v1614
    %v1774 = vmul.f32 %v1616, %v1616
    %v1775 = vmul.f32 %v1618, %v1618
    %v1776 = vmul.f32 %v1622, %v1622
    %v1777 = vmul.f32 %v1624, %v1624
    %v1778 = vmul.f32 %v1626, %v1626
    %v1779 = vmul.f32 %v1628, %v1628
    %v1780 = vmul.f32 %v1632, %v1632
    %v1781 = vmul.f32 %v1634, %v1634
    %v1782 = vmul.f32 %v1636, %v1636
    %v1783 = vmul.f32 %v1638, %v1638
    %v1784 = vmul.f32 %v1642, %v1642
    %v1785 = vmul.f32 %v1644, %v1644
    %v1786 = vmul.f32 %v1646, %v1646
    %v1787 = vmul.f32 %v1648, %v1648
    %v1788 = vmul.f32 %v1652, %v1652
    %v1789 = vmul.f32 %v1654, %v1654
    %v1790 = vmul.f32 %v1656, %v1656
    %v1791 = vmul.f32 %v1658, %v1658
    %v1792 = vmul.f32 %v1662, %v1662
    %v1793 = vmul.f32 %v1664, %v1664
    %v1794 = vmul.f32 %v1666, %v1666
    %v1795 = vmul.f32 %v1668, %v1668
    %v1796 = vmul.f32 %v1672, %v1672
    %v1797 = vmul.f32 %v1674, %v1674
    %v1798 = vmul.f32 %v1676, %v1676
    %v1799 = vmul.f32 %v1678, %v1678
    %v1800 = vmul.f32 %v1682, %v1682
    %v1801 = vmul.f32 %v1684, %v1684
    %v1802 = vmul.f32 %v1686, %v1686
    %v1803 = vmul.f32 %v1688, %v1688
    %v1804 = vmul.f32 %v1692, %v1692
    %v1805 = vmul.f32 %v1694, %v1694
    %v1806 = vmul.f32 %v1696, %v1696
    %v1807 = vmul.f32 %v1698, %v1698
    %v1808 = vadd.f32 %v1772, %v1773
    %1809 = vadd.xlane.f32.xlu0 %v1808
    %v1810 = vpop.xlane.xlu0 %1809
    %v1811 = vadd.f32 %v1774, %v1775
    %1812 = vadd.xlane.f32.xlu0 %v1811
    %v1813 = vpop.xlane.xlu0 %1812
    %v1814 = vadd.f32 %v1776, %v1777
    %1815 = vadd.xlane.f32.xlu0 %v1814
    %v1816 = vpop.xlane.xlu0 %1815
    %v1817 = vadd.f32 %v1778, %v1779
    %1818 = vadd.xlane.f32.xlu0 %v1817
    %v1819 = vpop.xlane.xlu0 %1818
    %v1820 = vadd.f32 %v1780, %v1781
    %1821 = vadd.xlane.f32.xlu0 %v1820
    %v1822 = vpop.xlane.xlu0 %1821
    %v1823 = vadd.f32 %v1782, %v1783
    %1824 = vadd.xlane.f32.xlu0 %v1823
    %v1825 = vpop.xlane.xlu0 %1824
    %v1826 = vadd.f32 %v1784, %v1785
    %1827 = vadd.xlane.f32.xlu0 %v1826
    %v1828 = vpop.xlane.xlu0 %1827
    %v1829 = vadd.f32 %v1786, %v1787
    %1830 = vadd.xlane.f32.xlu0 %v1829
    %v1831 = vpop.xlane.xlu0 %1830
    %v1832 = vadd.f32 %v1788, %v1789
    %1833 = vadd.xlane.f32.xlu0 %v1832
    %v1834 = vpop.xlane.xlu0 %1833
    %v1835 = vadd.f32 %v1790, %v1791
    %1836 = vadd.xlane.f32.xlu0 %v1835
    %v1837 = vpop.xlane.xlu0 %1836
    %v1838 = vadd.f32 %v1792, %v1793
    %1839 = vadd.xlane.f32.xlu0 %v1838
    %v1840 = vpop.xlane.xlu0 %1839
    %v1841 = vadd.f32 %v1794, %v1795
    %1842 = vadd.xlane.f32.xlu0 %v1841
    %v1843 = vpop.xlane.xlu0 %1842
    %v1844 = vadd.f32 %v1796, %v1797
    %1845 = vadd.xlane.f32.xlu0 %v1844
    %v1846 = vpop.xlane.xlu0 %1845
    %v1847 = vadd.f32 %v1798, %v1799
    %1848 = vadd.xlane.f32.xlu0 %v1847
    %v1849 = vpop.xlane.xlu0 %1848
    %v1850 = vadd.f32 %v1800, %v1801
    %1851 = vadd.xlane.f32.xlu0 %v1850
    %v1852 = vpop.xlane.xlu0 %1851
    %v1853 = vadd.f32 %v1802, %v1803
    %1854 = vadd.xlane.f32.xlu0 %v1853
    %v1855 = vpop.xlane.xlu0 %1854
    %v1856 = vadd.f32 %v1804, %v1805
    %1857 = vadd.xlane.f32.xlu0 %v1856
    %v1858 = vpop.xlane.xlu0 %1857
    %v1859 = vadd.f32 %v1806, %v1807
    %1860 = vadd.xlane.f32.xlu0 %v1859
    %v1861 = vpop.xlane.xlu0 %1860
    %v1862 = vmul.f32 %v1810, %v189
    %v1863 = vmul.f32 %v1813, %v189
    %v1864 = vmul.f32 %v1816, %v189
    %v1865 = vmul.f32 %v1819, %v189
    %v1866 = vmul.f32 %v1822, %v189
    %v1867 = vmul.f32 %v1825, %v189
    %v1868 = vmul.f32 %v1828, %v189
    %v1869 = vmul.f32 %v1831, %v189
    %v1870 = vmul.f32 %v1834, %v189
    %v1871 = vmul.f32 %v1837, %v189
    %v1872 = vmul.f32 %v1840, %v189
    %v1873 = vmul.f32 %v1843, %v189
    %v1874 = vmul.f32 %v1846, %v189
    %v1875 = vmul.f32 %v1849, %v189
    %v1876 = vmul.f32 %v1852, %v189
    %v1877 = vmul.f32 %v1855, %v189
    %v1878 = vmul.f32 %v1858, %v189
    %v1879 = vmul.f32 %v1861, %v189
    %v1880 = vmul.f32 %v1754, %v1754
    %v1881 = vmul.f32 %v1755, %v1755
    %v1882 = vmul.f32 %v1756, %v1756
    %v1883 = vmul.f32 %v1757, %v1757
    %v1884 = vmul.f32 %v1758, %v1758
    %v1885 = vmul.f32 %v1759, %v1759
    %v1886 = vmul.f32 %v1760, %v1760
    %v1887 = vmul.f32 %v1761, %v1761
    %v1888 = vmul.f32 %v1762, %v1762
    %v1889 = vmul.f32 %v1763, %v1763
    %v1890 = vmul.f32 %v1764, %v1764
    %v1891 = vmul.f32 %v1765, %v1765
    %v1892 = vmul.f32 %v1766, %v1766
    %v1893 = vmul.f32 %v1767, %v1767
    %v1894 = vmul.f32 %v1768, %v1768
    %v1895 = vmul.f32 %v1769, %v1769
    %v1896 = vmul.f32 %v1770, %v1770
    %v1897 = vmul.f32 %v1771, %v1771
    %v1898 = vsub.f32 %v1862, %v1880
    %v1899 = vsub.f32 %v1863, %v1881
    %v1900 = vsub.f32 %v1864, %v1882
    %v1901 = vsub.f32 %v1865, %v1883
    %v1902 = vsub.f32 %v1866, %v1884
    %v1903 = vsub.f32 %v1867, %v1885
    %v1904 = vsub.f32 %v1868, %v1886
    %v1905 = vsub.f32 %v1869, %v1887
    %v1906 = vsub.f32 %v1870, %v1888
    %v1907 = vsub.f32 %v1871, %v1889
    %v1908 = vsub.f32 %v1872, %v1890
    %v1909 = vsub.f32 %v1873, %v1891
    %v1910 = vsub.f32 %v1874, %v1892
    %v1911 = vsub.f32 %v1875, %v1893
    %v1912 = vsub.f32 %v1876, %v1894
    %v1913 = vsub.f32 %v1877, %v1895
    %v1914 = vsub.f32 %v1878, %v1896
    %v1915 = vsub.f32 %v1879, %v1897
    %v1916 = vmax.f32 %v1898, 0.0
    %v1917 = vmax.f32 %v1899, 0.0
    %v1918 = vmax.f32 %v1900, 0.0
    %v1919 = vmax.f32 %v1901, 0.0
    %v1920 = vmax.f32 %v1902, 0.0
    %v1921 = vmax.f32 %v1903, 0.0
    %v1922 = vmax.f32 %v1904, 0.0
    %v1923 = vmax.f32 %v1905, 0.0
    %v1924 = vmax.f32 %v1906, 0.0
    %v1925 = vmax.f32 %v1907, 0.0
    %v1926 = vmax.f32 %v1908, 0.0
    %v1927 = vmax.f32 %v1909, 0.0
    %v1928 = vmax.f32 %v1910, 0.0
    %v1929 = vmax.f32 %v1911, 0.0
    %v1930 = vmax.f32 %v1912, 0.0
    %v1931 = vmax.f32 %v1913, 0.0
    %v1932 = vmax.f32 %v1914, 0.0
    %v1933 = vmax.f32 %v1915, 0.0
    %v1934 = vld [vmem:[%s3] sm:$0xff]
    %v1935 = vld [vmem:[%s3 + $0x8] sm:$0xff]
    %v1936 = vld [vmem:[%s3 + $0x10] sm:$0xff]
    %v1937 = vld [vmem:[%s3 + $0x18] sm:$0xff]
    %v1938 = vld [vmem:[%s3 + $0x20] sm:$0xff]
    %v1939 = vld [vmem:[%s3 + $0x28] sm:$0xff]
    %v1940 = vld [vmem:[%s3 + $0x30] sm:$0xff]
    %v1941 = vld [vmem:[%s3 + $0x38] sm:$0xff]
    %v1942 = vld [vmem:[%s3 + $0x40] sm:$0xff]
    %v1943 = vld [vmem:[%s3 + $0x48] sm:$0xff]
    %v1944 = vld [vmem:[%s3 + $0x50] sm:$0xff]
    %v1945 = vld [vmem:[%s3 + $0x58] sm:$0xff]
    %v1946 = vld [vmem:[%s3 + $0x60] sm:$0xff]
    %v1947 = vld [vmem:[%s3 + $0x68] sm:$0xff]
    %v1948 = vld [vmem:[%s3 + $0x70] sm:$0xff]
    %v1949 = vld [vmem:[%s3 + $0x78] sm:$0xff]
    %v1950 = vld [vmem:[%s3 + $0x80] sm:$0xff]
    %v1951 = vld [vmem:[%s3 + $0x88] sm:$0xff]
    %v1952 = vadd.f32 %v1916, 1e-05
    %v1953 = vadd.f32 %v1917, 1e-05
    %v1954 = vadd.f32 %v1918, 1e-05
    %v1955 = vadd.f32 %v1919, 1e-05
    %v1956 = vadd.f32 %v1920, 1e-05
    %v1957 = vadd.f32 %v1921, 1e-05
    %v1958 = vadd.f32 %v1922, 1e-05
    %v1959 = vadd.f32 %v1923, 1e-05
    %v1960 = vadd.f32 %v1924, 1e-05
    %v1961 = vadd.f32 %v1925, 1e-05
    %v1962 = vadd.f32 %v1926, 1e-05
    %v1963 = vadd.f32 %v1927, 1e-05
    %v1964 = vadd.f32 %v1928, 1e-05
    %v1965 = vadd.f32 %v1929, 1e-05
    %v1966 = vadd.f32 %v1930, 1e-05
    %v1967 = vadd.f32 %v1931, 1e-05
    %v1968 = vadd.f32 %v1932, 1e-05
    %v1969 = vadd.f32 %v1933, 1e-05
    %v1970 = vrsqrt.pop %v1952
    %v1971 = vrsqrt.pop %v1953
    %v1972 = vrsqrt.pop %v1954
    %v1973 = vrsqrt.pop %v1955
    %v1974 = vrsqrt.pop %v1956
    %v1975 = vrsqrt.pop %v1957
    %v1976 = vrsqrt.pop %v1958
    %v1977 = vrsqrt.pop %v1959
    %v1978 = vrsqrt.pop %v1960
    %v1979 = vrsqrt.pop %v1961
    %v1980 = vrsqrt.pop %v1962
    %v1981 = vrsqrt.pop %v1963
    %v1982 = vrsqrt.pop %v1964
    %v1983 = vrsqrt.pop %v1965
    %v1984 = vrsqrt.pop %v1966
    %v1985 = vrsqrt.pop %v1967
    %v1986 = vrsqrt.pop %v1968
    %v1987 = vrsqrt.pop %v1969
    %v1988 = vmul.f32 %v1934, %v1970
    %v1989 = vmul.f32 %v1935, %v1971
    %v1990 = vmul.f32 %v1936, %v1972
    %v1991 = vmul.f32 %v1937, %v1973
    %v1992 = vmul.f32 %v1938, %v1974
    %v1993 = vmul.f32 %v1939, %v1975
    %v1994 = vmul.f32 %v1940, %v1976
    %v1995 = vmul.f32 %v1941, %v1977
    %v1996 = vmul.f32 %v1942, %v1978
    %v1997 = vmul.f32 %v1943, %v1979
    %v1998 = vmul.f32 %v1944, %v1980
    %v1999 = vmul.f32 %v1945, %v1981
    %v2000 = vmul.f32 %v1946, %v1982
    %v2001 = vmul.f32 %v1947, %v1983
    %v2002 = vmul.f32 %v1948, %v1984
    %v2003 = vmul.f32 %v1949, %v1985
    %v2004 = vmul.f32 %v1950, %v1986
    %v2005 = vmul.f32 %v1951, %v1987
    %v2006 = vmul.f32 %v1754, %v1988
    %v2007 = vmul.f32 %v1755, %v1989
    %v2008 = vmul.f32 %v1756, %v1990
    %v2009 = vmul.f32 %v1757, %v1991
    %v2010 = vmul.f32 %v1758, %v1992
    %v2011 = vmul.f32 %v1759, %v1993
    %v2012 = vmul.f32 %v1760, %v1994
    %v2013 = vmul.f32 %v1761, %v1995
    %v2014 = vmul.f32 %v1762, %v1996
    %v2015 = vmul.f32 %v1763, %v1997
    %v2016 = vmul.f32 %v1764, %v1998
    %v2017 = vmul.f32 %v1765, %v1999
    %v2018 = vmul.f32 %v1766, %v2000
    %v2019 = vmul.f32 %v1767, %v2001
    %v2020 = vmul.f32 %v1768, %v2002
    %v2021 = vmul.f32 %v1769, %v2003
    %v2022 = vmul.f32 %v1770, %v2004
    %v2023 = vmul.f32 %v1771, %v2005
    %2042 = vrot.lane.b32.xlu0 %v2006, 9
    %v2043 = vpop.permute.xlu0 %2042
    %2044 = vrot.lane.b32.xlu0 %v2007, 9
    %v2045 = vpop.permute.xlu0 %2044
    %2046 = vrot.lane.b32.xlu0 %v2008, 9
    %v2047 = vpop.permute.xlu0 %2046
    %2048 = vrot.lane.b32.xlu0 %v2009, 9
    %v2049 = vpop.permute.xlu0 %2048
    %2050 = vrot.lane.b32.xlu0 %v2010, 9
    %v2051 = vpop.permute.xlu0 %2050
    %2052 = vrot.lane.b32.xlu0 %v2011, 9
    %v2053 = vpop.permute.xlu0 %2052
    %2054 = vrot.lane.b32.xlu0 %v2012, 9
    %v2055 = vpop.permute.xlu0 %2054
    %2056 = vrot.lane.b32.xlu0 %v2013, 9
    %v2057 = vpop.permute.xlu0 %2056
    %2058 = vrot.lane.b32.xlu0 %v2014, 9
    %v2059 = vpop.permute.xlu0 %2058
    %2060 = vrot.lane.b32.xlu0 %v2015, 9
    %v2061 = vpop.permute.xlu0 %2060
    %2062 = vrot.lane.b32.xlu0 %v2016, 9
    %v2063 = vpop.permute.xlu0 %2062
    %2064 = vrot.lane.b32.xlu0 %v2017, 9
    %v2065 = vpop.permute.xlu0 %2064
    %2066 = vrot.lane.b32.xlu0 %v2018, 9
    %v2067 = vpop.permute.xlu0 %2066
    %2068 = vrot.lane.b32.xlu0 %v2019, 9
    %v2069 = vpop.permute.xlu0 %2068
    %2070 = vrot.lane.b32.xlu0 %v2020, 9
    %v2071 = vpop.permute.xlu0 %2070
    %2072 = vrot.lane.b32.xlu0 %v2021, 9
    %v2073 = vpop.permute.xlu0 %2072
    %2074 = vrot.lane.b32.xlu0 %v2022, 9
    %v2075 = vpop.permute.xlu0 %2074
    %2076 = vrot.lane.b32.xlu0 %v2023, 9
    %v2077 = vpop.permute.xlu0 %2076
    %v2096 = vsub.f32 %v1934, %v2043
    %v2097 = vsub.f32 %v1935, %v2045
    %v2098 = vsub.f32 %v1936, %v2047
    %v2099 = vsub.f32 %v1937, %v2049
    %v2100 = vsub.f32 %v1938, %v2051
    %v2101 = vsub.f32 %v1939, %v2053
    %v2102 = vsub.f32 %v1940, %v2055
    %v2103 = vsub.f32 %v1941, %v2057
    %v2104 = vsub.f32 %v1942, %v2059
    %v2105 = vsub.f32 %v1943, %v2061
    %v2106 = vsub.f32 %v1944, %v2063
    %v2107 = vsub.f32 %v1945, %v2065
    %v2108 = vsub.f32 %v1946, %v2067
    %v2109 = vsub.f32 %v1947, %v2069
    %v2110 = vsub.f32 %v1948, %v2071
    %v2111 = vsub.f32 %v1949, %v2073
    %v2112 = vsub.f32 %v1950, %v2075
    %v2113 = vsub.f32 %v1951, %v2077
    %2115 = vset.pattern.permute.xlu0 3
    %2116 = vperm.xlu0 %2115, %v1988
    %v2117 = vpop.permute.xlu0 %2116
    %2120 = vset.pattern.permute.xlu0 3
    %2121 = vperm.xlu0 %2120, %v1989
    %v2122 = vpop.permute.xlu0 %2121
    %2125 = vset.pattern.permute.xlu0 3
    %2126 = vperm.xlu0 %2125, %v1990
    %v2127 = vpop.permute.xlu0 %2126
    %2130 = vset.pattern.permute.xlu0 3
    %2131 = vperm.xlu0 %2130, %v1991
    %v2132 = vpop.permute.xlu0 %2131
    %2135 = vset.pattern.permute.xlu0 3
    %2136 = vperm.xlu0 %2135, %v1992
    %v2137 = vpop.permute.xlu0 %2136
    %2140 = vset.pattern.permute.xlu0 3
    %2141 = vperm.xlu0 %2140, %v1993
    %v2142 = vpop.permute.xlu0 %2141
    %2145 = vset.pattern.permute.xlu0 3
    %2146 = vperm.xlu0 %2145, %v1994
    %v2147 = vpop.permute.xlu0 %2146
    %2150 = vset.pattern.permute.xlu0 3
    %2151 = vperm.xlu0 %2150, %v1995
    %v2152 = vpop.permute.xlu0 %2151
    %2155 = vset.pattern.permute.xlu0 3
    %2156 = vperm.xlu0 %2155, %v1996
    %v2157 = vpop.permute.xlu0 %2156
    %2160 = vset.pattern.permute.xlu0 3
    %2161 = vperm.xlu0 %2160, %v1997
    %v2162 = vpop.permute.xlu0 %2161
    %2165 = vset.pattern.permute.xlu0 3
    %2166 = vperm.xlu0 %2165, %v1998
    %v2167 = vpop.permute.xlu0 %2166
    %2170 = vset.pattern.permute.xlu0 3
    %2171 = vperm.xlu0 %2170, %v1999
    %v2172 = vpop.permute.xlu0 %2171
    %2175 = vset.pattern.permute.xlu0 3
    %2176 = vperm.xlu0 %2175, %v2000
    %v2177 = vpop.permute.xlu0 %2176
    %2180 = vset.pattern.permute.xlu0 3
    %2181 = vperm.xlu0 %2180, %v2001
    %v2182 = vpop.permute.xlu0 %2181
    %2185 = vset.pattern.permute.xlu0 3
    %2186 = vperm.xlu0 %2185, %v2002
    %v2187 = vpop.permute.xlu0 %2186
    %2190 = vset.pattern.permute.xlu0 3
    %2191 = vperm.xlu0 %2190, %v2003
    %v2192 = vpop.permute.xlu0 %2191
    %2195 = vset.pattern.permute.xlu0 3
    %2196 = vperm.xlu0 %2195, %v2004
    %v2197 = vpop.permute.xlu0 %2196
    %2200 = vset.pattern.permute.xlu0 3
    %2201 = vperm.xlu0 %2200, %v2005
    %v2202 = vpop.permute.xlu0 %2201
    %v2204 = vmul.f32 %v1612, %v2117
    %v2205 = vmul.f32 %v1614, %v2117
    %v2206 = vmul.f32 %v1616, %v2122
    %v2207 = vmul.f32 %v1618, %v2122
    %v2208 = vmul.f32 %v1622, %v2127
    %v2209 = vmul.f32 %v1624, %v2127
    %v2210 = vmul.f32 %v1626, %v2132
    %v2211 = vmul.f32 %v1628, %v2132
    %v2212 = vmul.f32 %v1632, %v2137
    %v2213 = vmul.f32 %v1634, %v2137
    %v2214 = vmul.f32 %v1636, %v2142
    %v2215 = vmul.f32 %v1638, %v2142
    %v2216 = vmul.f32 %v1642, %v2147
    %v2217 = vmul.f32 %v1644, %v2147
    %v2218 = vmul.f32 %v1646, %v2152
    %v2219 = vmul.f32 %v1648, %v2152
    %v2220 = vmul.f32 %v1652, %v2157
    %v2221 = vmul.f32 %v1654, %v2157
    %v2222 = vmul.f32 %v1656, %v2162
    %v2223 = vmul.f32 %v1658, %v2162
    %v2224 = vmul.f32 %v1662, %v2167
    %v2225 = vmul.f32 %v1664, %v2167
    %v2226 = vmul.f32 %v1666, %v2172
    %v2227 = vmul.f32 %v1668, %v2172
    %v2228 = vmul.f32 %v1672, %v2177
    %v2229 = vmul.f32 %v1674, %v2177
    %v2230 = vmul.f32 %v1676, %v2182
    %v2231 = vmul.f32 %v1678, %v2182
    %v2232 = vmul.f32 %v1682, %v2187
    %v2233 = vmul.f32 %v1684, %v2187
    %v2234 = vmul.f32 %v1686, %v2192
    %v2235 = vmul.f32 %v1688, %v2192
    %v2236 = vmul.f32 %v1692, %v2197
    %v2237 = vmul.f32 %v1694, %v2197
    %v2238 = vmul.f32 %v1696, %v2202
    %v2239 = vmul.f32 %v1698, %v2202
    %2241 = vset.pattern.permute.xlu0 12
    %2242 = vperm.xlu0 %2241, %v2096
    %v2243 = vpop.permute.xlu0 %2242
    %2246 = vset.pattern.permute.xlu0 12
    %2247 = vperm.xlu0 %2246, %v2097
    %v2248 = vpop.permute.xlu0 %2247
    %2251 = vset.pattern.permute.xlu0 12
    %2252 = vperm.xlu0 %2251, %v2098
    %v2253 = vpop.permute.xlu0 %2252
    %2256 = vset.pattern.permute.xlu0 12
    %2257 = vperm.xlu0 %2256, %v2099
    %v2258 = vpop.permute.xlu0 %2257
    %2261 = vset.pattern.permute.xlu0 12
    %2262 = vperm.xlu0 %2261, %v2100
    %v2263 = vpop.permute.xlu0 %2262
    %2266 = vset.pattern.permute.xlu0 12
    %2267 = vperm.xlu0 %2266, %v2101
    %v2268 = vpop.permute.xlu0 %2267
    %2271 = vset.pattern.permute.xlu0 12
    %2272 = vperm.xlu0 %2271, %v2102
    %v2273 = vpop.permute.xlu0 %2272
    %2276 = vset.pattern.permute.xlu0 12
    %2277 = vperm.xlu0 %2276, %v2103
    %v2278 = vpop.permute.xlu0 %2277
    %2281 = vset.pattern.permute.xlu0 12
    %2282 = vperm.xlu0 %2281, %v2104
    %v2283 = vpop.permute.xlu0 %2282
    %2286 = vset.pattern.permute.xlu0 12
    %2287 = vperm.xlu0 %2286, %v2105
    %v2288 = vpop.permute.xlu0 %2287
    %2291 = vset.pattern.permute.xlu0 12
    %2292 = vperm.xlu0 %2291, %v2106
    %v2293 = vpop.permute.xlu0 %2292
    %2296 = vset.pattern.permute.xlu0 12
    %2297 = vperm.xlu0 %2296, %v2107
    %v2298 = vpop.permute.xlu0 %2297
    %2301 = vset.pattern.permute.xlu0 12
    %2302 = vperm.xlu0 %2301, %v2108
    %v2303 = vpop.permute.xlu0 %2302
    %2306 = vset.pattern.permute.xlu0 12
    %2307 = vperm.xlu0 %2306, %v2109
    %v2308 = vpop.permute.xlu0 %2307
    %2311 = vset.pattern.permute.xlu0 12
    %2312 = vperm.xlu0 %2311, %v2110
    %v2313 = vpop.permute.xlu0 %2312
    %2316 = vset.pattern.permute.xlu0 12
    %2317 = vperm.xlu0 %2316, %v2111
    %v2318 = vpop.permute.xlu0 %2317
    %2321 = vset.pattern.permute.xlu0 12
    %2322 = vperm.xlu0 %2321, %v2112
    %v2323 = vpop.permute.xlu0 %2322
    %2326 = vset.pattern.permute.xlu0 12
    %2327 = vperm.xlu0 %2326, %v2113
    %v2328 = vpop.permute.xlu0 %2327
    %v2330 = vadd.f32 %v2204, %v2243
    %v2331 = vadd.f32 %v2205, %v2243
    %v2332 = vadd.f32 %v2206, %v2248
    %v2333 = vadd.f32 %v2207, %v2248
    %v2334 = vadd.f32 %v2208, %v2253
    %v2335 = vadd.f32 %v2209, %v2253
    %v2336 = vadd.f32 %v2210, %v2258
    %v2337 = vadd.f32 %v2211, %v2258
    %v2338 = vadd.f32 %v2212, %v2263
    %v2339 = vadd.f32 %v2213, %v2263
    %v2340 = vadd.f32 %v2214, %v2268
    %v2341 = vadd.f32 %v2215, %v2268
    %v2342 = vadd.f32 %v2216, %v2273
    %v2343 = vadd.f32 %v2217, %v2273
    %v2344 = vadd.f32 %v2218, %v2278
    %v2345 = vadd.f32 %v2219, %v2278
    %v2346 = vadd.f32 %v2220, %v2283
    %v2347 = vadd.f32 %v2221, %v2283
    %v2348 = vadd.f32 %v2222, %v2288
    %v2349 = vadd.f32 %v2223, %v2288
    %v2350 = vadd.f32 %v2224, %v2293
    %v2351 = vadd.f32 %v2225, %v2293
    %v2352 = vadd.f32 %v2226, %v2298
    %v2353 = vadd.f32 %v2227, %v2298
    %v2354 = vadd.f32 %v2228, %v2303
    %v2355 = vadd.f32 %v2229, %v2303
    %v2356 = vadd.f32 %v2230, %v2308
    %v2357 = vadd.f32 %v2231, %v2308
    %v2358 = vadd.f32 %v2232, %v2313
    %v2359 = vadd.f32 %v2233, %v2313
    %v2360 = vadd.f32 %v2234, %v2318
    %v2361 = vadd.f32 %v2235, %v2318
    %v2362 = vadd.f32 %v2236, %v2323
    %v2363 = vadd.f32 %v2237, %v2323
    %v2364 = vadd.f32 %v2238, %v2328
    %v2365 = vadd.f32 %v2239, %v2328
    %v2366 = vpack.c.bf16 %v1471, %v1469
    %v2367 = vpack.c.bf16 %v1472, %v1470
    %v2368 = vpack.c.bf16 %v1475, %v1473
    %v2369 = vpack.c.bf16 %v1476, %v1474
    %v2370 = vpack.c.bf16 %v1479, %v1477
    %v2371 = vpack.c.bf16 %v1480, %v1478
    %v2372 = vpack.c.bf16 %v1483, %v1481
    %v2373 = vpack.c.bf16 %v1484, %v1482
    %v2374 = vpack.c.bf16 %v1485, %v1485
    %v2375 = vpack.c.bf16 %v1486, %v1486
    %v2376 = vld [vmem:[%s2 + $0x168] sm:$0xf]
    %v2377 = vld [vmem:[%s2 + $0x170] sm:$0xf]
    %v2378 = vld [vmem:[%s2 + $0x178] sm:$0xf]
    %v2379 = vld [vmem:[%s2 + $0x180] sm:$0xf]
    %v2380 = vld [vmem:[%s2 + $0x188] sm:$0xf]
    %v2381 = vld [vmem:[%s2 + $0x190] sm:$0xf]
    %v2382 = vld [vmem:[%s2 + $0x198] sm:$0xf]
    %v2383 = vld [vmem:[%s2 + $0x1a0] sm:$0xf]
    %v2384 = vld [vmem:[%s2 + $0x1a8] sm:$0xf]
    %v2385 = vld [vmem:[%s2 + $0x1b0] sm:$0xf]
    %v2386 = vld [vmem:[%s2 + $0x1b8] sm:$0xf]
    %v2387 = vld [vmem:[%s2 + $0x1c0] sm:$0xf]
    %v2388 = vld [vmem:[%s2 + $0x1c8] sm:$0xf]
    %v2389 = vld [vmem:[%s2 + $0x1d0] sm:$0xf]
    %v2390 = vld [vmem:[%s2 + $0x1d8] sm:$0xf]
    %v2391 = vld [vmem:[%s2 + $0x1e0] sm:$0xf]
    %v2392 = vld [vmem:[%s2 + $0x1e8] sm:$0xf]
    %v2393 = vld [vmem:[%s2 + $0x1f0] sm:$0xf]
    %v2412 = vunpack.c.l.b16 %v2376
    %v2413 = vunpack.c.l.b16 %v2377
    %v2414 = vunpack.c.l.b16 %v2378
    %v2415 = vunpack.c.l.b16 %v2379
    %v2416 = vunpack.c.l.b16 %v2380
    %v2417 = vunpack.c.l.b16 %v2381
    %v2418 = vunpack.c.l.b16 %v2382
    %v2419 = vunpack.c.l.b16 %v2383
    %v2420 = vunpack.c.l.b16 %v2384
    %v2421 = vunpack.c.l.b16 %v2385
    %v2422 = vunpack.c.l.b16 %v2386
    %v2423 = vunpack.c.l.b16 %v2387
    %v2424 = vunpack.c.l.b16 %v2388
    %v2425 = vunpack.c.l.b16 %v2389
    %v2426 = vunpack.c.l.b16 %v2390
    %v2427 = vunpack.c.l.b16 %v2391
    %v2428 = vunpack.c.l.b16 %v2392
    %v2429 = vunpack.c.l.b16 %v2393
    %v2430 = vpack.c.b16 %v2413, %v2412
    %v2431 = vpack.c.b16 %v2415, %v2414
    %v2432 = vpack.c.b16 %v2417, %v2416
    %v2433 = vpack.c.b16 %v2419, %v2418
    %v2434 = vpack.c.b16 %v2421, %v2420
    %v2435 = vpack.c.b16 %v2423, %v2422
    %v2436 = vpack.c.b16 %v2425, %v2424
    %v2437 = vpack.c.b16 %v2427, %v2426
    %v2438 = vpack.c.b16 %v2429, %v2428
    %v2440 = vsel %vm556, %v2430, 0
    %v2443 = vsel %vm556, %v2431, 0
    %v2446 = vsel %vm556, %v2432, 0
    %v2449 = vsel %vm556, %v2433, 0
    %v2452 = vsel %vm556, %v2434, 0
    %v2455 = vsel %vm556, %v2435, 0
    %v2458 = vsel %vm556, %v2436, 0
    %v2461 = vsel %vm556, %v2437, 0
    %v2464 = vsel %vm556, %v2438, 0
    %v2467 = vsel %vm74, %v2374, 0
    %v2470 = vsel %vm74, %v2375, 0
    %2472 = vmatprep.subr.bf16.mxu0 0
    %2473 = vmatpush1.bf16.msra.mxu0 0
    %2474 = vmatprep.subr.bf16.mxu0 0
    %2475 = vmatpush1.bf16.msra.mxu0 0
    %2476 = vmatprep.subr.bf16.mxu0 0
    %2477 = vmatpush1.bf16.msra.mxu0 0
    %2478 = vmatprep.subr.bf16.mxu0 %v2470
    %2479 = vmatpush1.bf16.msra.mxu0 %v2467
    %2480 = vmatprep.subr.bf16.mxu0 %v2373
    %2481 = vmatpush1.bf16.msra.mxu0 %v2372
    %2482 = vmatprep.subr.bf16.mxu0 %v2371
    %2483 = vmatpush1.bf16.msra.mxu0 %v2370
    %2484 = vmatprep.subr.bf16.mxu0 %v2369
    %2485 = vmatpush1.bf16.msra.mxu0 %v2368
    %2486 = vmatprep.subr.bf16.mxu0 %v2367
    %2487 = vmatpush1.bf16.msra.mxu0 %v2366
    %2488 = vmatprep.subr.bf16.mxu0 0
    %2489 = vmatpush2.bf16.msra.mxu0 0
    %2490 = vmatprep.subr.bf16.mxu0 0
    %2491 = vmatpush2.bf16.msra.mxu0 0
    %2492 = vmatprep.subr.bf16.mxu0 0
    %2493 = vmatpush2.bf16.msra.mxu0 0
    %2494 = vmatprep.subr.bf16.mxu0 0
    %2495 = vmatpush2.bf16.msra.mxu0 0
    %2496 = vmatprep.subr.bf16.mxu0 0
    %2497 = vmatpush2.bf16.msra.mxu0 0
    %2498 = vmatprep.subr.bf16.mxu0 0
    %2499 = vmatpush2.bf16.msra.mxu0 0
    %2500 = vmatprep.subr.bf16.mxu0 0
    %2501 = vmatpush2.bf16.msra.mxu0 0
    %2502 = vmatprep.subr.bf16.mxu0 0
    %2503 = vmatpush2.bf16.msra.mxu0 0
    %2504 = vmatprep.mubr.bf16.mxu0 0
    %2505 = vmatmul.mubr.bf16.gmra.mxu0 %v2440
    %v2506 = vpop.f32.mrf.mxu0
    %v2507 = vadd.f32 0.0, %v2506
    %v2508 = vpop.f32.mrf.mxu0
    %v2509 = vadd.f32 0.0, %v2508
    %v2510 = vpop.f32.mrf.mxu0
    %v2511 = vadd.f32 0.0, %v2510
    %v2512 = vpop.f32.mrf.mxu0
    %v2513 = vadd.f32 0.0, %v2512
    %2514 = vmatprep.mubr.bf16.mxu0 0
    %2515 = vmatmul.mubr.bf16.gmra.mxu0 %v2443
    %v2516 = vpop.f32.mrf.mxu0
    %v2517 = vadd.f32 0.0, %v2516
    %v2518 = vpop.f32.mrf.mxu0
    %v2519 = vadd.f32 0.0, %v2518
    %v2520 = vpop.f32.mrf.mxu0
    %v2521 = vadd.f32 0.0, %v2520
    %v2522 = vpop.f32.mrf.mxu0
    %v2523 = vadd.f32 0.0, %v2522
    %2524 = vmatprep.mubr.bf16.mxu0 0
    %2525 = vmatmul.mubr.bf16.gmra.mxu0 %v2446
    %v2526 = vpop.f32.mrf.mxu0
    %v2527 = vadd.f32 0.0, %v2526
    %v2528 = vpop.f32.mrf.mxu0
    %v2529 = vadd.f32 0.0, %v2528
    %v2530 = vpop.f32.mrf.mxu0
    %v2531 = vadd.f32 0.0, %v2530
    %v2532 = vpop.f32.mrf.mxu0
    %v2533 = vadd.f32 0.0, %v2532
    %2534 = vmatprep.mubr.bf16.mxu0 0
    %2535 = vmatmul.mubr.bf16.gmra.mxu0 %v2449
    %v2536 = vpop.f32.mrf.mxu0
    %v2537 = vadd.f32 0.0, %v2536
    %v2538 = vpop.f32.mrf.mxu0
    %v2539 = vadd.f32 0.0, %v2538
    %v2540 = vpop.f32.mrf.mxu0
    %v2541 = vadd.f32 0.0, %v2540
    %v2542 = vpop.f32.mrf.mxu0
    %v2543 = vadd.f32 0.0, %v2542
    %2544 = vmatprep.mubr.bf16.mxu0 0
    %2545 = vmatmul.mubr.bf16.gmra.mxu0 %v2452
    %v2546 = vpop.f32.mrf.mxu0
    %v2547 = vadd.f32 0.0, %v2546
    %v2548 = vpop.f32.mrf.mxu0
    %v2549 = vadd.f32 0.0, %v2548
    %v2550 = vpop.f32.mrf.mxu0
    %v2551 = vadd.f32 0.0, %v2550
    %v2552 = vpop.f32.mrf.mxu0
    %v2553 = vadd.f32 0.0, %v2552
    %2554 = vmatprep.mubr.bf16.mxu0 0
    %2555 = vmatmul.mubr.bf16.gmra.mxu0 %v2455
    %v2556 = vpop.f32.mrf.mxu0
    %v2557 = vadd.f32 0.0, %v2556
    %v2558 = vpop.f32.mrf.mxu0
    %v2559 = vadd.f32 0.0, %v2558
    %v2560 = vpop.f32.mrf.mxu0
    %v2561 = vadd.f32 0.0, %v2560
    %v2562 = vpop.f32.mrf.mxu0
    %v2563 = vadd.f32 0.0, %v2562
    %2564 = vmatprep.mubr.bf16.mxu0 0
    %2565 = vmatmul.mubr.bf16.gmra.mxu0 %v2458
    %v2566 = vpop.f32.mrf.mxu0
    %v2567 = vadd.f32 0.0, %v2566
    %v2568 = vpop.f32.mrf.mxu0
    %v2569 = vadd.f32 0.0, %v2568
    %v2570 = vpop.f32.mrf.mxu0
    %v2571 = vadd.f32 0.0, %v2570
    %v2572 = vpop.f32.mrf.mxu0
    %v2573 = vadd.f32 0.0, %v2572
    %2574 = vmatprep.mubr.bf16.mxu0 0
    %2575 = vmatmul.mubr.bf16.gmra.mxu0 %v2461
    %v2576 = vpop.f32.mrf.mxu0
    %v2577 = vadd.f32 0.0, %v2576
    %v2578 = vpop.f32.mrf.mxu0
    %v2579 = vadd.f32 0.0, %v2578
    %v2580 = vpop.f32.mrf.mxu0
    %v2581 = vadd.f32 0.0, %v2580
    %v2582 = vpop.f32.mrf.mxu0
    %v2583 = vadd.f32 0.0, %v2582
    %2584 = vmatprep.mubr.bf16.mxu0 0
    %2585 = vmatmul.mubr.bf16.gmra.mxu0 %v2464
    %v2586 = vpop.f32.mrf.mxu0
    %v2587 = vadd.f32 0.0, %v2586
    %v2588 = vpop.f32.mrf.mxu0
    %v2589 = vadd.f32 0.0, %v2588
    %v2590 = vpop.f32.mrf.mxu0
    %v2591 = vadd.f32 0.0, %v2590
    %v2592 = vpop.f32.mrf.mxu0
    %v2593 = vadd.f32 0.0, %v2592
    %2594 = vdwg.mxu0
    %v2595 = vadd.f32 %v2507, %v2509
    %2596 = vadd.xlane.f32.xlu0 %v2595
    %v2597 = vpop.xlane.xlu0 %2596
    %v2598 = vadd.f32 %v2511, %v2513
    %2599 = vadd.xlane.f32.xlu0 %v2598
    %v2600 = vpop.xlane.xlu0 %2599
    %v2601 = vadd.f32 %v2517, %v2519
    %2602 = vadd.xlane.f32.xlu0 %v2601
    %v2603 = vpop.xlane.xlu0 %2602
    %v2604 = vadd.f32 %v2521, %v2523
    %2605 = vadd.xlane.f32.xlu0 %v2604
    %v2606 = vpop.xlane.xlu0 %2605
    %v2607 = vadd.f32 %v2527, %v2529
    %2608 = vadd.xlane.f32.xlu0 %v2607
    %v2609 = vpop.xlane.xlu0 %2608
    %v2610 = vadd.f32 %v2531, %v2533
    %2611 = vadd.xlane.f32.xlu0 %v2610
    %v2612 = vpop.xlane.xlu0 %2611
    %v2613 = vadd.f32 %v2537, %v2539
    %2614 = vadd.xlane.f32.xlu0 %v2613
    %v2615 = vpop.xlane.xlu0 %2614
    %v2616 = vadd.f32 %v2541, %v2543
    %2617 = vadd.xlane.f32.xlu0 %v2616
    %v2618 = vpop.xlane.xlu0 %2617
    %v2619 = vadd.f32 %v2547, %v2549
    %2620 = vadd.xlane.f32.xlu0 %v2619
    %v2621 = vpop.xlane.xlu0 %2620
    %v2622 = vadd.f32 %v2551, %v2553
    %2623 = vadd.xlane.f32.xlu0 %v2622
    %v2624 = vpop.xlane.xlu0 %2623
    %v2625 = vadd.f32 %v2557, %v2559
    %2626 = vadd.xlane.f32.xlu0 %v2625
    %v2627 = vpop.xlane.xlu0 %2626
    %v2628 = vadd.f32 %v2561, %v2563
    %2629 = vadd.xlane.f32.xlu0 %v2628
    %v2630 = vpop.xlane.xlu0 %2629
    %v2631 = vadd.f32 %v2567, %v2569
    %2632 = vadd.xlane.f32.xlu0 %v2631
    %v2633 = vpop.xlane.xlu0 %2632
    %v2634 = vadd.f32 %v2571, %v2573
    %2635 = vadd.xlane.f32.xlu0 %v2634
    %v2636 = vpop.xlane.xlu0 %2635
    %v2637 = vadd.f32 %v2577, %v2579
    %2638 = vadd.xlane.f32.xlu0 %v2637
    %v2639 = vpop.xlane.xlu0 %2638
    %v2640 = vadd.f32 %v2581, %v2583
    %2641 = vadd.xlane.f32.xlu0 %v2640
    %v2642 = vpop.xlane.xlu0 %2641
    %v2643 = vadd.f32 %v2587, %v2589
    %2644 = vadd.xlane.f32.xlu0 %v2643
    %v2645 = vpop.xlane.xlu0 %2644
    %v2646 = vadd.f32 %v2591, %v2593
    %2647 = vadd.xlane.f32.xlu0 %v2646
    %v2648 = vpop.xlane.xlu0 %2647
    %v2649 = vmul.f32 %v2597, %v189
    %v2650 = vmul.f32 %v2600, %v189
    %v2651 = vmul.f32 %v2603, %v189
    %v2652 = vmul.f32 %v2606, %v189
    %v2653 = vmul.f32 %v2609, %v189
    %v2654 = vmul.f32 %v2612, %v189
    %v2655 = vmul.f32 %v2615, %v189
    %v2656 = vmul.f32 %v2618, %v189
    %v2657 = vmul.f32 %v2621, %v189
    %v2658 = vmul.f32 %v2624, %v189
    %v2659 = vmul.f32 %v2627, %v189
    %v2660 = vmul.f32 %v2630, %v189
    %v2661 = vmul.f32 %v2633, %v189
    %v2662 = vmul.f32 %v2636, %v189
    %v2663 = vmul.f32 %v2639, %v189
    %v2664 = vmul.f32 %v2642, %v189
    %v2665 = vmul.f32 %v2645, %v189
    %v2666 = vmul.f32 %v2648, %v189
    %v2667 = vmul.f32 %v2507, %v2507
    %v2668 = vmul.f32 %v2509, %v2509
    %v2669 = vmul.f32 %v2511, %v2511
    %v2670 = vmul.f32 %v2513, %v2513
    %v2671 = vmul.f32 %v2517, %v2517
    %v2672 = vmul.f32 %v2519, %v2519
    %v2673 = vmul.f32 %v2521, %v2521
    %v2674 = vmul.f32 %v2523, %v2523
    %v2675 = vmul.f32 %v2527, %v2527
    %v2676 = vmul.f32 %v2529, %v2529
    %v2677 = vmul.f32 %v2531, %v2531
    %v2678 = vmul.f32 %v2533, %v2533
    %v2679 = vmul.f32 %v2537, %v2537
    %v2680 = vmul.f32 %v2539, %v2539
    %v2681 = vmul.f32 %v2541, %v2541
    %v2682 = vmul.f32 %v2543, %v2543
    %v2683 = vmul.f32 %v2547, %v2547
    %v2684 = vmul.f32 %v2549, %v2549
    %v2685 = vmul.f32 %v2551, %v2551
    %v2686 = vmul.f32 %v2553, %v2553
    %v2687 = vmul.f32 %v2557, %v2557
    %v2688 = vmul.f32 %v2559, %v2559
    %v2689 = vmul.f32 %v2561, %v2561
    %v2690 = vmul.f32 %v2563, %v2563
    %v2691 = vmul.f32 %v2567, %v2567
    %v2692 = vmul.f32 %v2569, %v2569
    %v2693 = vmul.f32 %v2571, %v2571
    %v2694 = vmul.f32 %v2573, %v2573
    %v2695 = vmul.f32 %v2577, %v2577
    %v2696 = vmul.f32 %v2579, %v2579
    %v2697 = vmul.f32 %v2581, %v2581
    %v2698 = vmul.f32 %v2583, %v2583
    %v2699 = vmul.f32 %v2587, %v2587
    %v2700 = vmul.f32 %v2589, %v2589
    %v2701 = vmul.f32 %v2591, %v2591
    %v2702 = vmul.f32 %v2593, %v2593
    %v2703 = vadd.f32 %v2667, %v2668
    %2704 = vadd.xlane.f32.xlu0 %v2703
    %v2705 = vpop.xlane.xlu0 %2704
    %v2706 = vadd.f32 %v2669, %v2670
    %2707 = vadd.xlane.f32.xlu0 %v2706
    %v2708 = vpop.xlane.xlu0 %2707
    %v2709 = vadd.f32 %v2671, %v2672
    %2710 = vadd.xlane.f32.xlu0 %v2709
    %v2711 = vpop.xlane.xlu0 %2710
    %v2712 = vadd.f32 %v2673, %v2674
    %2713 = vadd.xlane.f32.xlu0 %v2712
    %v2714 = vpop.xlane.xlu0 %2713
    %v2715 = vadd.f32 %v2675, %v2676
    %2716 = vadd.xlane.f32.xlu0 %v2715
    %v2717 = vpop.xlane.xlu0 %2716
    %v2718 = vadd.f32 %v2677, %v2678
    %2719 = vadd.xlane.f32.xlu0 %v2718
    %v2720 = vpop.xlane.xlu0 %2719
    %v2721 = vadd.f32 %v2679, %v2680
    %2722 = vadd.xlane.f32.xlu0 %v2721
    %v2723 = vpop.xlane.xlu0 %2722
    %v2724 = vadd.f32 %v2681, %v2682
    %2725 = vadd.xlane.f32.xlu0 %v2724
    %v2726 = vpop.xlane.xlu0 %2725
    %v2727 = vadd.f32 %v2683, %v2684
    %2728 = vadd.xlane.f32.xlu0 %v2727
    %v2729 = vpop.xlane.xlu0 %2728
    %v2730 = vadd.f32 %v2685, %v2686
    %2731 = vadd.xlane.f32.xlu0 %v2730
    %v2732 = vpop.xlane.xlu0 %2731
    %v2733 = vadd.f32 %v2687, %v2688
    %2734 = vadd.xlane.f32.xlu0 %v2733
    %v2735 = vpop.xlane.xlu0 %2734
    %v2736 = vadd.f32 %v2689, %v2690
    %2737 = vadd.xlane.f32.xlu0 %v2736
    %v2738 = vpop.xlane.xlu0 %2737
    %v2739 = vadd.f32 %v2691, %v2692
    %2740 = vadd.xlane.f32.xlu0 %v2739
    %v2741 = vpop.xlane.xlu0 %2740
    %v2742 = vadd.f32 %v2693, %v2694
    %2743 = vadd.xlane.f32.xlu0 %v2742
    %v2744 = vpop.xlane.xlu0 %2743
    %v2745 = vadd.f32 %v2695, %v2696
    %2746 = vadd.xlane.f32.xlu0 %v2745
    %v2747 = vpop.xlane.xlu0 %2746
    %v2748 = vadd.f32 %v2697, %v2698
    %2749 = vadd.xlane.f32.xlu0 %v2748
    %v2750 = vpop.xlane.xlu0 %2749
    %v2751 = vadd.f32 %v2699, %v2700
    %2752 = vadd.xlane.f32.xlu0 %v2751
    %v2753 = vpop.xlane.xlu0 %2752
    %v2754 = vadd.f32 %v2701, %v2702
    %2755 = vadd.xlane.f32.xlu0 %v2754
    %v2756 = vpop.xlane.xlu0 %2755
    %v2757 = vmul.f32 %v2705, %v189
    %v2758 = vmul.f32 %v2708, %v189
    %v2759 = vmul.f32 %v2711, %v189
    %v2760 = vmul.f32 %v2714, %v189
    %v2761 = vmul.f32 %v2717, %v189
    %v2762 = vmul.f32 %v2720, %v189
    %v2763 = vmul.f32 %v2723, %v189
    %v2764 = vmul.f32 %v2726, %v189
    %v2765 = vmul.f32 %v2729, %v189
    %v2766 = vmul.f32 %v2732, %v189
    %v2767 = vmul.f32 %v2735, %v189
    %v2768 = vmul.f32 %v2738, %v189
    %v2769 = vmul.f32 %v2741, %v189
    %v2770 = vmul.f32 %v2744, %v189
    %v2771 = vmul.f32 %v2747, %v189
    %v2772 = vmul.f32 %v2750, %v189
    %v2773 = vmul.f32 %v2753, %v189
    %v2774 = vmul.f32 %v2756, %v189
    %v2775 = vmul.f32 %v2649, %v2649
    %v2776 = vmul.f32 %v2650, %v2650
    %v2777 = vmul.f32 %v2651, %v2651
    %v2778 = vmul.f32 %v2652, %v2652
    %v2779 = vmul.f32 %v2653, %v2653
    %v2780 = vmul.f32 %v2654, %v2654
    %v2781 = vmul.f32 %v2655, %v2655
    %v2782 = vmul.f32 %v2656, %v2656
    %v2783 = vmul.f32 %v2657, %v2657
    %v2784 = vmul.f32 %v2658, %v2658
    %v2785 = vmul.f32 %v2659, %v2659
    %v2786 = vmul.f32 %v2660, %v2660
    %v2787 = vmul.f32 %v2661, %v2661
    %v2788 = vmul.f32 %v2662, %v2662
    %v2789 = vmul.f32 %v2663, %v2663
    %v2790 = vmul.f32 %v2664, %v2664
    %v2791 = vmul.f32 %v2665, %v2665
    %v2792 = vmul.f32 %v2666, %v2666
    %v2793 = vsub.f32 %v2757, %v2775
    %v2794 = vsub.f32 %v2758, %v2776
    %v2795 = vsub.f32 %v2759, %v2777
    %v2796 = vsub.f32 %v2760, %v2778
    %v2797 = vsub.f32 %v2761, %v2779
    %v2798 = vsub.f32 %v2762, %v2780
    %v2799 = vsub.f32 %v2763, %v2781
    %v2800 = vsub.f32 %v2764, %v2782
    %v2801 = vsub.f32 %v2765, %v2783
    %v2802 = vsub.f32 %v2766, %v2784
    %v2803 = vsub.f32 %v2767, %v2785
    %v2804 = vsub.f32 %v2768, %v2786
    %v2805 = vsub.f32 %v2769, %v2787
    %v2806 = vsub.f32 %v2770, %v2788
    %v2807 = vsub.f32 %v2771, %v2789
    %v2808 = vsub.f32 %v2772, %v2790
    %v2809 = vsub.f32 %v2773, %v2791
    %v2810 = vsub.f32 %v2774, %v2792
    %v2811 = vmax.f32 %v2793, 0.0
    %v2812 = vmax.f32 %v2794, 0.0
    %v2813 = vmax.f32 %v2795, 0.0
    %v2814 = vmax.f32 %v2796, 0.0
    %v2815 = vmax.f32 %v2797, 0.0
    %v2816 = vmax.f32 %v2798, 0.0
    %v2817 = vmax.f32 %v2799, 0.0
    %v2818 = vmax.f32 %v2800, 0.0
    %v2819 = vmax.f32 %v2801, 0.0
    %v2820 = vmax.f32 %v2802, 0.0
    %v2821 = vmax.f32 %v2803, 0.0
    %v2822 = vmax.f32 %v2804, 0.0
    %v2823 = vmax.f32 %v2805, 0.0
    %v2824 = vmax.f32 %v2806, 0.0
    %v2825 = vmax.f32 %v2807, 0.0
    %v2826 = vmax.f32 %v2808, 0.0
    %v2827 = vmax.f32 %v2809, 0.0
    %v2828 = vmax.f32 %v2810, 0.0
    %v2829 = vadd.f32 %v2811, 1e-05
    %v2830 = vadd.f32 %v2812, 1e-05
    %v2831 = vadd.f32 %v2813, 1e-05
    %v2832 = vadd.f32 %v2814, 1e-05
    %v2833 = vadd.f32 %v2815, 1e-05
    %v2834 = vadd.f32 %v2816, 1e-05
    %v2835 = vadd.f32 %v2817, 1e-05
    %v2836 = vadd.f32 %v2818, 1e-05
    %v2837 = vadd.f32 %v2819, 1e-05
    %v2838 = vadd.f32 %v2820, 1e-05
    %v2839 = vadd.f32 %v2821, 1e-05
    %v2840 = vadd.f32 %v2822, 1e-05
    %v2841 = vadd.f32 %v2823, 1e-05
    %v2842 = vadd.f32 %v2824, 1e-05
    %v2843 = vadd.f32 %v2825, 1e-05
    %v2844 = vadd.f32 %v2826, 1e-05
    %v2845 = vadd.f32 %v2827, 1e-05
    %v2846 = vadd.f32 %v2828, 1e-05
    %v2847 = vrsqrt.pop %v2829
    %v2848 = vrsqrt.pop %v2830
    %v2849 = vrsqrt.pop %v2831
    %v2850 = vrsqrt.pop %v2832
    %v2851 = vrsqrt.pop %v2833
    %v2852 = vrsqrt.pop %v2834
    %v2853 = vrsqrt.pop %v2835
    %v2854 = vrsqrt.pop %v2836
    %v2855 = vrsqrt.pop %v2837
    %v2856 = vrsqrt.pop %v2838
    %v2857 = vrsqrt.pop %v2839
    %v2858 = vrsqrt.pop %v2840
    %v2859 = vrsqrt.pop %v2841
    %v2860 = vrsqrt.pop %v2842
    %v2861 = vrsqrt.pop %v2843
    %v2862 = vrsqrt.pop %v2844
    %v2863 = vrsqrt.pop %v2845
    %v2864 = vrsqrt.pop %v2846
    %v2865 = vmul.f32 %v1934, %v2847
    %v2866 = vmul.f32 %v1935, %v2848
    %v2867 = vmul.f32 %v1936, %v2849
    %v2868 = vmul.f32 %v1937, %v2850
    %v2869 = vmul.f32 %v1938, %v2851
    %v2870 = vmul.f32 %v1939, %v2852
    %v2871 = vmul.f32 %v1940, %v2853
    %v2872 = vmul.f32 %v1941, %v2854
    %v2873 = vmul.f32 %v1942, %v2855
    %v2874 = vmul.f32 %v1943, %v2856
    %v2875 = vmul.f32 %v1944, %v2857
    %v2876 = vmul.f32 %v1945, %v2858
    %v2877 = vmul.f32 %v1946, %v2859
    %v2878 = vmul.f32 %v1947, %v2860
    %v2879 = vmul.f32 %v1948, %v2861
    %v2880 = vmul.f32 %v1949, %v2862
    %v2881 = vmul.f32 %v1950, %v2863
    %v2882 = vmul.f32 %v1951, %v2864
    %v2883 = vmul.f32 %v2649, %v2865
    %v2884 = vmul.f32 %v2650, %v2866
    %v2885 = vmul.f32 %v2651, %v2867
    %v2886 = vmul.f32 %v2652, %v2868
    %v2887 = vmul.f32 %v2653, %v2869
    %v2888 = vmul.f32 %v2654, %v2870
    %v2889 = vmul.f32 %v2655, %v2871
    %v2890 = vmul.f32 %v2656, %v2872
    %v2891 = vmul.f32 %v2657, %v2873
    %v2892 = vmul.f32 %v2658, %v2874
    %v2893 = vmul.f32 %v2659, %v2875
    %v2894 = vmul.f32 %v2660, %v2876
    %v2895 = vmul.f32 %v2661, %v2877
    %v2896 = vmul.f32 %v2662, %v2878
    %v2897 = vmul.f32 %v2663, %v2879
    %v2898 = vmul.f32 %v2664, %v2880
    %v2899 = vmul.f32 %v2665, %v2881
    %v2900 = vmul.f32 %v2666, %v2882
    %2919 = vrot.lane.b32.xlu0 %v2883, 9
    %v2920 = vpop.permute.xlu0 %2919
    %2921 = vrot.lane.b32.xlu0 %v2884, 9
    %v2922 = vpop.permute.xlu0 %2921
    %2923 = vrot.lane.b32.xlu0 %v2885, 9
    %v2924 = vpop.permute.xlu0 %2923
    %2925 = vrot.lane.b32.xlu0 %v2886, 9
    %v2926 = vpop.permute.xlu0 %2925
    %2927 = vrot.lane.b32.xlu0 %v2887, 9
    %v2928 = vpop.permute.xlu0 %2927
    %2929 = vrot.lane.b32.xlu0 %v2888, 9
    %v2930 = vpop.permute.xlu0 %2929
    %2931 = vrot.lane.b32.xlu0 %v2889, 9
    %v2932 = vpop.permute.xlu0 %2931
    %2933 = vrot.lane.b32.xlu0 %v2890, 9
    %v2934 = vpop.permute.xlu0 %2933
    %2935 = vrot.lane.b32.xlu0 %v2891, 9
    %v2936 = vpop.permute.xlu0 %2935
    %2937 = vrot.lane.b32.xlu0 %v2892, 9
    %v2938 = vpop.permute.xlu0 %2937
    %2939 = vrot.lane.b32.xlu0 %v2893, 9
    %v2940 = vpop.permute.xlu0 %2939
    %2941 = vrot.lane.b32.xlu0 %v2894, 9
    %v2942 = vpop.permute.xlu0 %2941
    %2943 = vrot.lane.b32.xlu0 %v2895, 9
    %v2944 = vpop.permute.xlu0 %2943
    %2945 = vrot.lane.b32.xlu0 %v2896, 9
    %v2946 = vpop.permute.xlu0 %2945
    %2947 = vrot.lane.b32.xlu0 %v2897, 9
    %v2948 = vpop.permute.xlu0 %2947
    %2949 = vrot.lane.b32.xlu0 %v2898, 9
    %v2950 = vpop.permute.xlu0 %2949
    %2951 = vrot.lane.b32.xlu0 %v2899, 9
    %v2952 = vpop.permute.xlu0 %2951
    %2953 = vrot.lane.b32.xlu0 %v2900, 9
    %v2954 = vpop.permute.xlu0 %2953
    %v2973 = vsub.f32 %v1934, %v2920
    %v2974 = vsub.f32 %v1935, %v2922
    %v2975 = vsub.f32 %v1936, %v2924
    %v2976 = vsub.f32 %v1937, %v2926
    %v2977 = vsub.f32 %v1938, %v2928
    %v2978 = vsub.f32 %v1939, %v2930
    %v2979 = vsub.f32 %v1940, %v2932
    %v2980 = vsub.f32 %v1941, %v2934
    %v2981 = vsub.f32 %v1942, %v2936
    %v2982 = vsub.f32 %v1943, %v2938
    %v2983 = vsub.f32 %v1944, %v2940
    %v2984 = vsub.f32 %v1945, %v2942
    %v2985 = vsub.f32 %v1946, %v2944
    %v2986 = vsub.f32 %v1947, %v2946
    %v2987 = vsub.f32 %v1948, %v2948
    %v2988 = vsub.f32 %v1949, %v2950
    %v2989 = vsub.f32 %v1950, %v2952
    %v2990 = vsub.f32 %v1951, %v2954
    %2992 = vset.pattern.permute.xlu0 4
    %2993 = vperm.xlu0 %2992, %v2865
    %v2994 = vpop.permute.xlu0 %2993
    %2997 = vset.pattern.permute.xlu0 4
    %2998 = vperm.xlu0 %2997, %v2866
    %v2999 = vpop.permute.xlu0 %2998
    %3002 = vset.pattern.permute.xlu0 4
    %3003 = vperm.xlu0 %3002, %v2867
    %v3004 = vpop.permute.xlu0 %3003
    %3007 = vset.pattern.permute.xlu0 4
    %3008 = vperm.xlu0 %3007, %v2868
    %v3009 = vpop.permute.xlu0 %3008
    %3012 = vset.pattern.permute.xlu0 4
    %3013 = vperm.xlu0 %3012, %v2869
    %v3014 = vpop.permute.xlu0 %3013
    %3017 = vset.pattern.permute.xlu0 4
    %3018 = vperm.xlu0 %3017, %v2870
    %v3019 = vpop.permute.xlu0 %3018
    %3022 = vset.pattern.permute.xlu0 4
    %3023 = vperm.xlu0 %3022, %v2871
    %v3024 = vpop.permute.xlu0 %3023
    %3027 = vset.pattern.permute.xlu0 4
    %3028 = vperm.xlu0 %3027, %v2872
    %v3029 = vpop.permute.xlu0 %3028
    %3032 = vset.pattern.permute.xlu0 4
    %3033 = vperm.xlu0 %3032, %v2873
    %v3034 = vpop.permute.xlu0 %3033
    %3037 = vset.pattern.permute.xlu0 4
    %3038 = vperm.xlu0 %3037, %v2874
    %v3039 = vpop.permute.xlu0 %3038
    %3042 = vset.pattern.permute.xlu0 4
    %3043 = vperm.xlu0 %3042, %v2875
    %v3044 = vpop.permute.xlu0 %3043
    %3047 = vset.pattern.permute.xlu0 4
    %3048 = vperm.xlu0 %3047, %v2876
    %v3049 = vpop.permute.xlu0 %3048
    %3052 = vset.pattern.permute.xlu0 4
    %3053 = vperm.xlu0 %3052, %v2877
    %v3054 = vpop.permute.xlu0 %3053
    %3057 = vset.pattern.permute.xlu0 4
    %3058 = vperm.xlu0 %3057, %v2878
    %v3059 = vpop.permute.xlu0 %3058
    %3062 = vset.pattern.permute.xlu0 4
    %3063 = vperm.xlu0 %3062, %v2879
    %v3064 = vpop.permute.xlu0 %3063
    %3067 = vset.pattern.permute.xlu0 4
    %3068 = vperm.xlu0 %3067, %v2880
    %v3069 = vpop.permute.xlu0 %3068
    %3072 = vset.pattern.permute.xlu0 4
    %3073 = vperm.xlu0 %3072, %v2881
    %v3074 = vpop.permute.xlu0 %3073
    %3077 = vset.pattern.permute.xlu0 4
    %3078 = vperm.xlu0 %3077, %v2882
    %v3079 = vpop.permute.xlu0 %3078
    %v3081 = vmul.f32 %v2507, %v2994
    %v3082 = vmul.f32 %v2509, %v2994
    %v3083 = vmul.f32 %v2511, %v2999
    %v3084 = vmul.f32 %v2513, %v2999
    %v3085 = vmul.f32 %v2517, %v3004
    %v3086 = vmul.f32 %v2519, %v3004
    %v3087 = vmul.f32 %v2521, %v3009
    %v3088 = vmul.f32 %v2523, %v3009
    %v3089 = vmul.f32 %v2527, %v3014
    %v3090 = vmul.f32 %v2529, %v3014
    %v3091 = vmul.f32 %v2531, %v3019
    %v3092 = vmul.f32 %v2533, %v3019
    %v3093 = vmul.f32 %v2537, %v3024
    %v3094 = vmul.f32 %v2539, %v3024
    %v3095 = vmul.f32 %v2541, %v3029
    %v3096 = vmul.f32 %v2543, %v3029
    %v3097 = vmul.f32 %v2547, %v3034
    %v3098 = vmul.f32 %v2549, %v3034
    %v3099 = vmul.f32 %v2551, %v3039
    %v3100 = vmul.f32 %v2553, %v3039
    %v3101 = vmul.f32 %v2557, %v3044
    %v3102 = vmul.f32 %v2559, %v3044
    %v3103 = vmul.f32 %v2561, %v3049
    %v3104 = vmul.f32 %v2563, %v3049
    %v3105 = vmul.f32 %v2567, %v3054
    %v3106 = vmul.f32 %v2569, %v3054
    %v3107 = vmul.f32 %v2571, %v3059
    %v3108 = vmul.f32 %v2573, %v3059
    %v3109 = vmul.f32 %v2577, %v3064
    %v3110 = vmul.f32 %v2579, %v3064
    %v3111 = vmul.f32 %v2581, %v3069
    %v3112 = vmul.f32 %v2583, %v3069
    %v3113 = vmul.f32 %v2587, %v3074
    %v3114 = vmul.f32 %v2589, %v3074
    %v3115 = vmul.f32 %v2591, %v3079
    %v3116 = vmul.f32 %v2593, %v3079
    %3118 = vset.pattern.permute.xlu0 13
    %3119 = vperm.xlu0 %3118, %v2973
    %v3120 = vpop.permute.xlu0 %3119
    %3123 = vset.pattern.permute.xlu0 13
    %3124 = vperm.xlu0 %3123, %v2974
    %v3125 = vpop.permute.xlu0 %3124
    %3128 = vset.pattern.permute.xlu0 13
    %3129 = vperm.xlu0 %3128, %v2975
    %v3130 = vpop.permute.xlu0 %3129
    %3133 = vset.pattern.permute.xlu0 13
    %3134 = vperm.xlu0 %3133, %v2976
    %v3135 = vpop.permute.xlu0 %3134
    %3138 = vset.pattern.permute.xlu0 13
    %3139 = vperm.xlu0 %3138, %v2977
    %v3140 = vpop.permute.xlu0 %3139
    %3143 = vset.pattern.permute.xlu0 13
    %3144 = vperm.xlu0 %3143, %v2978
    %v3145 = vpop.permute.xlu0 %3144
    %3148 = vset.pattern.permute.xlu0 13
    %3149 = vperm.xlu0 %3148, %v2979
    %v3150 = vpop.permute.xlu0 %3149
    %3153 = vset.pattern.permute.xlu0 13
    %3154 = vperm.xlu0 %3153, %v2980
    %v3155 = vpop.permute.xlu0 %3154
    %3158 = vset.pattern.permute.xlu0 13
    %3159 = vperm.xlu0 %3158, %v2981
    %v3160 = vpop.permute.xlu0 %3159
    %3163 = vset.pattern.permute.xlu0 13
    %3164 = vperm.xlu0 %3163, %v2982
    %v3165 = vpop.permute.xlu0 %3164
    %3168 = vset.pattern.permute.xlu0 13
    %3169 = vperm.xlu0 %3168, %v2983
    %v3170 = vpop.permute.xlu0 %3169
    %3173 = vset.pattern.permute.xlu0 13
    %3174 = vperm.xlu0 %3173, %v2984
    %v3175 = vpop.permute.xlu0 %3174
    %3178 = vset.pattern.permute.xlu0 13
    %3179 = vperm.xlu0 %3178, %v2985
    %v3180 = vpop.permute.xlu0 %3179
    %3183 = vset.pattern.permute.xlu0 13
    %3184 = vperm.xlu0 %3183, %v2986
    %v3185 = vpop.permute.xlu0 %3184
    %3188 = vset.pattern.permute.xlu0 13
    %3189 = vperm.xlu0 %3188, %v2987
    %v3190 = vpop.permute.xlu0 %3189
    %3193 = vset.pattern.permute.xlu0 13
    %3194 = vperm.xlu0 %3193, %v2988
    %v3195 = vpop.permute.xlu0 %3194
    %3198 = vset.pattern.permute.xlu0 13
    %3199 = vperm.xlu0 %3198, %v2989
    %v3200 = vpop.permute.xlu0 %3199
    %3203 = vset.pattern.permute.xlu0 13
    %3204 = vperm.xlu0 %3203, %v2990
    %v3205 = vpop.permute.xlu0 %3204
    %v3207 = vadd.f32 %v3081, %v3120
    %v3208 = vadd.f32 %v3082, %v3120
    %v3209 = vadd.f32 %v3083, %v3125
    %v3210 = vadd.f32 %v3084, %v3125
    %v3211 = vadd.f32 %v3085, %v3130
    %v3212 = vadd.f32 %v3086, %v3130
    %v3213 = vadd.f32 %v3087, %v3135
    %v3214 = vadd.f32 %v3088, %v3135
    %v3215 = vadd.f32 %v3089, %v3140
    %v3216 = vadd.f32 %v3090, %v3140
    %v3217 = vadd.f32 %v3091, %v3145
    %v3218 = vadd.f32 %v3092, %v3145
    %v3219 = vadd.f32 %v3093, %v3150
    %v3220 = vadd.f32 %v3094, %v3150
    %v3221 = vadd.f32 %v3095, %v3155
    %v3222 = vadd.f32 %v3096, %v3155
    %v3223 = vadd.f32 %v3097, %v3160
    %v3224 = vadd.f32 %v3098, %v3160
    %v3225 = vadd.f32 %v3099, %v3165
    %v3226 = vadd.f32 %v3100, %v3165
    %v3227 = vadd.f32 %v3101, %v3170
    %v3228 = vadd.f32 %v3102, %v3170
    %v3229 = vadd.f32 %v3103, %v3175
    %v3230 = vadd.f32 %v3104, %v3175
    %v3231 = vadd.f32 %v3105, %v3180
    %v3232 = vadd.f32 %v3106, %v3180
    %v3233 = vadd.f32 %v3107, %v3185
    %v3234 = vadd.f32 %v3108, %v3185
    %v3235 = vadd.f32 %v3109, %v3190
    %v3236 = vadd.f32 %v3110, %v3190
    %v3237 = vadd.f32 %v3111, %v3195
    %v3238 = vadd.f32 %v3112, %v3195
    %v3239 = vadd.f32 %v3113, %v3200
    %v3240 = vadd.f32 %v3114, %v3200
    %v3241 = vadd.f32 %v3115, %v3205
    %v3242 = vadd.f32 %v3116, %v3205
    %v3243 = vadd.f32 %v3207, %v2330
    %v3244 = vadd.f32 %v3208, %v2331
    %v3245 = vadd.f32 %v3209, %v2332
    %v3246 = vadd.f32 %v3210, %v2333
    %v3247 = vadd.f32 %v3211, %v2334
    %v3248 = vadd.f32 %v3212, %v2335
    %v3249 = vadd.f32 %v3213, %v2336
    %v3250 = vadd.f32 %v3214, %v2337
    %v3251 = vadd.f32 %v3215, %v2338
    %v3252 = vadd.f32 %v3216, %v2339
    %v3253 = vadd.f32 %v3217, %v2340
    %v3254 = vadd.f32 %v3218, %v2341
    %v3255 = vadd.f32 %v3219, %v2342
    %v3256 = vadd.f32 %v3220, %v2343
    %v3257 = vadd.f32 %v3221, %v2344
    %v3258 = vadd.f32 %v3222, %v2345
    %v3259 = vadd.f32 %v3223, %v2346
    %v3260 = vadd.f32 %v3224, %v2347
    %v3261 = vadd.f32 %v3225, %v2348
    %v3262 = vadd.f32 %v3226, %v2349
    %v3263 = vadd.f32 %v3227, %v2350
    %v3264 = vadd.f32 %v3228, %v2351
    %v3265 = vadd.f32 %v3229, %v2352
    %v3266 = vadd.f32 %v3230, %v2353
    %v3267 = vadd.f32 %v3231, %v2354
    %v3268 = vadd.f32 %v3232, %v2355
    %v3269 = vadd.f32 %v3233, %v2356
    %v3270 = vadd.f32 %v3234, %v2357
    %v3271 = vadd.f32 %v3235, %v2358
    %v3272 = vadd.f32 %v3236, %v2359
    %v3273 = vadd.f32 %v3237, %v2360
    %v3274 = vadd.f32 %v3238, %v2361
    %v3275 = vadd.f32 %v3239, %v2362
    %v3276 = vadd.f32 %v3240, %v2363
    %v3277 = vadd.f32 %v3241, %v2364
    %v3278 = vadd.f32 %v3242, %v2365
    %v3279 = vmax.f32 %v3243, 0.0
    %v3280 = vmax.f32 %v3244, 0.0
    %v3281 = vmax.f32 %v3245, 0.0
    %v3282 = vmax.f32 %v3246, 0.0
    %v3283 = vmax.f32 %v3247, 0.0
    %v3284 = vmax.f32 %v3248, 0.0
    %v3285 = vmax.f32 %v3249, 0.0
    %v3286 = vmax.f32 %v3250, 0.0
    %v3287 = vmax.f32 %v3251, 0.0
    %v3288 = vmax.f32 %v3252, 0.0
    %v3289 = vmax.f32 %v3253, 0.0
    %v3290 = vmax.f32 %v3254, 0.0
    %v3291 = vmax.f32 %v3255, 0.0
    %v3292 = vmax.f32 %v3256, 0.0
    %v3293 = vmax.f32 %v3257, 0.0
    %v3294 = vmax.f32 %v3258, 0.0
    %v3295 = vmax.f32 %v3259, 0.0
    %v3296 = vmax.f32 %v3260, 0.0
    %v3297 = vmax.f32 %v3261, 0.0
    %v3298 = vmax.f32 %v3262, 0.0
    %v3299 = vmax.f32 %v3263, 0.0
    %v3300 = vmax.f32 %v3264, 0.0
    %v3301 = vmax.f32 %v3265, 0.0
    %v3302 = vmax.f32 %v3266, 0.0
    %v3303 = vmax.f32 %v3267, 0.0
    %v3304 = vmax.f32 %v3268, 0.0
    %v3305 = vmax.f32 %v3269, 0.0
    %v3306 = vmax.f32 %v3270, 0.0
    %v3307 = vmax.f32 %v3271, 0.0
    %v3308 = vmax.f32 %v3272, 0.0
    %v3309 = vmax.f32 %v3273, 0.0
    %v3310 = vmax.f32 %v3274, 0.0
    %v3311 = vmax.f32 %v3275, 0.0
    %v3312 = vmax.f32 %v3276, 0.0
    %v3313 = vmax.f32 %v3277, 0.0
    %v3314 = vmax.f32 %v3278, 0.0
    %v3315 = vpack.c.bf16 %v3281, %v3279
    %v3316 = vpack.c.bf16 %v3282, %v3280
    %v3317 = vpack.c.bf16 %v3285, %v3283
    %v3318 = vpack.c.bf16 %v3286, %v3284
    %v3319 = vpack.c.bf16 %v3289, %v3287
    %v3320 = vpack.c.bf16 %v3290, %v3288
    %v3321 = vpack.c.bf16 %v3293, %v3291
    %v3322 = vpack.c.bf16 %v3294, %v3292
    %v3323 = vpack.c.bf16 %v3297, %v3295
    %v3324 = vpack.c.bf16 %v3298, %v3296
    %v3325 = vpack.c.bf16 %v3301, %v3299
    %v3326 = vpack.c.bf16 %v3302, %v3300
    %v3327 = vpack.c.bf16 %v3305, %v3303
    %v3328 = vpack.c.bf16 %v3306, %v3304
    %v3329 = vpack.c.bf16 %v3309, %v3307
    %v3330 = vpack.c.bf16 %v3310, %v3308
    %v3331 = vpack.c.bf16 %v3313, %v3311
    %v3332 = vpack.c.bf16 %v3314, %v3312
    %v3333 = vld [vmem:[%s2 + $0x1f8] sm:$0xff]
    %v3334 = vld [vmem:[%s2 + $0x200] sm:$0xff]
    %v3335 = vld [vmem:[%s2 + $0x208] sm:$0xff]
    %v3336 = vld [vmem:[%s2 + $0x210] sm:$0xff]
    %v3337 = vld [vmem:[%s2 + $0x218] sm:$0xff]
    %v3338 = vld [vmem:[%s2 + $0x220] sm:$0xff]
    %v3339 = vld [vmem:[%s2 + $0x228] sm:$0xff]
    %v3340 = vld [vmem:[%s2 + $0x230] sm:$0xff]
    %v3341 = vld [vmem:[%s2 + $0x238] sm:$0xff]
    %v3351 = vunpack.c.l.b16 %v3333
    %v3352 = vunpack.c.h.b16 %v3333
    %v3353 = vunpack.c.l.b16 %v3334
    %v3354 = vunpack.c.h.b16 %v3334
    %v3355 = vunpack.c.l.b16 %v3335
    %v3356 = vunpack.c.h.b16 %v3335
    %v3357 = vunpack.c.l.b16 %v3336
    %v3358 = vunpack.c.h.b16 %v3336
    %v3359 = vunpack.c.l.b16 %v3337
    %v3360 = vunpack.c.h.b16 %v3337
    %v3361 = vunpack.c.l.b16 %v3338
    %v3362 = vunpack.c.h.b16 %v3338
    %v3363 = vunpack.c.l.b16 %v3339
    %v3364 = vunpack.c.h.b16 %v3339
    %v3365 = vunpack.c.l.b16 %v3340
    %v3366 = vunpack.c.h.b16 %v3340
    %v3367 = vunpack.c.l.b16 %v3341
    %v3368 = vunpack.c.h.b16 %v3341
    %v3369 = vpack.c.b16 %v3353, %v3351
    %v3370 = vpack.c.b16 %v3354, %v3352
    %v3371 = vpack.c.b16 %v3357, %v3355
    %v3372 = vpack.c.b16 %v3358, %v3356
    %v3373 = vpack.c.b16 %v3361, %v3359
    %v3374 = vpack.c.b16 %v3362, %v3360
    %v3375 = vpack.c.b16 %v3365, %v3363
    %v3376 = vpack.c.b16 %v3366, %v3364
    %v3377 = vpack.c.b16 %v3367, %v3367
    %v3378 = vpack.c.b16 %v3368, %v3368
    %vm3384 = vcmask 130048
    %v3386 = vsel %vm3384, %v3370, 0
    %v3389 = vsel %vm3384, %v3372, 0
    %v3392 = vsel %vm3384, %v3374, 0
    %v3395 = vsel %vm3384, %v3376, 0
    %v3398 = vsel %vm3384, %v3378, 0
    %3400 = vmatprep.subr.bf16.mxu0 %v3330
    %3401 = vmatpush1.bf16.msra.mxu0 %v3329
    %3402 = vmatprep.subr.bf16.mxu0 %v3328
    %3403 = vmatpush1.bf16.msra.mxu0 %v3327
    %3404 = vmatprep.subr.bf16.mxu0 %v3326
    %3405 = vmatpush1.bf16.msra.mxu0 %v3325
    %3406 = vmatprep.subr.bf16.mxu0 %v3324
    %3407 = vmatpush1.bf16.msra.mxu0 %v3323
    %3408 = vmatprep.subr.bf16.mxu0 %v3322
    %3409 = vmatpush1.bf16.msra.mxu0 %v3321
    %3410 = vmatprep.subr.bf16.mxu0 %v3320
    %3411 = vmatpush1.bf16.msra.mxu0 %v3319
    %3412 = vmatprep.subr.bf16.mxu0 %v3318
    %3413 = vmatpush1.bf16.msra.mxu0 %v3317
    %3414 = vmatprep.subr.bf16.mxu0 %v3316
    %3415 = vmatpush1.bf16.msra.mxu0 %v3315
    %3416 = vmatprep.subr.bf16.mxu0 0
    %3417 = vmatpush2.bf16.msra.mxu0 0
    %3418 = vmatprep.subr.bf16.mxu0 0
    %3419 = vmatpush2.bf16.msra.mxu0 0
    %3420 = vmatprep.subr.bf16.mxu0 0
    %3421 = vmatpush2.bf16.msra.mxu0 0
    %3422 = vmatprep.subr.bf16.mxu0 0
    %3423 = vmatpush2.bf16.msra.mxu0 0
    %3424 = vmatprep.subr.bf16.mxu0 0
    %3425 = vmatpush2.bf16.msra.mxu0 0
    %3426 = vmatprep.subr.bf16.mxu0 0
    %3427 = vmatpush2.bf16.msra.mxu0 0
    %3428 = vmatprep.subr.bf16.mxu0 0
    %3429 = vmatpush2.bf16.msra.mxu0 0
    %3430 = vmatprep.subr.bf16.mxu0 %v3332
    %3431 = vmatpush2.bf16.msra.mxu0 %v3331
    %3432 = vmatprep.mubr.bf16.mxu0 %v3386
    %3433 = vmatmul.mubr.bf16.gmra.mxu0 %v3369
    %v3434 = vpop.f32.mrf.mxu0
    %v3435 = vadd.f32 0.0, %v3434
    %v3436 = vpop.f32.mrf.mxu0
    %v3437 = vadd.f32 0.0, %v3436
    %v3438 = vpop.f32.mrf.mxu0
    %v3439 = vadd.f32 0.0, %v3438
    %v3440 = vpop.f32.mrf.mxu0
    %v3441 = vadd.f32 0.0, %v3440
    %3442 = vmatprep.mubr.bf16.mxu0 %v3389
    %3443 = vmatmul.mubr.bf16.gmra.mxu0 %v3371
    %v3444 = vpop.f32.mrf.mxu0
    %v3445 = vadd.f32 0.0, %v3444
    %v3446 = vpop.f32.mrf.mxu0
    %v3447 = vadd.f32 0.0, %v3446
    %v3448 = vpop.f32.mrf.mxu0
    %v3449 = vadd.f32 0.0, %v3448
    %v3450 = vpop.f32.mrf.mxu0
    %v3451 = vadd.f32 0.0, %v3450
    %3452 = vmatprep.mubr.bf16.mxu0 %v3392
    %3453 = vmatmul.mubr.bf16.gmra.mxu0 %v3373
    %v3454 = vpop.f32.mrf.mxu0
    %v3455 = vadd.f32 0.0, %v3454
    %v3456 = vpop.f32.mrf.mxu0
    %v3457 = vadd.f32 0.0, %v3456
    %v3458 = vpop.f32.mrf.mxu0
    %v3459 = vadd.f32 0.0, %v3458
    %v3460 = vpop.f32.mrf.mxu0
    %v3461 = vadd.f32 0.0, %v3460
    %3462 = vmatprep.mubr.bf16.mxu0 %v3395
    %3463 = vmatmul.mubr.bf16.gmra.mxu0 %v3375
    %v3464 = vpop.f32.mrf.mxu0
    %v3465 = vadd.f32 0.0, %v3464
    %v3466 = vpop.f32.mrf.mxu0
    %v3467 = vadd.f32 0.0, %v3466
    %v3468 = vpop.f32.mrf.mxu0
    %v3469 = vadd.f32 0.0, %v3468
    %v3470 = vpop.f32.mrf.mxu0
    %v3471 = vadd.f32 0.0, %v3470
    %3472 = vmatprep.mubr.bf16.mxu0 %v3398
    %3473 = vmatmul.mubr.bf16.gmra.mxu0 %v3377
    %v3474 = vpop.f32.mrf.mxu0
    %v3475 = vadd.f32 0.0, %v3474
    %v3476 = vpop.f32.mrf.mxu0
    %v3477 = vadd.f32 0.0, %v3476
    %v3478 = vpop.f32.mrf.mxu0
    %v3479 = vpop.f32.mrf.mxu0
    %3480 = vdwg.mxu0
    %v3481 = vadd.f32 %v3435, %v3437
    %3482 = vadd.xlane.f32.xlu0 %v3481
    %v3483 = vpop.xlane.xlu0 %3482
    %v3484 = vadd.f32 %v3439, %v3441
    %3485 = vadd.xlane.f32.xlu0 %v3484
    %v3486 = vpop.xlane.xlu0 %3485
    %v3487 = vadd.f32 %v3445, %v3447
    %3488 = vadd.xlane.f32.xlu0 %v3487
    %v3489 = vpop.xlane.xlu0 %3488
    %v3490 = vadd.f32 %v3449, %v3451
    %3491 = vadd.xlane.f32.xlu0 %v3490
    %v3492 = vpop.xlane.xlu0 %3491
    %v3493 = vadd.f32 %v3455, %v3457
    %3494 = vadd.xlane.f32.xlu0 %v3493
    %v3495 = vpop.xlane.xlu0 %3494
    %v3496 = vadd.f32 %v3459, %v3461
    %3497 = vadd.xlane.f32.xlu0 %v3496
    %v3498 = vpop.xlane.xlu0 %3497
    %v3499 = vadd.f32 %v3465, %v3467
    %3500 = vadd.xlane.f32.xlu0 %v3499
    %v3501 = vpop.xlane.xlu0 %3500
    %v3502 = vadd.f32 %v3469, %v3471
    %3503 = vadd.xlane.f32.xlu0 %v3502
    %v3504 = vpop.xlane.xlu0 %3503
    %v3505 = vadd.f32 %v3475, %v3477
    %3506 = vadd.xlane.f32.xlu0 %v3505
    %v3507 = vpop.xlane.xlu0 %3506
    %v3508 = vmul.f32 %v3483, %v189
    %v3509 = vmul.f32 %v3486, %v189
    %v3510 = vmul.f32 %v3489, %v189
    %v3511 = vmul.f32 %v3492, %v189
    %v3512 = vmul.f32 %v3495, %v189
    %v3513 = vmul.f32 %v3498, %v189
    %v3514 = vmul.f32 %v3501, %v189
    %v3515 = vmul.f32 %v3504, %v189
    %v3516 = vmul.f32 %v3507, %v189
    %v3517 = vmul.f32 %v3435, %v3435
    %v3518 = vmul.f32 %v3437, %v3437
    %v3519 = vmul.f32 %v3439, %v3439
    %v3520 = vmul.f32 %v3441, %v3441
    %v3521 = vmul.f32 %v3445, %v3445
    %v3522 = vmul.f32 %v3447, %v3447
    %v3523 = vmul.f32 %v3449, %v3449
    %v3524 = vmul.f32 %v3451, %v3451
    %v3525 = vmul.f32 %v3455, %v3455
    %v3526 = vmul.f32 %v3457, %v3457
    %v3527 = vmul.f32 %v3459, %v3459
    %v3528 = vmul.f32 %v3461, %v3461
    %v3529 = vmul.f32 %v3465, %v3465
    %v3530 = vmul.f32 %v3467, %v3467
    %v3531 = vmul.f32 %v3469, %v3469
    %v3532 = vmul.f32 %v3471, %v3471
    %v3533 = vmul.f32 %v3475, %v3475
    %v3534 = vmul.f32 %v3477, %v3477
    %v3535 = vadd.f32 %v3517, %v3518
    %3536 = vadd.xlane.f32.xlu0 %v3535
    %v3537 = vpop.xlane.xlu0 %3536
    %v3538 = vadd.f32 %v3519, %v3520
    %3539 = vadd.xlane.f32.xlu0 %v3538
    %v3540 = vpop.xlane.xlu0 %3539
    %v3541 = vadd.f32 %v3521, %v3522
    %3542 = vadd.xlane.f32.xlu0 %v3541
    %v3543 = vpop.xlane.xlu0 %3542
    %v3544 = vadd.f32 %v3523, %v3524
    %3545 = vadd.xlane.f32.xlu0 %v3544
    %v3546 = vpop.xlane.xlu0 %3545
    %v3547 = vadd.f32 %v3525, %v3526
    %3548 = vadd.xlane.f32.xlu0 %v3547
    %v3549 = vpop.xlane.xlu0 %3548
    %v3550 = vadd.f32 %v3527, %v3528
    %3551 = vadd.xlane.f32.xlu0 %v3550
    %v3552 = vpop.xlane.xlu0 %3551
    %v3553 = vadd.f32 %v3529, %v3530
    %3554 = vadd.xlane.f32.xlu0 %v3553
    %v3555 = vpop.xlane.xlu0 %3554
    %v3556 = vadd.f32 %v3531, %v3532
    %3557 = vadd.xlane.f32.xlu0 %v3556
    %v3558 = vpop.xlane.xlu0 %3557
    %v3559 = vadd.f32 %v3533, %v3534
    %3560 = vadd.xlane.f32.xlu0 %v3559
    %v3561 = vpop.xlane.xlu0 %3560
    %v3562 = vmul.f32 %v3537, %v189
    %v3563 = vmul.f32 %v3540, %v189
    %v3564 = vmul.f32 %v3543, %v189
    %v3565 = vmul.f32 %v3546, %v189
    %v3566 = vmul.f32 %v3549, %v189
    %v3567 = vmul.f32 %v3552, %v189
    %v3568 = vmul.f32 %v3555, %v189
    %v3569 = vmul.f32 %v3558, %v189
    %v3570 = vmul.f32 %v3561, %v189
    %v3571 = vmul.f32 %v3508, %v3508
    %v3572 = vmul.f32 %v3509, %v3509
    %v3573 = vmul.f32 %v3510, %v3510
    %v3574 = vmul.f32 %v3511, %v3511
    %v3575 = vmul.f32 %v3512, %v3512
    %v3576 = vmul.f32 %v3513, %v3513
    %v3577 = vmul.f32 %v3514, %v3514
    %v3578 = vmul.f32 %v3515, %v3515
    %v3579 = vmul.f32 %v3516, %v3516
    %v3580 = vsub.f32 %v3562, %v3571
    %v3581 = vsub.f32 %v3563, %v3572
    %v3582 = vsub.f32 %v3564, %v3573
    %v3583 = vsub.f32 %v3565, %v3574
    %v3584 = vsub.f32 %v3566, %v3575
    %v3585 = vsub.f32 %v3567, %v3576
    %v3586 = vsub.f32 %v3568, %v3577
    %v3587 = vsub.f32 %v3569, %v3578
    %v3588 = vsub.f32 %v3570, %v3579
    %v3589 = vmax.f32 %v3580, 0.0
    %v3590 = vmax.f32 %v3581, 0.0
    %v3591 = vmax.f32 %v3582, 0.0
    %v3592 = vmax.f32 %v3583, 0.0
    %v3593 = vmax.f32 %v3584, 0.0
    %v3594 = vmax.f32 %v3585, 0.0
    %v3595 = vmax.f32 %v3586, 0.0
    %v3596 = vmax.f32 %v3587, 0.0
    %v3597 = vmax.f32 %v3588, 0.0
    %v3598 = vadd.f32 %v3589, 1e-05
    %v3599 = vadd.f32 %v3590, 1e-05
    %v3600 = vadd.f32 %v3591, 1e-05
    %v3601 = vadd.f32 %v3592, 1e-05
    %v3602 = vadd.f32 %v3593, 1e-05
    %v3603 = vadd.f32 %v3594, 1e-05
    %v3604 = vadd.f32 %v3595, 1e-05
    %v3605 = vadd.f32 %v3596, 1e-05
    %v3606 = vadd.f32 %v3597, 1e-05
    %v3607 = vrsqrt.pop %v3598
    %v3608 = vrsqrt.pop %v3599
    %v3609 = vrsqrt.pop %v3600
    %v3610 = vrsqrt.pop %v3601
    %v3611 = vrsqrt.pop %v3602
    %v3612 = vrsqrt.pop %v3603
    %v3613 = vrsqrt.pop %v3604
    %v3614 = vrsqrt.pop %v3605
    %v3615 = vrsqrt.pop %v3606
    %v3616 = vmul.f32 %v280, %v3607
    %v3617 = vmul.f32 %v281, %v3608
    %v3618 = vmul.f32 %v282, %v3609
    %v3619 = vmul.f32 %v283, %v3610
    %v3620 = vmul.f32 %v284, %v3611
    %v3621 = vmul.f32 %v285, %v3612
    %v3622 = vmul.f32 %v286, %v3613
    %v3623 = vmul.f32 %v287, %v3614
    %v3624 = vmul.f32 %v288, %v3615
    %v3625 = vmul.f32 %v3508, %v3616
    %v3626 = vmul.f32 %v3509, %v3617
    %v3627 = vmul.f32 %v3510, %v3618
    %v3628 = vmul.f32 %v3511, %v3619
    %v3629 = vmul.f32 %v3512, %v3620
    %v3630 = vmul.f32 %v3513, %v3621
    %v3631 = vmul.f32 %v3514, %v3622
    %v3632 = vmul.f32 %v3515, %v3623
    %v3633 = vmul.f32 %v3516, %v3624
    %3643 = vrot.lane.b32.xlu0 %v3625, 9
    %v3644 = vpop.permute.xlu0 %3643
    %3645 = vrot.lane.b32.xlu0 %v3626, 9
    %v3646 = vpop.permute.xlu0 %3645
    %3647 = vrot.lane.b32.xlu0 %v3627, 9
    %v3648 = vpop.permute.xlu0 %3647
    %3649 = vrot.lane.b32.xlu0 %v3628, 9
    %v3650 = vpop.permute.xlu0 %3649
    %3651 = vrot.lane.b32.xlu0 %v3629, 9
    %v3652 = vpop.permute.xlu0 %3651
    %3653 = vrot.lane.b32.xlu0 %v3630, 9
    %v3654 = vpop.permute.xlu0 %3653
    %3655 = vrot.lane.b32.xlu0 %v3631, 9
    %v3656 = vpop.permute.xlu0 %3655
    %3657 = vrot.lane.b32.xlu0 %v3632, 9
    %v3658 = vpop.permute.xlu0 %3657
    %3659 = vrot.lane.b32.xlu0 %v3633, 9
    %v3660 = vpop.permute.xlu0 %3659
    %v3670 = vsub.f32 %v280, %v3644
    %v3671 = vsub.f32 %v281, %v3646
    %v3672 = vsub.f32 %v282, %v3648
    %v3673 = vsub.f32 %v283, %v3650
    %v3674 = vsub.f32 %v284, %v3652
    %v3675 = vsub.f32 %v285, %v3654
    %v3676 = vsub.f32 %v286, %v3656
    %v3677 = vsub.f32 %v287, %v3658
    %v3678 = vsub.f32 %v288, %v3660
    %3680 = vset.pattern.permute.xlu0 5
    %3681 = vperm.xlu0 %3680, %v3616
    %v3682 = vpop.permute.xlu0 %3681
    %3685 = vset.pattern.permute.xlu0 5
    %3686 = vperm.xlu0 %3685, %v3617
    %v3687 = vpop.permute.xlu0 %3686
    %3690 = vset.pattern.permute.xlu0 5
    %3691 = vperm.xlu0 %3690, %v3618
    %v3692 = vpop.permute.xlu0 %3691
    %3695 = vset.pattern.permute.xlu0 5
    %3696 = vperm.xlu0 %3695, %v3619
    %v3697 = vpop.permute.xlu0 %3696
    %3700 = vset.pattern.permute.xlu0 5
    %3701 = vperm.xlu0 %3700, %v3620
    %v3702 = vpop.permute.xlu0 %3701
    %3705 = vset.pattern.permute.xlu0 5
    %3706 = vperm.xlu0 %3705, %v3621
    %v3707 = vpop.permute.xlu0 %3706
    %3710 = vset.pattern.permute.xlu0 5
    %3711 = vperm.xlu0 %3710, %v3622
    %v3712 = vpop.permute.xlu0 %3711
    %3715 = vset.pattern.permute.xlu0 5
    %3716 = vperm.xlu0 %3715, %v3623
    %v3717 = vpop.permute.xlu0 %3716
    %3720 = vset.pattern.permute.xlu0 5
    %3721 = vperm.xlu0 %3720, %v3624
    %v3722 = vpop.permute.xlu0 %3721
    %v3724 = vmul.f32 %v3435, %v3682
    %v3725 = vmul.f32 %v3437, %v3682
    %v3726 = vmul.f32 %v3439, %v3687
    %v3727 = vmul.f32 %v3441, %v3687
    %v3728 = vmul.f32 %v3445, %v3692
    %v3729 = vmul.f32 %v3447, %v3692
    %v3730 = vmul.f32 %v3449, %v3697
    %v3731 = vmul.f32 %v3451, %v3697
    %v3732 = vmul.f32 %v3455, %v3702
    %v3733 = vmul.f32 %v3457, %v3702
    %v3734 = vmul.f32 %v3459, %v3707
    %v3735 = vmul.f32 %v3461, %v3707
    %v3736 = vmul.f32 %v3465, %v3712
    %v3737 = vmul.f32 %v3467, %v3712
    %v3738 = vmul.f32 %v3469, %v3717
    %v3739 = vmul.f32 %v3471, %v3717
    %v3740 = vmul.f32 %v3475, %v3722
    %v3741 = vmul.f32 %v3477, %v3722
    %3743 = vset.pattern.permute.xlu0 14
    %3744 = vperm.xlu0 %3743, %v3670
    %v3745 = vpop.permute.xlu0 %3744
    %3748 = vset.pattern.permute.xlu0 14
    %3749 = vperm.xlu0 %3748, %v3671
    %v3750 = vpop.permute.xlu0 %3749
    %3753 = vset.pattern.permute.xlu0 14
    %3754 = vperm.xlu0 %3753, %v3672
    %v3755 = vpop.permute.xlu0 %3754
    %3758 = vset.pattern.permute.xlu0 14
    %3759 = vperm.xlu0 %3758, %v3673
    %v3760 = vpop.permute.xlu0 %3759
    %3763 = vset.pattern.permute.xlu0 14
    %3764 = vperm.xlu0 %3763, %v3674
    %v3765 = vpop.permute.xlu0 %3764
    %3768 = vset.pattern.permute.xlu0 14
    %3769 = vperm.xlu0 %3768, %v3675
    %v3770 = vpop.permute.xlu0 %3769
    %3773 = vset.pattern.permute.xlu0 14
    %3774 = vperm.xlu0 %3773, %v3676
    %v3775 = vpop.permute.xlu0 %3774
    %3778 = vset.pattern.permute.xlu0 14
    %3779 = vperm.xlu0 %3778, %v3677
    %v3780 = vpop.permute.xlu0 %3779
    %3783 = vset.pattern.permute.xlu0 14
    %3784 = vperm.xlu0 %3783, %v3678
    %v3785 = vpop.permute.xlu0 %3784
    %v3787 = vadd.f32 %v3724, %v3745
    %v3788 = vadd.f32 %v3725, %v3745
    %v3789 = vadd.f32 %v3726, %v3750
    %v3790 = vadd.f32 %v3727, %v3750
    %v3791 = vadd.f32 %v3728, %v3755
    %v3792 = vadd.f32 %v3729, %v3755
    %v3793 = vadd.f32 %v3730, %v3760
    %v3794 = vadd.f32 %v3731, %v3760
    %v3795 = vadd.f32 %v3732, %v3765
    %v3796 = vadd.f32 %v3733, %v3765
    %v3797 = vadd.f32 %v3734, %v3770
    %v3798 = vadd.f32 %v3735, %v3770
    %v3799 = vadd.f32 %v3736, %v3775
    %v3800 = vadd.f32 %v3737, %v3775
    %v3801 = vadd.f32 %v3738, %v3780
    %v3802 = vadd.f32 %v3739, %v3780
    %v3803 = vadd.f32 %v3740, %v3785
    %v3804 = vadd.f32 %v3741, %v3785
    %v3805 = vmax.f32 %v3787, 0.0
    %v3806 = vmax.f32 %v3788, 0.0
    %v3807 = vmax.f32 %v3789, 0.0
    %v3808 = vmax.f32 %v3790, 0.0
    %v3809 = vmax.f32 %v3791, 0.0
    %v3810 = vmax.f32 %v3792, 0.0
    %v3811 = vmax.f32 %v3793, 0.0
    %v3812 = vmax.f32 %v3794, 0.0
    %v3813 = vmax.f32 %v3795, 0.0
    %v3814 = vmax.f32 %v3796, 0.0
    %v3815 = vmax.f32 %v3797, 0.0
    %v3816 = vmax.f32 %v3798, 0.0
    %v3817 = vmax.f32 %v3799, 0.0
    %v3818 = vmax.f32 %v3800, 0.0
    %v3819 = vmax.f32 %v3801, 0.0
    %v3820 = vmax.f32 %v3802, 0.0
    %v3821 = vmax.f32 %v3803, 0.0
    %v3822 = vmax.f32 %v3804, 0.0
    %v3823 = vpack.c.bf16 %v3807, %v3805
    %v3824 = vpack.c.bf16 %v3808, %v3806
    %v3825 = vpack.c.bf16 %v3811, %v3809
    %v3826 = vpack.c.bf16 %v3812, %v3810
    %v3827 = vpack.c.bf16 %v3815, %v3813
    %v3828 = vpack.c.bf16 %v3816, %v3814
    %v3829 = vpack.c.bf16 %v3819, %v3817
    %v3830 = vpack.c.bf16 %v3820, %v3818
    %v3831 = vpack.c.bf16 %v3821, %v3821
    %v3832 = vpack.c.bf16 %v3822, %v3822
    %v3833 = vld [vmem:[%s2 + $0x240] sm:$0xf]
    %v3834 = vld [vmem:[%s2 + $0x248] sm:$0xf]
    %v3835 = vld [vmem:[%s2 + $0x250] sm:$0xf]
    %v3836 = vld [vmem:[%s2 + $0x258] sm:$0xf]
    %v3837 = vld [vmem:[%s2 + $0x260] sm:$0xf]
    %v3838 = vld [vmem:[%s2 + $0x268] sm:$0xf]
    %v3839 = vld [vmem:[%s2 + $0x270] sm:$0xf]
    %v3840 = vld [vmem:[%s2 + $0x278] sm:$0xf]
    %v3841 = vld [vmem:[%s2 + $0x280] sm:$0xf]
    %v3851 = vunpack.c.l.b16 %v3833
    %v3852 = vunpack.c.l.b16 %v3834
    %v3853 = vunpack.c.l.b16 %v3835
    %v3854 = vunpack.c.l.b16 %v3836
    %v3855 = vunpack.c.l.b16 %v3837
    %v3856 = vunpack.c.l.b16 %v3838
    %v3857 = vunpack.c.l.b16 %v3839
    %v3858 = vunpack.c.l.b16 %v3840
    %v3859 = vunpack.c.l.b16 %v3841
    %v3860 = vpack.c.b16 %v3852, %v3851
    %v3861 = vpack.c.b16 %v3854, %v3853
    %v3862 = vpack.c.b16 %v3856, %v3855
    %v3863 = vpack.c.b16 %v3858, %v3857
    %v3864 = vpack.c.b16 %v3859, %v3859
    %v3866 = vsel %vm556, %v3860, 0
    %v3869 = vsel %vm556, %v3861, 0
    %v3872 = vsel %vm556, %v3862, 0
    %v3875 = vsel %vm556, %v3863, 0
    %v3878 = vsel %vm556, %v3864, 0
    %v3881 = vsel %vm74, %v3831, 0
    %v3884 = vsel %vm74, %v3832, 0
    %3886 = vmatprep.subr.bf16.mxu0 0
    %3887 = vmatpush1.bf16.msra.mxu0 0
    %3888 = vmatprep.subr.bf16.mxu0 0
    %3889 = vmatpush1.bf16.msra.mxu0 0
    %3890 = vmatprep.subr.bf16.mxu0 0
    %3891 = vmatpush1.bf16.msra.mxu0 0
    %3892 = vmatprep.subr.bf16.mxu0 %v3884
    %3893 = vmatpush1.bf16.msra.mxu0 %v3881
    %3894 = vmatprep.subr.bf16.mxu0 %v3830
    %3895 = vmatpush1.bf16.msra.mxu0 %v3829
    %3896 = vmatprep.subr.bf16.mxu0 %v3828
    %3897 = vmatpush1.bf16.msra.mxu0 %v3827
    %3898 = vmatprep.subr.bf16.mxu0 %v3826
    %3899 = vmatpush1.bf16.msra.mxu0 %v3825
    %3900 = vmatprep.subr.bf16.mxu0 %v3824
    %3901 = vmatpush1.bf16.msra.mxu0 %v3823
    %3902 = vmatprep.subr.bf16.mxu0 0
    %3903 = vmatpush2.bf16.msra.mxu0 0
    %3904 = vmatprep.subr.bf16.mxu0 0
    %3905 = vmatpush2.bf16.msra.mxu0 0
    %3906 = vmatprep.subr.bf16.mxu0 0
    %3907 = vmatpush2.bf16.msra.mxu0 0
    %3908 = vmatprep.subr.bf16.mxu0 0
    %3909 = vmatpush2.bf16.msra.mxu0 0
    %3910 = vmatprep.subr.bf16.mxu0 0
    %3911 = vmatpush2.bf16.msra.mxu0 0
    %3912 = vmatprep.subr.bf16.mxu0 0
    %3913 = vmatpush2.bf16.msra.mxu0 0
    %3914 = vmatprep.subr.bf16.mxu0 0
    %3915 = vmatpush2.bf16.msra.mxu0 0
    %3916 = vmatprep.subr.bf16.mxu0 0
    %3917 = vmatpush2.bf16.msra.mxu0 0
    %3918 = vmatprep.mubr.bf16.mxu0 0
    %3919 = vmatmul.mubr.bf16.gmra.mxu0 %v3866
    %v3920 = vpop.f32.mrf.mxu0
    %v3921 = vadd.f32 0.0, %v3920
    %v3922 = vpop.f32.mrf.mxu0
    %v3923 = vadd.f32 0.0, %v3922
    %v3924 = vpop.f32.mrf.mxu0
    %v3925 = vadd.f32 0.0, %v3924
    %v3926 = vpop.f32.mrf.mxu0
    %v3927 = vadd.f32 0.0, %v3926
    %3928 = vmatprep.mubr.bf16.mxu0 0
    %3929 = vmatmul.mubr.bf16.gmra.mxu0 %v3869
    %v3930 = vpop.f32.mrf.mxu0
    %v3931 = vadd.f32 0.0, %v3930
    %v3932 = vpop.f32.mrf.mxu0
    %v3933 = vadd.f32 0.0, %v3932
    %v3934 = vpop.f32.mrf.mxu0
    %v3935 = vadd.f32 0.0, %v3934
    %v3936 = vpop.f32.mrf.mxu0
    %v3937 = vadd.f32 0.0, %v3936
    %3938 = vmatprep.mubr.bf16.mxu0 0
    %3939 = vmatmul.mubr.bf16.gmra.mxu0 %v3872
    %v3940 = vpop.f32.mrf.mxu0
    %v3941 = vadd.f32 0.0, %v3940
    %v3942 = vpop.f32.mrf.mxu0
    %v3943 = vadd.f32 0.0, %v3942
    %v3944 = vpop.f32.mrf.mxu0
    %v3945 = vadd.f32 0.0, %v3944
    %v3946 = vpop.f32.mrf.mxu0
    %v3947 = vadd.f32 0.0, %v3946
    %3948 = vmatprep.mubr.bf16.mxu0 0
    %3949 = vmatmul.mubr.bf16.gmra.mxu0 %v3875
    %v3950 = vpop.f32.mrf.mxu0
    %v3951 = vadd.f32 0.0, %v3950
    %v3952 = vpop.f32.mrf.mxu0
    %v3953 = vadd.f32 0.0, %v3952
    %v3954 = vpop.f32.mrf.mxu0
    %v3955 = vadd.f32 0.0, %v3954
    %v3956 = vpop.f32.mrf.mxu0
    %v3957 = vadd.f32 0.0, %v3956
    %3958 = vmatprep.mubr.bf16.mxu0 0
    %3959 = vmatmul.mubr.bf16.gmra.mxu0 %v3878
    %v3960 = vpop.f32.mrf.mxu0
    %v3961 = vadd.f32 0.0, %v3960
    %v3962 = vpop.f32.mrf.mxu0
    %v3963 = vadd.f32 0.0, %v3962
    %v3964 = vpop.f32.mrf.mxu0
    %v3965 = vpop.f32.mrf.mxu0
    %3966 = vdwg.mxu0
    %v3967 = vadd.f32 %v3921, %v3923
    %3968 = vadd.xlane.f32.xlu0 %v3967
    %v3969 = vpop.xlane.xlu0 %3968
    %v3970 = vadd.f32 %v3925, %v3927
    %3971 = vadd.xlane.f32.xlu0 %v3970
    %v3972 = vpop.xlane.xlu0 %3971
    %v3973 = vadd.f32 %v3931, %v3933
    %3974 = vadd.xlane.f32.xlu0 %v3973
    %v3975 = vpop.xlane.xlu0 %3974
    %v3976 = vadd.f32 %v3935, %v3937
    %3977 = vadd.xlane.f32.xlu0 %v3976
    %v3978 = vpop.xlane.xlu0 %3977
    %v3979 = vadd.f32 %v3941, %v3943
    %3980 = vadd.xlane.f32.xlu0 %v3979
    %v3981 = vpop.xlane.xlu0 %3980
    %v3982 = vadd.f32 %v3945, %v3947
    %3983 = vadd.xlane.f32.xlu0 %v3982
    %v3984 = vpop.xlane.xlu0 %3983
    %v3985 = vadd.f32 %v3951, %v3953
    %3986 = vadd.xlane.f32.xlu0 %v3985
    %v3987 = vpop.xlane.xlu0 %3986
    %v3988 = vadd.f32 %v3955, %v3957
    %3989 = vadd.xlane.f32.xlu0 %v3988
    %v3990 = vpop.xlane.xlu0 %3989
    %v3991 = vadd.f32 %v3961, %v3963
    %3992 = vadd.xlane.f32.xlu0 %v3991
    %v3993 = vpop.xlane.xlu0 %3992
    %v3994 = vmul.f32 %v3969, %v189
    %v3995 = vmul.f32 %v3972, %v189
    %v3996 = vmul.f32 %v3975, %v189
    %v3997 = vmul.f32 %v3978, %v189
    %v3998 = vmul.f32 %v3981, %v189
    %v3999 = vmul.f32 %v3984, %v189
    %v4000 = vmul.f32 %v3987, %v189
    %v4001 = vmul.f32 %v3990, %v189
    %v4002 = vmul.f32 %v3993, %v189
    %v4003 = vmul.f32 %v3921, %v3921
    %v4004 = vmul.f32 %v3923, %v3923
    %v4005 = vmul.f32 %v3925, %v3925
    %v4006 = vmul.f32 %v3927, %v3927
    %v4007 = vmul.f32 %v3931, %v3931
    %v4008 = vmul.f32 %v3933, %v3933
    %v4009 = vmul.f32 %v3935, %v3935
    %v4010 = vmul.f32 %v3937, %v3937
    %v4011 = vmul.f32 %v3941, %v3941
    %v4012 = vmul.f32 %v3943, %v3943
    %v4013 = vmul.f32 %v3945, %v3945
    %v4014 = vmul.f32 %v3947, %v3947
    %v4015 = vmul.f32 %v3951, %v3951
    %v4016 = vmul.f32 %v3953, %v3953
    %v4017 = vmul.f32 %v3955, %v3955
    %v4018 = vmul.f32 %v3957, %v3957
    %v4019 = vmul.f32 %v3961, %v3961
    %v4020 = vmul.f32 %v3963, %v3963
    %v4021 = vadd.f32 %v4003, %v4004
    %4022 = vadd.xlane.f32.xlu0 %v4021
    %v4023 = vpop.xlane.xlu0 %4022
    %v4024 = vadd.f32 %v4005, %v4006
    %4025 = vadd.xlane.f32.xlu0 %v4024
    %v4026 = vpop.xlane.xlu0 %4025
    %v4027 = vadd.f32 %v4007, %v4008
    %4028 = vadd.xlane.f32.xlu0 %v4027
    %v4029 = vpop.xlane.xlu0 %4028
    %v4030 = vadd.f32 %v4009, %v4010
    %4031 = vadd.xlane.f32.xlu0 %v4030
    %v4032 = vpop.xlane.xlu0 %4031
    %v4033 = vadd.f32 %v4011, %v4012
    %4034 = vadd.xlane.f32.xlu0 %v4033
    %v4035 = vpop.xlane.xlu0 %4034
    %v4036 = vadd.f32 %v4013, %v4014
    %4037 = vadd.xlane.f32.xlu0 %v4036
    %v4038 = vpop.xlane.xlu0 %4037
    %v4039 = vadd.f32 %v4015, %v4016
    %4040 = vadd.xlane.f32.xlu0 %v4039
    %v4041 = vpop.xlane.xlu0 %4040
    %v4042 = vadd.f32 %v4017, %v4018
    %4043 = vadd.xlane.f32.xlu0 %v4042
    %v4044 = vpop.xlane.xlu0 %4043
    %v4045 = vadd.f32 %v4019, %v4020
    %4046 = vadd.xlane.f32.xlu0 %v4045
    %v4047 = vpop.xlane.xlu0 %4046
    %v4048 = vmul.f32 %v4023, %v189
    %v4049 = vmul.f32 %v4026, %v189
    %v4050 = vmul.f32 %v4029, %v189
    %v4051 = vmul.f32 %v4032, %v189
    %v4052 = vmul.f32 %v4035, %v189
    %v4053 = vmul.f32 %v4038, %v189
    %v4054 = vmul.f32 %v4041, %v189
    %v4055 = vmul.f32 %v4044, %v189
    %v4056 = vmul.f32 %v4047, %v189
    %v4057 = vmul.f32 %v3994, %v3994
    %v4058 = vmul.f32 %v3995, %v3995
    %v4059 = vmul.f32 %v3996, %v3996
    %v4060 = vmul.f32 %v3997, %v3997
    %v4061 = vmul.f32 %v3998, %v3998
    %v4062 = vmul.f32 %v3999, %v3999
    %v4063 = vmul.f32 %v4000, %v4000
    %v4064 = vmul.f32 %v4001, %v4001
    %v4065 = vmul.f32 %v4002, %v4002
    %v4066 = vsub.f32 %v4048, %v4057
    %v4067 = vsub.f32 %v4049, %v4058
    %v4068 = vsub.f32 %v4050, %v4059
    %v4069 = vsub.f32 %v4051, %v4060
    %v4070 = vsub.f32 %v4052, %v4061
    %v4071 = vsub.f32 %v4053, %v4062
    %v4072 = vsub.f32 %v4054, %v4063
    %v4073 = vsub.f32 %v4055, %v4064
    %v4074 = vsub.f32 %v4056, %v4065
    %v4075 = vmax.f32 %v4066, 0.0
    %v4076 = vmax.f32 %v4067, 0.0
    %v4077 = vmax.f32 %v4068, 0.0
    %v4078 = vmax.f32 %v4069, 0.0
    %v4079 = vmax.f32 %v4070, 0.0
    %v4080 = vmax.f32 %v4071, 0.0
    %v4081 = vmax.f32 %v4072, 0.0
    %v4082 = vmax.f32 %v4073, 0.0
    %v4083 = vmax.f32 %v4074, 0.0
    %v4084 = vadd.f32 %v4075, 1e-05
    %v4085 = vadd.f32 %v4076, 1e-05
    %v4086 = vadd.f32 %v4077, 1e-05
    %v4087 = vadd.f32 %v4078, 1e-05
    %v4088 = vadd.f32 %v4079, 1e-05
    %v4089 = vadd.f32 %v4080, 1e-05
    %v4090 = vadd.f32 %v4081, 1e-05
    %v4091 = vadd.f32 %v4082, 1e-05
    %v4092 = vadd.f32 %v4083, 1e-05
    %v4093 = vrsqrt.pop %v4084
    %v4094 = vrsqrt.pop %v4085
    %v4095 = vrsqrt.pop %v4086
    %v4096 = vrsqrt.pop %v4087
    %v4097 = vrsqrt.pop %v4088
    %v4098 = vrsqrt.pop %v4089
    %v4099 = vrsqrt.pop %v4090
    %v4100 = vrsqrt.pop %v4091
    %v4101 = vrsqrt.pop %v4092
    %v4102 = vmul.f32 %v280, %v4093
    %v4103 = vmul.f32 %v281, %v4094
    %v4104 = vmul.f32 %v282, %v4095
    %v4105 = vmul.f32 %v283, %v4096
    %v4106 = vmul.f32 %v284, %v4097
    %v4107 = vmul.f32 %v285, %v4098
    %v4108 = vmul.f32 %v286, %v4099
    %v4109 = vmul.f32 %v287, %v4100
    %v4110 = vmul.f32 %v288, %v4101
    %v4111 = vmul.f32 %v3994, %v4102
    %v4112 = vmul.f32 %v3995, %v4103
    %v4113 = vmul.f32 %v3996, %v4104
    %v4114 = vmul.f32 %v3997, %v4105
    %v4115 = vmul.f32 %v3998, %v4106
    %v4116 = vmul.f32 %v3999, %v4107
    %v4117 = vmul.f32 %v4000, %v4108
    %v4118 = vmul.f32 %v4001, %v4109
    %v4119 = vmul.f32 %v4002, %v4110
    %4129 = vrot.lane.b32.xlu0 %v4111, 9
    %v4130 = vpop.permute.xlu0 %4129
    %4131 = vrot.lane.b32.xlu0 %v4112, 9
    %v4132 = vpop.permute.xlu0 %4131
    %4133 = vrot.lane.b32.xlu0 %v4113, 9
    %v4134 = vpop.permute.xlu0 %4133
    %4135 = vrot.lane.b32.xlu0 %v4114, 9
    %v4136 = vpop.permute.xlu0 %4135
    %4137 = vrot.lane.b32.xlu0 %v4115, 9
    %v4138 = vpop.permute.xlu0 %4137
    %4139 = vrot.lane.b32.xlu0 %v4116, 9
    %v4140 = vpop.permute.xlu0 %4139
    %4141 = vrot.lane.b32.xlu0 %v4117, 9
    %v4142 = vpop.permute.xlu0 %4141
    %4143 = vrot.lane.b32.xlu0 %v4118, 9
    %v4144 = vpop.permute.xlu0 %4143
    %4145 = vrot.lane.b32.xlu0 %v4119, 9
    %v4146 = vpop.permute.xlu0 %4145
    %v4156 = vsub.f32 %v280, %v4130
    %v4157 = vsub.f32 %v281, %v4132
    %v4158 = vsub.f32 %v282, %v4134
    %v4159 = vsub.f32 %v283, %v4136
    %v4160 = vsub.f32 %v284, %v4138
    %v4161 = vsub.f32 %v285, %v4140
    %v4162 = vsub.f32 %v286, %v4142
    %v4163 = vsub.f32 %v287, %v4144
    %v4164 = vsub.f32 %v288, %v4146
    %4166 = vset.pattern.permute.xlu0 6
    %4167 = vperm.xlu0 %4166, %v4102
    %v4168 = vpop.permute.xlu0 %4167
    %4171 = vset.pattern.permute.xlu0 6
    %4172 = vperm.xlu0 %4171, %v4103
    %v4173 = vpop.permute.xlu0 %4172
    %4176 = vset.pattern.permute.xlu0 6
    %4177 = vperm.xlu0 %4176, %v4104
    %v4178 = vpop.permute.xlu0 %4177
    %4181 = vset.pattern.permute.xlu0 6
    %4182 = vperm.xlu0 %4181, %v4105
    %v4183 = vpop.permute.xlu0 %4182
    %4186 = vset.pattern.permute.xlu0 6
    %4187 = vperm.xlu0 %4186, %v4106
    %v4188 = vpop.permute.xlu0 %4187
    %4191 = vset.pattern.permute.xlu0 6
    %4192 = vperm.xlu0 %4191, %v4107
    %v4193 = vpop.permute.xlu0 %4192
    %4196 = vset.pattern.permute.xlu0 6
    %4197 = vperm.xlu0 %4196, %v4108
    %v4198 = vpop.permute.xlu0 %4197
    %4201 = vset.pattern.permute.xlu0 6
    %4202 = vperm.xlu0 %4201, %v4109
    %v4203 = vpop.permute.xlu0 %4202
    %4206 = vset.pattern.permute.xlu0 6
    %4207 = vperm.xlu0 %4206, %v4110
    %v4208 = vpop.permute.xlu0 %4207
    %v4210 = vmul.f32 %v3921, %v4168
    %v4211 = vmul.f32 %v3923, %v4168
    %v4212 = vmul.f32 %v3925, %v4173
    %v4213 = vmul.f32 %v3927, %v4173
    %v4214 = vmul.f32 %v3931, %v4178
    %v4215 = vmul.f32 %v3933, %v4178
    %v4216 = vmul.f32 %v3935, %v4183
    %v4217 = vmul.f32 %v3937, %v4183
    %v4218 = vmul.f32 %v3941, %v4188
    %v4219 = vmul.f32 %v3943, %v4188
    %v4220 = vmul.f32 %v3945, %v4193
    %v4221 = vmul.f32 %v3947, %v4193
    %v4222 = vmul.f32 %v3951, %v4198
    %v4223 = vmul.f32 %v3953, %v4198
    %v4224 = vmul.f32 %v3955, %v4203
    %v4225 = vmul.f32 %v3957, %v4203
    %v4226 = vmul.f32 %v3961, %v4208
    %v4227 = vmul.f32 %v3963, %v4208
    %4229 = vset.pattern.permute.xlu0 15
    %4230 = vperm.xlu0 %4229, %v4156
    %v4231 = vpop.permute.xlu0 %4230
    %4234 = vset.pattern.permute.xlu0 15
    %4235 = vperm.xlu0 %4234, %v4157
    %v4236 = vpop.permute.xlu0 %4235
    %4239 = vset.pattern.permute.xlu0 15
    %4240 = vperm.xlu0 %4239, %v4158
    %v4241 = vpop.permute.xlu0 %4240
    %4244 = vset.pattern.permute.xlu0 15
    %4245 = vperm.xlu0 %4244, %v4159
    %v4246 = vpop.permute.xlu0 %4245
    %4249 = vset.pattern.permute.xlu0 15
    %4250 = vperm.xlu0 %4249, %v4160
    %v4251 = vpop.permute.xlu0 %4250
    %4254 = vset.pattern.permute.xlu0 15
    %4255 = vperm.xlu0 %4254, %v4161
    %v4256 = vpop.permute.xlu0 %4255
    %4259 = vset.pattern.permute.xlu0 15
    %4260 = vperm.xlu0 %4259, %v4162
    %v4261 = vpop.permute.xlu0 %4260
    %4264 = vset.pattern.permute.xlu0 15
    %4265 = vperm.xlu0 %4264, %v4163
    %v4266 = vpop.permute.xlu0 %4265
    %4269 = vset.pattern.permute.xlu0 15
    %4270 = vperm.xlu0 %4269, %v4164
    %v4271 = vpop.permute.xlu0 %4270
    %v4273 = vadd.f32 %v4210, %v4231
    %v4274 = vadd.f32 %v4211, %v4231
    %v4275 = vadd.f32 %v4212, %v4236
    %v4276 = vadd.f32 %v4213, %v4236
    %v4277 = vadd.f32 %v4214, %v4241
    %v4278 = vadd.f32 %v4215, %v4241
    %v4279 = vadd.f32 %v4216, %v4246
    %v4280 = vadd.f32 %v4217, %v4246
    %v4281 = vadd.f32 %v4218, %v4251
    %v4282 = vadd.f32 %v4219, %v4251
    %v4283 = vadd.f32 %v4220, %v4256
    %v4284 = vadd.f32 %v4221, %v4256
    %v4285 = vadd.f32 %v4222, %v4261
    %v4286 = vadd.f32 %v4223, %v4261
    %v4287 = vadd.f32 %v4224, %v4266
    %v4288 = vadd.f32 %v4225, %v4266
    %v4289 = vadd.f32 %v4226, %v4271
    %v4290 = vadd.f32 %v4227, %v4271
    %v4291 = vmax.f32 %v4273, 0.0
    %v4292 = vmax.f32 %v4274, 0.0
    %v4293 = vmax.f32 %v4275, 0.0
    %v4294 = vmax.f32 %v4276, 0.0
    %v4295 = vmax.f32 %v4277, 0.0
    %v4296 = vmax.f32 %v4278, 0.0
    %v4297 = vmax.f32 %v4279, 0.0
    %v4298 = vmax.f32 %v4280, 0.0
    %v4299 = vmax.f32 %v4281, 0.0
    %v4300 = vmax.f32 %v4282, 0.0
    %v4301 = vmax.f32 %v4283, 0.0
    %v4302 = vmax.f32 %v4284, 0.0
    %v4303 = vmax.f32 %v4285, 0.0
    %v4304 = vmax.f32 %v4286, 0.0
    %v4305 = vmax.f32 %v4287, 0.0
    %v4306 = vmax.f32 %v4288, 0.0
    %v4307 = vmax.f32 %v4289, 0.0
    %v4308 = vmax.f32 %v4290, 0.0
    %v4309 = vpack.c.bf16 %v4293, %v4291
    %v4310 = vpack.c.bf16 %v4294, %v4292
    %v4311 = vpack.c.bf16 %v4297, %v4295
    %v4312 = vpack.c.bf16 %v4298, %v4296
    %v4313 = vpack.c.bf16 %v4301, %v4299
    %v4314 = vpack.c.bf16 %v4302, %v4300
    %v4315 = vpack.c.bf16 %v4305, %v4303
    %v4316 = vpack.c.bf16 %v4306, %v4304
    %v4317 = vpack.c.bf16 %v4307, %v4307
    %v4318 = vpack.c.bf16 %v4308, %v4308
    %v4319 = vld [vmem:[%s2 + $0x288] sm:$0xf]
    %v4320 = vld [vmem:[%s2 + $0x290] sm:$0xf]
    %v4321 = vld [vmem:[%s2 + $0x298] sm:$0xf]
    %v4322 = vld [vmem:[%s2 + $0x2a0] sm:$0xf]
    %v4323 = vld [vmem:[%s2 + $0x2a8] sm:$0xf]
    %v4324 = vld [vmem:[%s2 + $0x2b0] sm:$0xf]
    %v4325 = vld [vmem:[%s2 + $0x2b8] sm:$0xf]
    %v4326 = vld [vmem:[%s2 + $0x2c0] sm:$0xf]
    %v4327 = vld [vmem:[%s2 + $0x2c8] sm:$0xf]
    %v4328 = vld [vmem:[%s2 + $0x2d0] sm:$0xf]
    %v4329 = vld [vmem:[%s2 + $0x2d8] sm:$0xf]
    %v4330 = vld [vmem:[%s2 + $0x2e0] sm:$0xf]
    %v4331 = vld [vmem:[%s2 + $0x2e8] sm:$0xf]
    %v4332 = vld [vmem:[%s2 + $0x2f0] sm:$0xf]
    %v4333 = vld [vmem:[%s2 + $0x2f8] sm:$0xf]
    %v4334 = vld [vmem:[%s2 + $0x300] sm:$0xf]
    %v4335 = vld [vmem:[%s2 + $0x308] sm:$0xf]
    %v4336 = vld [vmem:[%s2 + $0x310] sm:$0xf]
    %v4355 = vunpack.c.l.b16 %v4319
    %v4356 = vunpack.c.l.b16 %v4320
    %v4357 = vunpack.c.l.b16 %v4321
    %v4358 = vunpack.c.l.b16 %v4322
    %v4359 = vunpack.c.l.b16 %v4323
    %v4360 = vunpack.c.l.b16 %v4324
    %v4361 = vunpack.c.l.b16 %v4325
    %v4362 = vunpack.c.l.b16 %v4326
    %v4363 = vunpack.c.l.b16 %v4327
    %v4364 = vunpack.c.l.b16 %v4328
    %v4365 = vunpack.c.l.b16 %v4329
    %v4366 = vunpack.c.l.b16 %v4330
    %v4367 = vunpack.c.l.b16 %v4331
    %v4368 = vunpack.c.l.b16 %v4332
    %v4369 = vunpack.c.l.b16 %v4333
    %v4370 = vunpack.c.l.b16 %v4334
    %v4371 = vunpack.c.l.b16 %v4335
    %v4372 = vunpack.c.l.b16 %v4336
    %v4373 = vpack.c.b16 %v4356, %v4355
    %v4374 = vpack.c.b16 %v4358, %v4357
    %v4375 = vpack.c.b16 %v4360, %v4359
    %v4376 = vpack.c.b16 %v4362, %v4361
    %v4377 = vpack.c.b16 %v4364, %v4363
    %v4378 = vpack.c.b16 %v4366, %v4365
    %v4379 = vpack.c.b16 %v4368, %v4367
    %v4380 = vpack.c.b16 %v4370, %v4369
    %v4381 = vpack.c.b16 %v4372, %v4371
    %v4383 = vsel %vm556, %v4373, 0
    %v4386 = vsel %vm556, %v4374, 0
    %v4389 = vsel %vm556, %v4375, 0
    %v4392 = vsel %vm556, %v4376, 0
    %v4395 = vsel %vm556, %v4377, 0
    %v4398 = vsel %vm556, %v4378, 0
    %v4401 = vsel %vm556, %v4379, 0
    %v4404 = vsel %vm556, %v4380, 0
    %v4407 = vsel %vm556, %v4381, 0
    %v4410 = vsel %vm74, %v4317, 0
    %v4413 = vsel %vm74, %v4318, 0
    %4415 = vmatprep.subr.bf16.mxu0 0
    %4416 = vmatpush1.bf16.msra.mxu0 0
    %4417 = vmatprep.subr.bf16.mxu0 0
    %4418 = vmatpush1.bf16.msra.mxu0 0
    %4419 = vmatprep.subr.bf16.mxu0 0
    %4420 = vmatpush1.bf16.msra.mxu0 0
    %4421 = vmatprep.subr.bf16.mxu0 %v4413
    %4422 = vmatpush1.bf16.msra.mxu0 %v4410
    %4423 = vmatprep.subr.bf16.mxu0 %v4316
    %4424 = vmatpush1.bf16.msra.mxu0 %v4315
    %4425 = vmatprep.subr.bf16.mxu0 %v4314
    %4426 = vmatpush1.bf16.msra.mxu0 %v4313
    %4427 = vmatprep.subr.bf16.mxu0 %v4312
    %4428 = vmatpush1.bf16.msra.mxu0 %v4311
    %4429 = vmatprep.subr.bf16.mxu0 %v4310
    %4430 = vmatpush1.bf16.msra.mxu0 %v4309
    %4431 = vmatprep.subr.bf16.mxu0 0
    %4432 = vmatpush2.bf16.msra.mxu0 0
    %4433 = vmatprep.subr.bf16.mxu0 0
    %4434 = vmatpush2.bf16.msra.mxu0 0
    %4435 = vmatprep.subr.bf16.mxu0 0
    %4436 = vmatpush2.bf16.msra.mxu0 0
    %4437 = vmatprep.subr.bf16.mxu0 0
    %4438 = vmatpush2.bf16.msra.mxu0 0
    %4439 = vmatprep.subr.bf16.mxu0 0
    %4440 = vmatpush2.bf16.msra.mxu0 0
    %4441 = vmatprep.subr.bf16.mxu0 0
    %4442 = vmatpush2.bf16.msra.mxu0 0
    %4443 = vmatprep.subr.bf16.mxu0 0
    %4444 = vmatpush2.bf16.msra.mxu0 0
    %4445 = vmatprep.subr.bf16.mxu0 0
    %4446 = vmatpush2.bf16.msra.mxu0 0
    %4447 = vmatprep.mubr.bf16.mxu0 0
    %4448 = vmatmul.mubr.bf16.gmra.mxu0 %v4383
    %v4449 = vpop.f32.mrf.mxu0
    %v4450 = vadd.f32 0.0, %v4449
    %v4451 = vpop.f32.mrf.mxu0
    %v4452 = vadd.f32 0.0, %v4451
    %v4453 = vpop.f32.mrf.mxu0
    %v4454 = vadd.f32 0.0, %v4453
    %v4455 = vpop.f32.mrf.mxu0
    %v4456 = vadd.f32 0.0, %v4455
    %4457 = vmatprep.mubr.bf16.mxu0 0
    %4458 = vmatmul.mubr.bf16.gmra.mxu0 %v4386
    %v4459 = vpop.f32.mrf.mxu0
    %v4460 = vadd.f32 0.0, %v4459
    %v4461 = vpop.f32.mrf.mxu0
    %v4462 = vadd.f32 0.0, %v4461
    %v4463 = vpop.f32.mrf.mxu0
    %v4464 = vadd.f32 0.0, %v4463
    %v4465 = vpop.f32.mrf.mxu0
    %v4466 = vadd.f32 0.0, %v4465
    %4467 = vmatprep.mubr.bf16.mxu0 0
    %4468 = vmatmul.mubr.bf16.gmra.mxu0 %v4389
    %v4469 = vpop.f32.mrf.mxu0
    %v4470 = vadd.f32 0.0, %v4469
    %v4471 = vpop.f32.mrf.mxu0
    %v4472 = vadd.f32 0.0, %v4471
    %v4473 = vpop.f32.mrf.mxu0
    %v4474 = vadd.f32 0.0, %v4473
    %v4475 = vpop.f32.mrf.mxu0
    %v4476 = vadd.f32 0.0, %v4475
    %4477 = vmatprep.mubr.bf16.mxu0 0
    %4478 = vmatmul.mubr.bf16.gmra.mxu0 %v4392
    %v4479 = vpop.f32.mrf.mxu0
    %v4480 = vadd.f32 0.0, %v4479
    %v4481 = vpop.f32.mrf.mxu0
    %v4482 = vadd.f32 0.0, %v4481
    %v4483 = vpop.f32.mrf.mxu0
    %v4484 = vadd.f32 0.0, %v4483
    %v4485 = vpop.f32.mrf.mxu0
    %v4486 = vadd.f32 0.0, %v4485
    %4487 = vmatprep.mubr.bf16.mxu0 0
    %4488 = vmatmul.mubr.bf16.gmra.mxu0 %v4395
    %v4489 = vpop.f32.mrf.mxu0
    %v4490 = vadd.f32 0.0, %v4489
    %v4491 = vpop.f32.mrf.mxu0
    %v4492 = vadd.f32 0.0, %v4491
    %v4493 = vpop.f32.mrf.mxu0
    %v4494 = vadd.f32 0.0, %v4493
    %v4495 = vpop.f32.mrf.mxu0
    %v4496 = vadd.f32 0.0, %v4495
    %4497 = vmatprep.mubr.bf16.mxu0 0
    %4498 = vmatmul.mubr.bf16.gmra.mxu0 %v4398
    %v4499 = vpop.f32.mrf.mxu0
    %v4500 = vadd.f32 0.0, %v4499
    %v4501 = vpop.f32.mrf.mxu0
    %v4502 = vadd.f32 0.0, %v4501
    %v4503 = vpop.f32.mrf.mxu0
    %v4504 = vadd.f32 0.0, %v4503
    %v4505 = vpop.f32.mrf.mxu0
    %v4506 = vadd.f32 0.0, %v4505
    %4507 = vmatprep.mubr.bf16.mxu0 0
    %4508 = vmatmul.mubr.bf16.gmra.mxu0 %v4401
    %v4509 = vpop.f32.mrf.mxu0
    %v4510 = vadd.f32 0.0, %v4509
    %v4511 = vpop.f32.mrf.mxu0
    %v4512 = vadd.f32 0.0, %v4511
    %v4513 = vpop.f32.mrf.mxu0
    %v4514 = vadd.f32 0.0, %v4513
    %v4515 = vpop.f32.mrf.mxu0
    %v4516 = vadd.f32 0.0, %v4515
    %4517 = vmatprep.mubr.bf16.mxu0 0
    %4518 = vmatmul.mubr.bf16.gmra.mxu0 %v4404
    %v4519 = vpop.f32.mrf.mxu0
    %v4520 = vadd.f32 0.0, %v4519
    %v4521 = vpop.f32.mrf.mxu0
    %v4522 = vadd.f32 0.0, %v4521
    %v4523 = vpop.f32.mrf.mxu0
    %v4524 = vadd.f32 0.0, %v4523
    %v4525 = vpop.f32.mrf.mxu0
    %v4526 = vadd.f32 0.0, %v4525
    %4527 = vmatprep.mubr.bf16.mxu0 0
    %4528 = vmatmul.mubr.bf16.gmra.mxu0 %v4407
    %v4529 = vpop.f32.mrf.mxu0
    %v4530 = vadd.f32 0.0, %v4529
    %v4531 = vpop.f32.mrf.mxu0
    %v4532 = vadd.f32 0.0, %v4531
    %v4533 = vpop.f32.mrf.mxu0
    %v4534 = vadd.f32 0.0, %v4533
    %v4535 = vpop.f32.mrf.mxu0
    %v4536 = vadd.f32 0.0, %v4535
    %4537 = vdwg.mxu0
    %v4538 = vadd.f32 %v4450, %v4452
    %4539 = vadd.xlane.f32.xlu0 %v4538
    %v4540 = vpop.xlane.xlu0 %4539
    %v4541 = vadd.f32 %v4454, %v4456
    %4542 = vadd.xlane.f32.xlu0 %v4541
    %v4543 = vpop.xlane.xlu0 %4542
    %v4544 = vadd.f32 %v4460, %v4462
    %4545 = vadd.xlane.f32.xlu0 %v4544
    %v4546 = vpop.xlane.xlu0 %4545
    %v4547 = vadd.f32 %v4464, %v4466
    %4548 = vadd.xlane.f32.xlu0 %v4547
    %v4549 = vpop.xlane.xlu0 %4548
    %v4550 = vadd.f32 %v4470, %v4472
    %4551 = vadd.xlane.f32.xlu0 %v4550
    %v4552 = vpop.xlane.xlu0 %4551
    %v4553 = vadd.f32 %v4474, %v4476
    %4554 = vadd.xlane.f32.xlu0 %v4553
    %v4555 = vpop.xlane.xlu0 %4554
    %v4556 = vadd.f32 %v4480, %v4482
    %4557 = vadd.xlane.f32.xlu0 %v4556
    %v4558 = vpop.xlane.xlu0 %4557
    %v4559 = vadd.f32 %v4484, %v4486
    %4560 = vadd.xlane.f32.xlu0 %v4559
    %v4561 = vpop.xlane.xlu0 %4560
    %v4562 = vadd.f32 %v4490, %v4492
    %4563 = vadd.xlane.f32.xlu0 %v4562
    %v4564 = vpop.xlane.xlu0 %4563
    %v4565 = vadd.f32 %v4494, %v4496
    %4566 = vadd.xlane.f32.xlu0 %v4565
    %v4567 = vpop.xlane.xlu0 %4566
    %v4568 = vadd.f32 %v4500, %v4502
    %4569 = vadd.xlane.f32.xlu0 %v4568
    %v4570 = vpop.xlane.xlu0 %4569
    %v4571 = vadd.f32 %v4504, %v4506
    %4572 = vadd.xlane.f32.xlu0 %v4571
    %v4573 = vpop.xlane.xlu0 %4572
    %v4574 = vadd.f32 %v4510, %v4512
    %4575 = vadd.xlane.f32.xlu0 %v4574
    %v4576 = vpop.xlane.xlu0 %4575
    %v4577 = vadd.f32 %v4514, %v4516
    %4578 = vadd.xlane.f32.xlu0 %v4577
    %v4579 = vpop.xlane.xlu0 %4578
    %v4580 = vadd.f32 %v4520, %v4522
    %4581 = vadd.xlane.f32.xlu0 %v4580
    %v4582 = vpop.xlane.xlu0 %4581
    %v4583 = vadd.f32 %v4524, %v4526
    %4584 = vadd.xlane.f32.xlu0 %v4583
    %v4585 = vpop.xlane.xlu0 %4584
    %v4586 = vadd.f32 %v4530, %v4532
    %4587 = vadd.xlane.f32.xlu0 %v4586
    %v4588 = vpop.xlane.xlu0 %4587
    %v4589 = vadd.f32 %v4534, %v4536
    %4590 = vadd.xlane.f32.xlu0 %v4589
    %v4591 = vpop.xlane.xlu0 %4590
    %v4592 = vmul.f32 %v4540, %v189
    %v4593 = vmul.f32 %v4543, %v189
    %v4594 = vmul.f32 %v4546, %v189
    %v4595 = vmul.f32 %v4549, %v189
    %v4596 = vmul.f32 %v4552, %v189
    %v4597 = vmul.f32 %v4555, %v189
    %v4598 = vmul.f32 %v4558, %v189
    %v4599 = vmul.f32 %v4561, %v189
    %v4600 = vmul.f32 %v4564, %v189
    %v4601 = vmul.f32 %v4567, %v189
    %v4602 = vmul.f32 %v4570, %v189
    %v4603 = vmul.f32 %v4573, %v189
    %v4604 = vmul.f32 %v4576, %v189
    %v4605 = vmul.f32 %v4579, %v189
    %v4606 = vmul.f32 %v4582, %v189
    %v4607 = vmul.f32 %v4585, %v189
    %v4608 = vmul.f32 %v4588, %v189
    %v4609 = vmul.f32 %v4591, %v189
    %v4610 = vmul.f32 %v4450, %v4450
    %v4611 = vmul.f32 %v4452, %v4452
    %v4612 = vmul.f32 %v4454, %v4454
    %v4613 = vmul.f32 %v4456, %v4456
    %v4614 = vmul.f32 %v4460, %v4460
    %v4615 = vmul.f32 %v4462, %v4462
    %v4616 = vmul.f32 %v4464, %v4464
    %v4617 = vmul.f32 %v4466, %v4466
    %v4618 = vmul.f32 %v4470, %v4470
    %v4619 = vmul.f32 %v4472, %v4472
    %v4620 = vmul.f32 %v4474, %v4474
    %v4621 = vmul.f32 %v4476, %v4476
    %v4622 = vmul.f32 %v4480, %v4480
    %v4623 = vmul.f32 %v4482, %v4482
    %v4624 = vmul.f32 %v4484, %v4484
    %v4625 = vmul.f32 %v4486, %v4486
    %v4626 = vmul.f32 %v4490, %v4490
    %v4627 = vmul.f32 %v4492, %v4492
    %v4628 = vmul.f32 %v4494, %v4494
    %v4629 = vmul.f32 %v4496, %v4496
    %v4630 = vmul.f32 %v4500, %v4500
    %v4631 = vmul.f32 %v4502, %v4502
    %v4632 = vmul.f32 %v4504, %v4504
    %v4633 = vmul.f32 %v4506, %v4506
    %v4634 = vmul.f32 %v4510, %v4510
    %v4635 = vmul.f32 %v4512, %v4512
    %v4636 = vmul.f32 %v4514, %v4514
    %v4637 = vmul.f32 %v4516, %v4516
    %v4638 = vmul.f32 %v4520, %v4520
    %v4639 = vmul.f32 %v4522, %v4522
    %v4640 = vmul.f32 %v4524, %v4524
    %v4641 = vmul.f32 %v4526, %v4526
    %v4642 = vmul.f32 %v4530, %v4530
    %v4643 = vmul.f32 %v4532, %v4532
    %v4644 = vmul.f32 %v4534, %v4534
    %v4645 = vmul.f32 %v4536, %v4536
    %v4646 = vadd.f32 %v4610, %v4611
    %4647 = vadd.xlane.f32.xlu0 %v4646
    %v4648 = vpop.xlane.xlu0 %4647
    %v4649 = vadd.f32 %v4612, %v4613
    %4650 = vadd.xlane.f32.xlu0 %v4649
    %v4651 = vpop.xlane.xlu0 %4650
    %v4652 = vadd.f32 %v4614, %v4615
    %4653 = vadd.xlane.f32.xlu0 %v4652
    %v4654 = vpop.xlane.xlu0 %4653
    %v4655 = vadd.f32 %v4616, %v4617
    %4656 = vadd.xlane.f32.xlu0 %v4655
    %v4657 = vpop.xlane.xlu0 %4656
    %v4658 = vadd.f32 %v4618, %v4619
    %4659 = vadd.xlane.f32.xlu0 %v4658
    %v4660 = vpop.xlane.xlu0 %4659
    %v4661 = vadd.f32 %v4620, %v4621
    %4662 = vadd.xlane.f32.xlu0 %v4661
    %v4663 = vpop.xlane.xlu0 %4662
    %v4664 = vadd.f32 %v4622, %v4623
    %4665 = vadd.xlane.f32.xlu0 %v4664
    %v4666 = vpop.xlane.xlu0 %4665
    %v4667 = vadd.f32 %v4624, %v4625
    %4668 = vadd.xlane.f32.xlu0 %v4667
    %v4669 = vpop.xlane.xlu0 %4668
    %v4670 = vadd.f32 %v4626, %v4627
    %4671 = vadd.xlane.f32.xlu0 %v4670
    %v4672 = vpop.xlane.xlu0 %4671
    %v4673 = vadd.f32 %v4628, %v4629
    %4674 = vadd.xlane.f32.xlu0 %v4673
    %v4675 = vpop.xlane.xlu0 %4674
    %v4676 = vadd.f32 %v4630, %v4631
    %4677 = vadd.xlane.f32.xlu0 %v4676
    %v4678 = vpop.xlane.xlu0 %4677
    %v4679 = vadd.f32 %v4632, %v4633
    %4680 = vadd.xlane.f32.xlu0 %v4679
    %v4681 = vpop.xlane.xlu0 %4680
    %v4682 = vadd.f32 %v4634, %v4635
    %4683 = vadd.xlane.f32.xlu0 %v4682
    %v4684 = vpop.xlane.xlu0 %4683
    %v4685 = vadd.f32 %v4636, %v4637
    %4686 = vadd.xlane.f32.xlu0 %v4685
    %v4687 = vpop.xlane.xlu0 %4686
    %v4688 = vadd.f32 %v4638, %v4639
    %4689 = vadd.xlane.f32.xlu0 %v4688
    %v4690 = vpop.xlane.xlu0 %4689
    %v4691 = vadd.f32 %v4640, %v4641
    %4692 = vadd.xlane.f32.xlu0 %v4691
    %v4693 = vpop.xlane.xlu0 %4692
    %v4694 = vadd.f32 %v4642, %v4643
    %4695 = vadd.xlane.f32.xlu0 %v4694
    %v4696 = vpop.xlane.xlu0 %4695
    %v4697 = vadd.f32 %v4644, %v4645
    %4698 = vadd.xlane.f32.xlu0 %v4697
    %v4699 = vpop.xlane.xlu0 %4698
    %v4700 = vmul.f32 %v4648, %v189
    %v4701 = vmul.f32 %v4651, %v189
    %v4702 = vmul.f32 %v4654, %v189
    %v4703 = vmul.f32 %v4657, %v189
    %v4704 = vmul.f32 %v4660, %v189
    %v4705 = vmul.f32 %v4663, %v189
    %v4706 = vmul.f32 %v4666, %v189
    %v4707 = vmul.f32 %v4669, %v189
    %v4708 = vmul.f32 %v4672, %v189
    %v4709 = vmul.f32 %v4675, %v189
    %v4710 = vmul.f32 %v4678, %v189
    %v4711 = vmul.f32 %v4681, %v189
    %v4712 = vmul.f32 %v4684, %v189
    %v4713 = vmul.f32 %v4687, %v189
    %v4714 = vmul.f32 %v4690, %v189
    %v4715 = vmul.f32 %v4693, %v189
    %v4716 = vmul.f32 %v4696, %v189
    %v4717 = vmul.f32 %v4699, %v189
    %v4718 = vmul.f32 %v4592, %v4592
    %v4719 = vmul.f32 %v4593, %v4593
    %v4720 = vmul.f32 %v4594, %v4594
    %v4721 = vmul.f32 %v4595, %v4595
    %v4722 = vmul.f32 %v4596, %v4596
    %v4723 = vmul.f32 %v4597, %v4597
    %v4724 = vmul.f32 %v4598, %v4598
    %v4725 = vmul.f32 %v4599, %v4599
    %v4726 = vmul.f32 %v4600, %v4600
    %v4727 = vmul.f32 %v4601, %v4601
    %v4728 = vmul.f32 %v4602, %v4602
    %v4729 = vmul.f32 %v4603, %v4603
    %v4730 = vmul.f32 %v4604, %v4604
    %v4731 = vmul.f32 %v4605, %v4605
    %v4732 = vmul.f32 %v4606, %v4606
    %v4733 = vmul.f32 %v4607, %v4607
    %v4734 = vmul.f32 %v4608, %v4608
    %v4735 = vmul.f32 %v4609, %v4609
    %v4736 = vsub.f32 %v4700, %v4718
    %v4737 = vsub.f32 %v4701, %v4719
    %v4738 = vsub.f32 %v4702, %v4720
    %v4739 = vsub.f32 %v4703, %v4721
    %v4740 = vsub.f32 %v4704, %v4722
    %v4741 = vsub.f32 %v4705, %v4723
    %v4742 = vsub.f32 %v4706, %v4724
    %v4743 = vsub.f32 %v4707, %v4725
    %v4744 = vsub.f32 %v4708, %v4726
    %v4745 = vsub.f32 %v4709, %v4727
    %v4746 = vsub.f32 %v4710, %v4728
    %v4747 = vsub.f32 %v4711, %v4729
    %v4748 = vsub.f32 %v4712, %v4730
    %v4749 = vsub.f32 %v4713, %v4731
    %v4750 = vsub.f32 %v4714, %v4732
    %v4751 = vsub.f32 %v4715, %v4733
    %v4752 = vsub.f32 %v4716, %v4734
    %v4753 = vsub.f32 %v4717, %v4735
    %v4754 = vmax.f32 %v4736, 0.0
    %v4755 = vmax.f32 %v4737, 0.0
    %v4756 = vmax.f32 %v4738, 0.0
    %v4757 = vmax.f32 %v4739, 0.0
    %v4758 = vmax.f32 %v4740, 0.0
    %v4759 = vmax.f32 %v4741, 0.0
    %v4760 = vmax.f32 %v4742, 0.0
    %v4761 = vmax.f32 %v4743, 0.0
    %v4762 = vmax.f32 %v4744, 0.0
    %v4763 = vmax.f32 %v4745, 0.0
    %v4764 = vmax.f32 %v4746, 0.0
    %v4765 = vmax.f32 %v4747, 0.0
    %v4766 = vmax.f32 %v4748, 0.0
    %v4767 = vmax.f32 %v4749, 0.0
    %v4768 = vmax.f32 %v4750, 0.0
    %v4769 = vmax.f32 %v4751, 0.0
    %v4770 = vmax.f32 %v4752, 0.0
    %v4771 = vmax.f32 %v4753, 0.0
    %v4772 = vadd.f32 %v4754, 1e-05
    %v4773 = vadd.f32 %v4755, 1e-05
    %v4774 = vadd.f32 %v4756, 1e-05
    %v4775 = vadd.f32 %v4757, 1e-05
    %v4776 = vadd.f32 %v4758, 1e-05
    %v4777 = vadd.f32 %v4759, 1e-05
    %v4778 = vadd.f32 %v4760, 1e-05
    %v4779 = vadd.f32 %v4761, 1e-05
    %v4780 = vadd.f32 %v4762, 1e-05
    %v4781 = vadd.f32 %v4763, 1e-05
    %v4782 = vadd.f32 %v4764, 1e-05
    %v4783 = vadd.f32 %v4765, 1e-05
    %v4784 = vadd.f32 %v4766, 1e-05
    %v4785 = vadd.f32 %v4767, 1e-05
    %v4786 = vadd.f32 %v4768, 1e-05
    %v4787 = vadd.f32 %v4769, 1e-05
    %v4788 = vadd.f32 %v4770, 1e-05
    %v4789 = vadd.f32 %v4771, 1e-05
    %v4790 = vrsqrt.pop %v4772
    %v4791 = vrsqrt.pop %v4773
    %v4792 = vrsqrt.pop %v4774
    %v4793 = vrsqrt.pop %v4775
    %v4794 = vrsqrt.pop %v4776
    %v4795 = vrsqrt.pop %v4777
    %v4796 = vrsqrt.pop %v4778
    %v4797 = vrsqrt.pop %v4779
    %v4798 = vrsqrt.pop %v4780
    %v4799 = vrsqrt.pop %v4781
    %v4800 = vrsqrt.pop %v4782
    %v4801 = vrsqrt.pop %v4783
    %v4802 = vrsqrt.pop %v4784
    %v4803 = vrsqrt.pop %v4785
    %v4804 = vrsqrt.pop %v4786
    %v4805 = vrsqrt.pop %v4787
    %v4806 = vrsqrt.pop %v4788
    %v4807 = vrsqrt.pop %v4789
    %v4808 = vmul.f32 %v1934, %v4790
    %v4809 = vmul.f32 %v1935, %v4791
    %v4810 = vmul.f32 %v1936, %v4792
    %v4811 = vmul.f32 %v1937, %v4793
    %v4812 = vmul.f32 %v1938, %v4794
    %v4813 = vmul.f32 %v1939, %v4795
    %v4814 = vmul.f32 %v1940, %v4796
    %v4815 = vmul.f32 %v1941, %v4797
    %v4816 = vmul.f32 %v1942, %v4798
    %v4817 = vmul.f32 %v1943, %v4799
    %v4818 = vmul.f32 %v1944, %v4800
    %v4819 = vmul.f32 %v1945, %v4801
    %v4820 = vmul.f32 %v1946, %v4802
    %v4821 = vmul.f32 %v1947, %v4803
    %v4822 = vmul.f32 %v1948, %v4804
    %v4823 = vmul.f32 %v1949, %v4805
    %v4824 = vmul.f32 %v1950, %v4806
    %v4825 = vmul.f32 %v1951, %v4807
    %v4826 = vmul.f32 %v4592, %v4808
    %v4827 = vmul.f32 %v4593, %v4809
    %v4828 = vmul.f32 %v4594, %v4810
    %v4829 = vmul.f32 %v4595, %v4811
    %v4830 = vmul.f32 %v4596, %v4812
    %v4831 = vmul.f32 %v4597, %v4813
    %v4832 = vmul.f32 %v4598, %v4814
    %v4833 = vmul.f32 %v4599, %v4815
    %v4834 = vmul.f32 %v4600, %v4816
    %v4835 = vmul.f32 %v4601, %v4817
    %v4836 = vmul.f32 %v4602, %v4818
    %v4837 = vmul.f32 %v4603, %v4819
    %v4838 = vmul.f32 %v4604, %v4820
    %v4839 = vmul.f32 %v4605, %v4821
    %v4840 = vmul.f32 %v4606, %v4822
    %v4841 = vmul.f32 %v4607, %v4823
    %v4842 = vmul.f32 %v4608, %v4824
    %v4843 = vmul.f32 %v4609, %v4825
    %4862 = vrot.lane.b32.xlu0 %v4826, 9
    %v4863 = vpop.permute.xlu0 %4862
    %4864 = vrot.lane.b32.xlu0 %v4827, 9
    %v4865 = vpop.permute.xlu0 %4864
    %4866 = vrot.lane.b32.xlu0 %v4828, 9
    %v4867 = vpop.permute.xlu0 %4866
    %4868 = vrot.lane.b32.xlu0 %v4829, 9
    %v4869 = vpop.permute.xlu0 %4868
    %4870 = vrot.lane.b32.xlu0 %v4830, 9
    %v4871 = vpop.permute.xlu0 %4870
    %4872 = vrot.lane.b32.xlu0 %v4831, 9
    %v4873 = vpop.permute.xlu0 %4872
    %4874 = vrot.lane.b32.xlu0 %v4832, 9
    %v4875 = vpop.permute.xlu0 %4874
    %4876 = vrot.lane.b32.xlu0 %v4833, 9
    %v4877 = vpop.permute.xlu0 %4876
    %4878 = vrot.lane.b32.xlu0 %v4834, 9
    %v4879 = vpop.permute.xlu0 %4878
    %4880 = vrot.lane.b32.xlu0 %v4835, 9
    %v4881 = vpop.permute.xlu0 %4880
    %4882 = vrot.lane.b32.xlu0 %v4836, 9
    %v4883 = vpop.permute.xlu0 %4882
    %4884 = vrot.lane.b32.xlu0 %v4837, 9
    %v4885 = vpop.permute.xlu0 %4884
    %4886 = vrot.lane.b32.xlu0 %v4838, 9
    %v4887 = vpop.permute.xlu0 %4886
    %4888 = vrot.lane.b32.xlu0 %v4839, 9
    %v4889 = vpop.permute.xlu0 %4888
    %4890 = vrot.lane.b32.xlu0 %v4840, 9
    %v4891 = vpop.permute.xlu0 %4890
    %4892 = vrot.lane.b32.xlu0 %v4841, 9
    %v4893 = vpop.permute.xlu0 %4892
    %4894 = vrot.lane.b32.xlu0 %v4842, 9
    %v4895 = vpop.permute.xlu0 %4894
    %4896 = vrot.lane.b32.xlu0 %v4843, 9
    %v4897 = vpop.permute.xlu0 %4896
    %v4916 = vsub.f32 %v1934, %v4863
    %v4917 = vsub.f32 %v1935, %v4865
    %v4918 = vsub.f32 %v1936, %v4867
    %v4919 = vsub.f32 %v1937, %v4869
    %v4920 = vsub.f32 %v1938, %v4871
    %v4921 = vsub.f32 %v1939, %v4873
    %v4922 = vsub.f32 %v1940, %v4875
    %v4923 = vsub.f32 %v1941, %v4877
    %v4924 = vsub.f32 %v1942, %v4879
    %v4925 = vsub.f32 %v1943, %v4881
    %v4926 = vsub.f32 %v1944, %v4883
    %v4927 = vsub.f32 %v1945, %v4885
    %v4928 = vsub.f32 %v1946, %v4887
    %v4929 = vsub.f32 %v1947, %v4889
    %v4930 = vsub.f32 %v1948, %v4891
    %v4931 = vsub.f32 %v1949, %v4893
    %v4932 = vsub.f32 %v1950, %v4895
    %v4933 = vsub.f32 %v1951, %v4897
    %4935 = vset.pattern.permute.xlu0 7
    %4936 = vperm.xlu0 %4935, %v4808
    %v4937 = vpop.permute.xlu0 %4936
    %4940 = vset.pattern.permute.xlu0 7
    %4941 = vperm.xlu0 %4940, %v4809
    %v4942 = vpop.permute.xlu0 %4941
    %4945 = vset.pattern.permute.xlu0 7
    %4946 = vperm.xlu0 %4945, %v4810
    %v4947 = vpop.permute.xlu0 %4946
    %4950 = vset.pattern.permute.xlu0 7
    %4951 = vperm.xlu0 %4950, %v4811
    %v4952 = vpop.permute.xlu0 %4951
    %4955 = vset.pattern.permute.xlu0 7
    %4956 = vperm.xlu0 %4955, %v4812
    %v4957 = vpop.permute.xlu0 %4956
    %4960 = vset.pattern.permute.xlu0 7
    %4961 = vperm.xlu0 %4960, %v4813
    %v4962 = vpop.permute.xlu0 %4961
    %4965 = vset.pattern.permute.xlu0 7
    %4966 = vperm.xlu0 %4965, %v4814
    %v4967 = vpop.permute.xlu0 %4966
    %4970 = vset.pattern.permute.xlu0 7
    %4971 = vperm.xlu0 %4970, %v4815
    %v4972 = vpop.permute.xlu0 %4971
    %4975 = vset.pattern.permute.xlu0 7
    %4976 = vperm.xlu0 %4975, %v4816
    %v4977 = vpop.permute.xlu0 %4976
    %4980 = vset.pattern.permute.xlu0 7
    %4981 = vperm.xlu0 %4980, %v4817
    %v4982 = vpop.permute.xlu0 %4981
    %4985 = vset.pattern.permute.xlu0 7
    %4986 = vperm.xlu0 %4985, %v4818
    %v4987 = vpop.permute.xlu0 %4986
    %4990 = vset.pattern.permute.xlu0 7
    %4991 = vperm.xlu0 %4990, %v4819
    %v4992 = vpop.permute.xlu0 %4991
    %4995 = vset.pattern.permute.xlu0 7
    %4996 = vperm.xlu0 %4995, %v4820
    %v4997 = vpop.permute.xlu0 %4996
    %5000 = vset.pattern.permute.xlu0 7
    %5001 = vperm.xlu0 %5000, %v4821
    %v5002 = vpop.permute.xlu0 %5001
    %5005 = vset.pattern.permute.xlu0 7
    %5006 = vperm.xlu0 %5005, %v4822
    %v5007 = vpop.permute.xlu0 %5006
    %5010 = vset.pattern.permute.xlu0 7
    %5011 = vperm.xlu0 %5010, %v4823
    %v5012 = vpop.permute.xlu0 %5011
    %5015 = vset.pattern.permute.xlu0 7
    %5016 = vperm.xlu0 %5015, %v4824
    %v5017 = vpop.permute.xlu0 %5016
    %5020 = vset.pattern.permute.xlu0 7
    %5021 = vperm.xlu0 %5020, %v4825
    %v5022 = vpop.permute.xlu0 %5021
    %v5024 = vmul.f32 %v4450, %v4937
    %v5025 = vmul.f32 %v4452, %v4937
    %v5026 = vmul.f32 %v4454, %v4942
    %v5027 = vmul.f32 %v4456, %v4942
    %v5028 = vmul.f32 %v4460, %v4947
    %v5029 = vmul.f32 %v4462, %v4947
    %v5030 = vmul.f32 %v4464, %v4952
    %v5031 = vmul.f32 %v4466, %v4952
    %v5032 = vmul.f32 %v4470, %v4957
    %v5033 = vmul.f32 %v4472, %v4957
    %v5034 = vmul.f32 %v4474, %v4962
    %v5035 = vmul.f32 %v4476, %v4962
    %v5036 = vmul.f32 %v4480, %v4967
    %v5037 = vmul.f32 %v4482, %v4967
    %v5038 = vmul.f32 %v4484, %v4972
    %v5039 = vmul.f32 %v4486, %v4972
    %v5040 = vmul.f32 %v4490, %v4977
    %v5041 = vmul.f32 %v4492, %v4977
    %v5042 = vmul.f32 %v4494, %v4982
    %v5043 = vmul.f32 %v4496, %v4982
    %v5044 = vmul.f32 %v4500, %v4987
    %v5045 = vmul.f32 %v4502, %v4987
    %v5046 = vmul.f32 %v4504, %v4992
    %v5047 = vmul.f32 %v4506, %v4992
    %v5048 = vmul.f32 %v4510, %v4997
    %v5049 = vmul.f32 %v4512, %v4997
    %v5050 = vmul.f32 %v4514, %v5002
    %v5051 = vmul.f32 %v4516, %v5002
    %v5052 = vmul.f32 %v4520, %v5007
    %v5053 = vmul.f32 %v4522, %v5007
    %v5054 = vmul.f32 %v4524, %v5012
    %v5055 = vmul.f32 %v4526, %v5012
    %v5056 = vmul.f32 %v4530, %v5017
    %v5057 = vmul.f32 %v4532, %v5017
    %v5058 = vmul.f32 %v4534, %v5022
    %v5059 = vmul.f32 %v4536, %v5022
    %5061 = vset.pattern.permute.xlu0 16
    %5062 = vperm.xlu0 %5061, %v4916
    %v5063 = vpop.permute.xlu0 %5062
    %5066 = vset.pattern.permute.xlu0 16
    %5067 = vperm.xlu0 %5066, %v4917
    %v5068 = vpop.permute.xlu0 %5067
    %5071 = vset.pattern.permute.xlu0 16
    %5072 = vperm.xlu0 %5071, %v4918
    %v5073 = vpop.permute.xlu0 %5072
    %5076 = vset.pattern.permute.xlu0 16
    %5077 = vperm.xlu0 %5076, %v4919
    %v5078 = vpop.permute.xlu0 %5077
    %5081 = vset.pattern.permute.xlu0 16
    %5082 = vperm.xlu0 %5081, %v4920
    %v5083 = vpop.permute.xlu0 %5082
    %5086 = vset.pattern.permute.xlu0 16
    %5087 = vperm.xlu0 %5086, %v4921
    %v5088 = vpop.permute.xlu0 %5087
    %5091 = vset.pattern.permute.xlu0 16
    %5092 = vperm.xlu0 %5091, %v4922
    %v5093 = vpop.permute.xlu0 %5092
    %5096 = vset.pattern.permute.xlu0 16
    %5097 = vperm.xlu0 %5096, %v4923
    %v5098 = vpop.permute.xlu0 %5097
    %5101 = vset.pattern.permute.xlu0 16
    %5102 = vperm.xlu0 %5101, %v4924
    %v5103 = vpop.permute.xlu0 %5102
    %5106 = vset.pattern.permute.xlu0 16
    %5107 = vperm.xlu0 %5106, %v4925
    %v5108 = vpop.permute.xlu0 %5107
    %5111 = vset.pattern.permute.xlu0 16
    %5112 = vperm.xlu0 %5111, %v4926
    %v5113 = vpop.permute.xlu0 %5112
    %5116 = vset.pattern.permute.xlu0 16
    %5117 = vperm.xlu0 %5116, %v4927
    %v5118 = vpop.permute.xlu0 %5117
    %5121 = vset.pattern.permute.xlu0 16
    %5122 = vperm.xlu0 %5121, %v4928
    %v5123 = vpop.permute.xlu0 %5122
    %5126 = vset.pattern.permute.xlu0 16
    %5127 = vperm.xlu0 %5126, %v4929
    %v5128 = vpop.permute.xlu0 %5127
    %5131 = vset.pattern.permute.xlu0 16
    %5132 = vperm.xlu0 %5131, %v4930
    %v5133 = vpop.permute.xlu0 %5132
    %5136 = vset.pattern.permute.xlu0 16
    %5137 = vperm.xlu0 %5136, %v4931
    %v5138 = vpop.permute.xlu0 %5137
    %5141 = vset.pattern.permute.xlu0 16
    %5142 = vperm.xlu0 %5141, %v4932
    %v5143 = vpop.permute.xlu0 %5142
    %5146 = vset.pattern.permute.xlu0 16
    %5147 = vperm.xlu0 %5146, %v4933
    %v5148 = vpop.permute.xlu0 %5147
    %v5150 = vadd.f32 %v5024, %v5063
    %v5151 = vadd.f32 %v5025, %v5063
    %v5152 = vadd.f32 %v5026, %v5068
    %v5153 = vadd.f32 %v5027, %v5068
    %v5154 = vadd.f32 %v5028, %v5073
    %v5155 = vadd.f32 %v5029, %v5073
    %v5156 = vadd.f32 %v5030, %v5078
    %v5157 = vadd.f32 %v5031, %v5078
    %v5158 = vadd.f32 %v5032, %v5083
    %v5159 = vadd.f32 %v5033, %v5083
    %v5160 = vadd.f32 %v5034, %v5088
    %v5161 = vadd.f32 %v5035, %v5088
    %v5162 = vadd.f32 %v5036, %v5093
    %v5163 = vadd.f32 %v5037, %v5093
    %v5164 = vadd.f32 %v5038, %v5098
    %v5165 = vadd.f32 %v5039, %v5098
    %v5166 = vadd.f32 %v5040, %v5103
    %v5167 = vadd.f32 %v5041, %v5103
    %v5168 = vadd.f32 %v5042, %v5108
    %v5169 = vadd.f32 %v5043, %v5108
    %v5170 = vadd.f32 %v5044, %v5113
    %v5171 = vadd.f32 %v5045, %v5113
    %v5172 = vadd.f32 %v5046, %v5118
    %v5173 = vadd.f32 %v5047, %v5118
    %v5174 = vadd.f32 %v5048, %v5123
    %v5175 = vadd.f32 %v5049, %v5123
    %v5176 = vadd.f32 %v5050, %v5128
    %v5177 = vadd.f32 %v5051, %v5128
    %v5178 = vadd.f32 %v5052, %v5133
    %v5179 = vadd.f32 %v5053, %v5133
    %v5180 = vadd.f32 %v5054, %v5138
    %v5181 = vadd.f32 %v5055, %v5138
    %v5182 = vadd.f32 %v5056, %v5143
    %v5183 = vadd.f32 %v5057, %v5143
    %v5184 = vadd.f32 %v5058, %v5148
    %v5185 = vadd.f32 %v5059, %v5148
    %v5186 = vadd.f32 %v5150, %v3279
    %v5187 = vadd.f32 %v5151, %v3280
    %v5188 = vadd.f32 %v5152, %v3281
    %v5189 = vadd.f32 %v5153, %v3282
    %v5190 = vadd.f32 %v5154, %v3283
    %v5191 = vadd.f32 %v5155, %v3284
    %v5192 = vadd.f32 %v5156, %v3285
    %v5193 = vadd.f32 %v5157, %v3286
    %v5194 = vadd.f32 %v5158, %v3287
    %v5195 = vadd.f32 %v5159, %v3288
    %v5196 = vadd.f32 %v5160, %v3289
    %v5197 = vadd.f32 %v5161, %v3290
    %v5198 = vadd.f32 %v5162, %v3291
    %v5199 = vadd.f32 %v5163, %v3292
    %v5200 = vadd.f32 %v5164, %v3293
    %v5201 = vadd.f32 %v5165, %v3294
    %v5202 = vadd.f32 %v5166, %v3295
    %v5203 = vadd.f32 %v5167, %v3296
    %v5204 = vadd.f32 %v5168, %v3297
    %v5205 = vadd.f32 %v5169, %v3298
    %v5206 = vadd.f32 %v5170, %v3299
    %v5207 = vadd.f32 %v5171, %v3300
    %v5208 = vadd.f32 %v5172, %v3301
    %v5209 = vadd.f32 %v5173, %v3302
    %v5210 = vadd.f32 %v5174, %v3303
    %v5211 = vadd.f32 %v5175, %v3304
    %v5212 = vadd.f32 %v5176, %v3305
    %v5213 = vadd.f32 %v5177, %v3306
    %v5214 = vadd.f32 %v5178, %v3307
    %v5215 = vadd.f32 %v5179, %v3308
    %v5216 = vadd.f32 %v5180, %v3309
    %v5217 = vadd.f32 %v5181, %v3310
    %v5218 = vadd.f32 %v5182, %v3311
    %v5219 = vadd.f32 %v5183, %v3312
    %v5220 = vadd.f32 %v5184, %v3313
    %v5221 = vadd.f32 %v5185, %v3314
    %v5222 = vmax.f32 %v5186, 0.0
    %v5223 = vmax.f32 %v5187, 0.0
    %v5224 = vmax.f32 %v5188, 0.0
    %v5225 = vmax.f32 %v5189, 0.0
    %v5226 = vmax.f32 %v5190, 0.0
    %v5227 = vmax.f32 %v5191, 0.0
    %v5228 = vmax.f32 %v5192, 0.0
    %v5229 = vmax.f32 %v5193, 0.0
    %v5230 = vmax.f32 %v5194, 0.0
    %v5231 = vmax.f32 %v5195, 0.0
    %v5232 = vmax.f32 %v5196, 0.0
    %v5233 = vmax.f32 %v5197, 0.0
    %v5234 = vmax.f32 %v5198, 0.0
    %v5235 = vmax.f32 %v5199, 0.0
    %v5236 = vmax.f32 %v5200, 0.0
    %v5237 = vmax.f32 %v5201, 0.0
    %v5238 = vmax.f32 %v5202, 0.0
    %v5239 = vmax.f32 %v5203, 0.0
    %v5240 = vmax.f32 %v5204, 0.0
    %v5241 = vmax.f32 %v5205, 0.0
    %v5242 = vmax.f32 %v5206, 0.0
    %v5243 = vmax.f32 %v5207, 0.0
    %v5244 = vmax.f32 %v5208, 0.0
    %v5245 = vmax.f32 %v5209, 0.0
    %v5246 = vmax.f32 %v5210, 0.0
    %v5247 = vmax.f32 %v5211, 0.0
    %v5248 = vmax.f32 %v5212, 0.0
    %v5249 = vmax.f32 %v5213, 0.0
    %v5250 = vmax.f32 %v5214, 0.0
    %v5251 = vmax.f32 %v5215, 0.0
    %v5252 = vmax.f32 %v5216, 0.0
    %v5253 = vmax.f32 %v5217, 0.0
    %v5254 = vmax.f32 %v5218, 0.0
    %v5255 = vmax.f32 %v5219, 0.0
    %v5256 = vmax.f32 %v5220, 0.0
    %v5257 = vmax.f32 %v5221, 0.0
    %v5258 = vpack.c.bf16 %v5224, %v5222
    %v5259 = vpack.c.bf16 %v5225, %v5223
    %v5260 = vpack.c.bf16 %v5228, %v5226
    %v5261 = vpack.c.bf16 %v5229, %v5227
    %v5262 = vpack.c.bf16 %v5232, %v5230
    %v5263 = vpack.c.bf16 %v5233, %v5231
    %v5264 = vpack.c.bf16 %v5236, %v5234
    %v5265 = vpack.c.bf16 %v5237, %v5235
    %v5266 = vpack.c.bf16 %v5240, %v5238
    %v5267 = vpack.c.bf16 %v5241, %v5239
    %v5268 = vpack.c.bf16 %v5244, %v5242
    %v5269 = vpack.c.bf16 %v5245, %v5243
    %v5270 = vpack.c.bf16 %v5248, %v5246
    %v5271 = vpack.c.bf16 %v5249, %v5247
    %v5272 = vpack.c.bf16 %v5252, %v5250
    %v5273 = vpack.c.bf16 %v5253, %v5251
    %v5274 = vpack.c.bf16 %v5256, %v5254
    %v5275 = vpack.c.bf16 %v5257, %v5255
    %v5276 = vld [vmem:[%s2 + $0x318] sm:$0xff]
    %v5277 = vld [vmem:[%s2 + $0x320] sm:$0xff]
    %v5278 = vld [vmem:[%s2 + $0x328] sm:$0xff]
    %v5279 = vld [vmem:[%s2 + $0x330] sm:$0xff]
    %v5280 = vld [vmem:[%s2 + $0x338] sm:$0xff]
    %v5281 = vld [vmem:[%s2 + $0x340] sm:$0xff]
    %v5282 = vld [vmem:[%s2 + $0x348] sm:$0xff]
    %v5283 = vld [vmem:[%s2 + $0x350] sm:$0xff]
    %v5284 = vld [vmem:[%s2 + $0x358] sm:$0xff]
    %v5294 = vunpack.c.l.b16 %v5276
    %v5295 = vunpack.c.h.b16 %v5276
    %v5296 = vunpack.c.l.b16 %v5277
    %v5297 = vunpack.c.h.b16 %v5277
    %v5298 = vunpack.c.l.b16 %v5278
    %v5299 = vunpack.c.h.b16 %v5278
    %v5300 = vunpack.c.l.b16 %v5279
    %v5301 = vunpack.c.h.b16 %v5279
    %v5302 = vunpack.c.l.b16 %v5280
    %v5303 = vunpack.c.h.b16 %v5280
    %v5304 = vunpack.c.l.b16 %v5281
    %v5305 = vunpack.c.h.b16 %v5281
    %v5306 = vunpack.c.l.b16 %v5282
    %v5307 = vunpack.c.h.b16 %v5282
    %v5308 = vunpack.c.l.b16 %v5283
    %v5309 = vunpack.c.h.b16 %v5283
    %v5310 = vunpack.c.l.b16 %v5284
    %v5311 = vunpack.c.h.b16 %v5284
    %v5312 = vpack.c.b16 %v5296, %v5294
    %v5313 = vpack.c.b16 %v5297, %v5295
    %v5314 = vpack.c.b16 %v5300, %v5298
    %v5315 = vpack.c.b16 %v5301, %v5299
    %v5316 = vpack.c.b16 %v5304, %v5302
    %v5317 = vpack.c.b16 %v5305, %v5303
    %v5318 = vpack.c.b16 %v5308, %v5306
    %v5319 = vpack.c.b16 %v5309, %v5307
    %v5320 = vpack.c.b16 %v5310, %v5310
    %v5321 = vpack.c.b16 %v5311, %v5311
    %v5328 = vsel %vm3384, %v5313, 0
    %v5331 = vsel %vm3384, %v5315, 0
    %v5334 = vsel %vm3384, %v5317, 0
    %v5337 = vsel %vm3384, %v5319, 0
    %v5340 = vsel %vm3384, %v5321, 0
    %5342 = vmatprep.subr.bf16.mxu0 %v5273
    %5343 = vmatpush1.bf16.msra.mxu0 %v5272
    %5344 = vmatprep.subr.bf16.mxu0 %v5271
    %5345 = vmatpush1.bf16.msra.mxu0 %v5270
    %5346 = vmatprep.subr.bf16.mxu0 %v5269
    %5347 = vmatpush1.bf16.msra.mxu0 %v5268
    %5348 = vmatprep.subr.bf16.mxu0 %v5267
    %5349 = vmatpush1.bf16.msra.mxu0 %v5266
    %5350 = vmatprep.subr.bf16.mxu0 %v5265
    %5351 = vmatpush1.bf16.msra.mxu0 %v5264
    %5352 = vmatprep.subr.bf16.mxu0 %v5263
    %5353 = vmatpush1.bf16.msra.mxu0 %v5262
    %5354 = vmatprep.subr.bf16.mxu0 %v5261
    %5355 = vmatpush1.bf16.msra.mxu0 %v5260
    %5356 = vmatprep.subr.bf16.mxu0 %v5259
    %5357 = vmatpush1.bf16.msra.mxu0 %v5258
    %5358 = vmatprep.subr.bf16.mxu0 0
    %5359 = vmatpush2.bf16.msra.mxu0 0
    %5360 = vmatprep.subr.bf16.mxu0 0
    %5361 = vmatpush2.bf16.msra.mxu0 0
    %5362 = vmatprep.subr.bf16.mxu0 0
    %5363 = vmatpush2.bf16.msra.mxu0 0
    %5364 = vmatprep.subr.bf16.mxu0 0
    %5365 = vmatpush2.bf16.msra.mxu0 0
    %5366 = vmatprep.subr.bf16.mxu0 0
    %5367 = vmatpush2.bf16.msra.mxu0 0
    %5368 = vmatprep.subr.bf16.mxu0 0
    %5369 = vmatpush2.bf16.msra.mxu0 0
    %5370 = vmatprep.subr.bf16.mxu0 0
    %5371 = vmatpush2.bf16.msra.mxu0 0
    %5372 = vmatprep.subr.bf16.mxu0 %v5275
    %5373 = vmatpush2.bf16.msra.mxu0 %v5274
    %5374 = vmatprep.mubr.bf16.mxu0 %v5328
    %5375 = vmatmul.mubr.bf16.gmra.mxu0 %v5312
    %v5376 = vpop.f32.mrf.mxu0
    %v5377 = vadd.f32 0.0, %v5376
    %v5378 = vpop.f32.mrf.mxu0
    %v5379 = vadd.f32 0.0, %v5378
    %v5380 = vpop.f32.mrf.mxu0
    %v5381 = vadd.f32 0.0, %v5380
    %v5382 = vpop.f32.mrf.mxu0
    %v5383 = vadd.f32 0.0, %v5382
    %5384 = vmatprep.mubr.bf16.mxu0 %v5331
    %5385 = vmatmul.mubr.bf16.gmra.mxu0 %v5314
    %v5386 = vpop.f32.mrf.mxu0
    %v5387 = vadd.f32 0.0, %v5386
    %v5388 = vpop.f32.mrf.mxu0
    %v5389 = vadd.f32 0.0, %v5388
    %v5390 = vpop.f32.mrf.mxu0
    %v5391 = vadd.f32 0.0, %v5390
    %v5392 = vpop.f32.mrf.mxu0
    %v5393 = vadd.f32 0.0, %v5392
    %5394 = vmatprep.mubr.bf16.mxu0 %v5334
    %5395 = vmatmul.mubr.bf16.gmra.mxu0 %v5316
    %v5396 = vpop.f32.mrf.mxu0
    %v5397 = vadd.f32 0.0, %v5396
    %v5398 = vpop.f32.mrf.mxu0
    %v5399 = vadd.f32 0.0, %v5398
    %v5400 = vpop.f32.mrf.mxu0
    %v5401 = vadd.f32 0.0, %v5400
    %v5402 = vpop.f32.mrf.mxu0
    %v5403 = vadd.f32 0.0, %v5402
    %5404 = vmatprep.mubr.bf16.mxu0 %v5337
    %5405 = vmatmul.mubr.bf16.gmra.mxu0 %v5318
    %v5406 = vpop.f32.mrf.mxu0
    %v5407 = vadd.f32 0.0, %v5406
    %v5408 = vpop.f32.mrf.mxu0
    %v5409 = vadd.f32 0.0, %v5408
    %v5410 = vpop.f32.mrf.mxu0
    %v5411 = vadd.f32 0.0, %v5410
    %v5412 = vpop.f32.mrf.mxu0
    %v5413 = vadd.f32 0.0, %v5412
    %5414 = vmatprep.mubr.bf16.mxu0 %v5340
    %5415 = vmatmul.mubr.bf16.gmra.mxu0 %v5320
    %v5416 = vpop.f32.mrf.mxu0
    %v5417 = vadd.f32 0.0, %v5416
    %v5418 = vpop.f32.mrf.mxu0
    %v5419 = vadd.f32 0.0, %v5418
    %v5420 = vpop.f32.mrf.mxu0
    %v5421 = vpop.f32.mrf.mxu0
    %5422 = vdwg.mxu0
    %v5423 = vadd.f32 %v5377, %v5379
    %5424 = vadd.xlane.f32.xlu0 %v5423
    %v5425 = vpop.xlane.xlu0 %5424
    %v5426 = vadd.f32 %v5381, %v5383
    %5427 = vadd.xlane.f32.xlu0 %v5426
    %v5428 = vpop.xlane.xlu0 %5427
    %v5429 = vadd.f32 %v5387, %v5389
    %5430 = vadd.xlane.f32.xlu0 %v5429
    %v5431 = vpop.xlane.xlu0 %5430
    %v5432 = vadd.f32 %v5391, %v5393
    %5433 = vadd.xlane.f32.xlu0 %v5432
    %v5434 = vpop.xlane.xlu0 %5433
    %v5435 = vadd.f32 %v5397, %v5399
    %5436 = vadd.xlane.f32.xlu0 %v5435
    %v5437 = vpop.xlane.xlu0 %5436
    %v5438 = vadd.f32 %v5401, %v5403
    %5439 = vadd.xlane.f32.xlu0 %v5438
    %v5440 = vpop.xlane.xlu0 %5439
    %v5441 = vadd.f32 %v5407, %v5409
    %5442 = vadd.xlane.f32.xlu0 %v5441
    %v5443 = vpop.xlane.xlu0 %5442
    %v5444 = vadd.f32 %v5411, %v5413
    %5445 = vadd.xlane.f32.xlu0 %v5444
    %v5446 = vpop.xlane.xlu0 %5445
    %v5447 = vadd.f32 %v5417, %v5419
    %5448 = vadd.xlane.f32.xlu0 %v5447
    %v5449 = vpop.xlane.xlu0 %5448
    %v5450 = vmul.f32 %v5425, %v189
    %v5451 = vmul.f32 %v5428, %v189
    %v5452 = vmul.f32 %v5431, %v189
    %v5453 = vmul.f32 %v5434, %v189
    %v5454 = vmul.f32 %v5437, %v189
    %v5455 = vmul.f32 %v5440, %v189
    %v5456 = vmul.f32 %v5443, %v189
    %v5457 = vmul.f32 %v5446, %v189
    %v5458 = vmul.f32 %v5449, %v189
    %v5459 = vmul.f32 %v5377, %v5377
    %v5460 = vmul.f32 %v5379, %v5379
    %v5461 = vmul.f32 %v5381, %v5381
    %v5462 = vmul.f32 %v5383, %v5383
    %v5463 = vmul.f32 %v5387, %v5387
    %v5464 = vmul.f32 %v5389, %v5389
    %v5465 = vmul.f32 %v5391, %v5391
    %v5466 = vmul.f32 %v5393, %v5393
    %v5467 = vmul.f32 %v5397, %v5397
    %v5468 = vmul.f32 %v5399, %v5399
    %v5469 = vmul.f32 %v5401, %v5401
    %v5470 = vmul.f32 %v5403, %v5403
    %v5471 = vmul.f32 %v5407, %v5407
    %v5472 = vmul.f32 %v5409, %v5409
    %v5473 = vmul.f32 %v5411, %v5411
    %v5474 = vmul.f32 %v5413, %v5413
    %v5475 = vmul.f32 %v5417, %v5417
    %v5476 = vmul.f32 %v5419, %v5419
    %v5477 = vadd.f32 %v5459, %v5460
    %5478 = vadd.xlane.f32.xlu0 %v5477
    %v5479 = vpop.xlane.xlu0 %5478
    %v5480 = vadd.f32 %v5461, %v5462
    %5481 = vadd.xlane.f32.xlu0 %v5480
    %v5482 = vpop.xlane.xlu0 %5481
    %v5483 = vadd.f32 %v5463, %v5464
    %5484 = vadd.xlane.f32.xlu0 %v5483
    %v5485 = vpop.xlane.xlu0 %5484
    %v5486 = vadd.f32 %v5465, %v5466
    %5487 = vadd.xlane.f32.xlu0 %v5486
    %v5488 = vpop.xlane.xlu0 %5487
    %v5489 = vadd.f32 %v5467, %v5468
    %5490 = vadd.xlane.f32.xlu0 %v5489
    %v5491 = vpop.xlane.xlu0 %5490
    %v5492 = vadd.f32 %v5469, %v5470
    %5493 = vadd.xlane.f32.xlu0 %v5492
    %v5494 = vpop.xlane.xlu0 %5493
    %v5495 = vadd.f32 %v5471, %v5472
    %5496 = vadd.xlane.f32.xlu0 %v5495
    %v5497 = vpop.xlane.xlu0 %5496
    %v5498 = vadd.f32 %v5473, %v5474
    %5499 = vadd.xlane.f32.xlu0 %v5498
    %v5500 = vpop.xlane.xlu0 %5499
    %v5501 = vadd.f32 %v5475, %v5476
    %5502 = vadd.xlane.f32.xlu0 %v5501
    %v5503 = vpop.xlane.xlu0 %5502
    %v5504 = vmul.f32 %v5479, %v189
    %v5505 = vmul.f32 %v5482, %v189
    %v5506 = vmul.f32 %v5485, %v189
    %v5507 = vmul.f32 %v5488, %v189
    %v5508 = vmul.f32 %v5491, %v189
    %v5509 = vmul.f32 %v5494, %v189
    %v5510 = vmul.f32 %v5497, %v189
    %v5511 = vmul.f32 %v5500, %v189
    %v5512 = vmul.f32 %v5503, %v189
    %v5513 = vmul.f32 %v5450, %v5450
    %v5514 = vmul.f32 %v5451, %v5451
    %v5515 = vmul.f32 %v5452, %v5452
    %v5516 = vmul.f32 %v5453, %v5453
    %v5517 = vmul.f32 %v5454, %v5454
    %v5518 = vmul.f32 %v5455, %v5455
    %v5519 = vmul.f32 %v5456, %v5456
    %v5520 = vmul.f32 %v5457, %v5457
    %v5521 = vmul.f32 %v5458, %v5458
    %v5522 = vsub.f32 %v5504, %v5513
    %v5523 = vsub.f32 %v5505, %v5514
    %v5524 = vsub.f32 %v5506, %v5515
    %v5525 = vsub.f32 %v5507, %v5516
    %v5526 = vsub.f32 %v5508, %v5517
    %v5527 = vsub.f32 %v5509, %v5518
    %v5528 = vsub.f32 %v5510, %v5519
    %v5529 = vsub.f32 %v5511, %v5520
    %v5530 = vsub.f32 %v5512, %v5521
    %v5531 = vmax.f32 %v5522, 0.0
    %v5532 = vmax.f32 %v5523, 0.0
    %v5533 = vmax.f32 %v5524, 0.0
    %v5534 = vmax.f32 %v5525, 0.0
    %v5535 = vmax.f32 %v5526, 0.0
    %v5536 = vmax.f32 %v5527, 0.0
    %v5537 = vmax.f32 %v5528, 0.0
    %v5538 = vmax.f32 %v5529, 0.0
    %v5539 = vmax.f32 %v5530, 0.0
    %v5540 = vadd.f32 %v5531, 1e-05
    %v5541 = vadd.f32 %v5532, 1e-05
    %v5542 = vadd.f32 %v5533, 1e-05
    %v5543 = vadd.f32 %v5534, 1e-05
    %v5544 = vadd.f32 %v5535, 1e-05
    %v5545 = vadd.f32 %v5536, 1e-05
    %v5546 = vadd.f32 %v5537, 1e-05
    %v5547 = vadd.f32 %v5538, 1e-05
    %v5548 = vadd.f32 %v5539, 1e-05
    %v5549 = vrsqrt.pop %v5540
    %v5550 = vrsqrt.pop %v5541
    %v5551 = vrsqrt.pop %v5542
    %v5552 = vrsqrt.pop %v5543
    %v5553 = vrsqrt.pop %v5544
    %v5554 = vrsqrt.pop %v5545
    %v5555 = vrsqrt.pop %v5546
    %v5556 = vrsqrt.pop %v5547
    %v5557 = vrsqrt.pop %v5548
    %v5558 = vmul.f32 %v280, %v5549
    %v5559 = vmul.f32 %v281, %v5550
    %v5560 = vmul.f32 %v282, %v5551
    %v5561 = vmul.f32 %v283, %v5552
    %v5562 = vmul.f32 %v284, %v5553
    %v5563 = vmul.f32 %v285, %v5554
    %v5564 = vmul.f32 %v286, %v5555
    %v5565 = vmul.f32 %v287, %v5556
    %v5566 = vmul.f32 %v288, %v5557
    %v5567 = vmul.f32 %v5450, %v5558
    %v5568 = vmul.f32 %v5451, %v5559
    %v5569 = vmul.f32 %v5452, %v5560
    %v5570 = vmul.f32 %v5453, %v5561
    %v5571 = vmul.f32 %v5454, %v5562
    %v5572 = vmul.f32 %v5455, %v5563
    %v5573 = vmul.f32 %v5456, %v5564
    %v5574 = vmul.f32 %v5457, %v5565
    %v5575 = vmul.f32 %v5458, %v5566
    %5585 = vrot.lane.b32.xlu0 %v5567, 9
    %v5586 = vpop.permute.xlu0 %5585
    %5587 = vrot.lane.b32.xlu0 %v5568, 9
    %v5588 = vpop.permute.xlu0 %5587
    %5589 = vrot.lane.b32.xlu0 %v5569, 9
    %v5590 = vpop.permute.xlu0 %5589
    %5591 = vrot.lane.b32.xlu0 %v5570, 9
    %v5592 = vpop.permute.xlu0 %5591
    %5593 = vrot.lane.b32.xlu0 %v5571, 9
    %v5594 = vpop.permute.xlu0 %5593
    %5595 = vrot.lane.b32.xlu0 %v5572, 9
    %v5596 = vpop.permute.xlu0 %5595
    %5597 = vrot.lane.b32.xlu0 %v5573, 9
    %v5598 = vpop.permute.xlu0 %5597
    %5599 = vrot.lane.b32.xlu0 %v5574, 9
    %v5600 = vpop.permute.xlu0 %5599
    %5601 = vrot.lane.b32.xlu0 %v5575, 9
    %v5602 = vpop.permute.xlu0 %5601
    %v5612 = vsub.f32 %v280, %v5586
    %v5613 = vsub.f32 %v281, %v5588
    %v5614 = vsub.f32 %v282, %v5590
    %v5615 = vsub.f32 %v283, %v5592
    %v5616 = vsub.f32 %v284, %v5594
    %v5617 = vsub.f32 %v285, %v5596
    %v5618 = vsub.f32 %v286, %v5598
    %v5619 = vsub.f32 %v287, %v5600
    %v5620 = vsub.f32 %v288, %v5602
    %5622 = vset.pattern.permute.xlu0 8
    %5623 = vperm.xlu0 %5622, %v5558
    %v5624 = vpop.permute.xlu0 %5623
    %5627 = vset.pattern.permute.xlu0 8
    %5628 = vperm.xlu0 %5627, %v5559
    %v5629 = vpop.permute.xlu0 %5628
    %5632 = vset.pattern.permute.xlu0 8
    %5633 = vperm.xlu0 %5632, %v5560
    %v5634 = vpop.permute.xlu0 %5633
    %5637 = vset.pattern.permute.xlu0 8
    %5638 = vperm.xlu0 %5637, %v5561
    %v5639 = vpop.permute.xlu0 %5638
    %5642 = vset.pattern.permute.xlu0 8
    %5643 = vperm.xlu0 %5642, %v5562
    %v5644 = vpop.permute.xlu0 %5643
    %5647 = vset.pattern.permute.xlu0 8
    %5648 = vperm.xlu0 %5647, %v5563
    %v5649 = vpop.permute.xlu0 %5648
    %5652 = vset.pattern.permute.xlu0 8
    %5653 = vperm.xlu0 %5652, %v5564
    %v5654 = vpop.permute.xlu0 %5653
    %5657 = vset.pattern.permute.xlu0 8
    %5658 = vperm.xlu0 %5657, %v5565
    %v5659 = vpop.permute.xlu0 %5658
    %5662 = vset.pattern.permute.xlu0 8
    %5663 = vperm.xlu0 %5662, %v5566
    %v5664 = vpop.permute.xlu0 %5663
    %v5666 = vmul.f32 %v5377, %v5624
    %v5667 = vmul.f32 %v5379, %v5624
    %v5668 = vmul.f32 %v5381, %v5629
    %v5669 = vmul.f32 %v5383, %v5629
    %v5670 = vmul.f32 %v5387, %v5634
    %v5671 = vmul.f32 %v5389, %v5634
    %v5672 = vmul.f32 %v5391, %v5639
    %v5673 = vmul.f32 %v5393, %v5639
    %v5674 = vmul.f32 %v5397, %v5644
    %v5675 = vmul.f32 %v5399, %v5644
    %v5676 = vmul.f32 %v5401, %v5649
    %v5677 = vmul.f32 %v5403, %v5649
    %v5678 = vmul.f32 %v5407, %v5654
    %v5679 = vmul.f32 %v5409, %v5654
    %v5680 = vmul.f32 %v5411, %v5659
    %v5681 = vmul.f32 %v5413, %v5659
    %v5682 = vmul.f32 %v5417, %v5664
    %v5683 = vmul.f32 %v5419, %v5664
    %5685 = vset.pattern.permute.xlu0 17
    %5686 = vperm.xlu0 %5685, %v5612
    %v5687 = vpop.permute.xlu0 %5686
    %5690 = vset.pattern.permute.xlu0 17
    %5691 = vperm.xlu0 %5690, %v5613
    %v5692 = vpop.permute.xlu0 %5691
    %5695 = vset.pattern.permute.xlu0 17
    %5696 = vperm.xlu0 %5695, %v5614
    %v5697 = vpop.permute.xlu0 %5696
    %5700 = vset.pattern.permute.xlu0 17
    %5701 = vperm.xlu0 %5700, %v5615
    %v5702 = vpop.permute.xlu0 %5701
    %5705 = vset.pattern.permute.xlu0 17
    %5706 = vperm.xlu0 %5705, %v5616
    %v5707 = vpop.permute.xlu0 %5706
    %5710 = vset.pattern.permute.xlu0 17
    %5711 = vperm.xlu0 %5710, %v5617
    %v5712 = vpop.permute.xlu0 %5711
    %5715 = vset.pattern.permute.xlu0 17
    %5716 = vperm.xlu0 %5715, %v5618
    %v5717 = vpop.permute.xlu0 %5716
    %5720 = vset.pattern.permute.xlu0 17
    %5721 = vperm.xlu0 %5720, %v5619
    %v5722 = vpop.permute.xlu0 %5721
    %5725 = vset.pattern.permute.xlu0 17
    %5726 = vperm.xlu0 %5725, %v5620
    %v5727 = vpop.permute.xlu0 %5726
    %v5729 = vadd.f32 %v5666, %v5687
    %v5730 = vadd.f32 %v5667, %v5687
    %v5731 = vadd.f32 %v5668, %v5692
    %v5732 = vadd.f32 %v5669, %v5692
    %v5733 = vadd.f32 %v5670, %v5697
    %v5734 = vadd.f32 %v5671, %v5697
    %v5735 = vadd.f32 %v5672, %v5702
    %v5736 = vadd.f32 %v5673, %v5702
    %v5737 = vadd.f32 %v5674, %v5707
    %v5738 = vadd.f32 %v5675, %v5707
    %v5739 = vadd.f32 %v5676, %v5712
    %v5740 = vadd.f32 %v5677, %v5712
    %v5741 = vadd.f32 %v5678, %v5717
    %v5742 = vadd.f32 %v5679, %v5717
    %v5743 = vadd.f32 %v5680, %v5722
    %v5744 = vadd.f32 %v5681, %v5722
    %v5745 = vadd.f32 %v5682, %v5727
    %v5746 = vadd.f32 %v5683, %v5727
    %v5747 = vmax.f32 %v5729, 0.0
    %v5748 = vmax.f32 %v5730, 0.0
    %v5749 = vmax.f32 %v5731, 0.0
    %v5750 = vmax.f32 %v5732, 0.0
    %v5751 = vmax.f32 %v5733, 0.0
    %v5752 = vmax.f32 %v5734, 0.0
    %v5753 = vmax.f32 %v5735, 0.0
    %v5754 = vmax.f32 %v5736, 0.0
    %v5755 = vmax.f32 %v5737, 0.0
    %v5756 = vmax.f32 %v5738, 0.0
    %v5757 = vmax.f32 %v5739, 0.0
    %v5758 = vmax.f32 %v5740, 0.0
    %v5759 = vmax.f32 %v5741, 0.0
    %v5760 = vmax.f32 %v5742, 0.0
    %v5761 = vmax.f32 %v5743, 0.0
    %v5762 = vmax.f32 %v5744, 0.0
    %v5763 = vmax.f32 %v5745, 0.0
    %v5764 = vmax.f32 %v5746, 0.0
    %v5765 = vld [vmem:[%s2 + $0x360] sm:$0x1]
    %v5766 = vpack.c.bf16 %v5749, %v5747
    %v5767 = vpack.c.bf16 %v5750, %v5748
    %v5768 = vpack.c.bf16 %v5753, %v5751
    %v5769 = vpack.c.bf16 %v5754, %v5752
    %v5770 = vpack.c.bf16 %v5757, %v5755
    %v5771 = vpack.c.bf16 %v5758, %v5756
    %v5772 = vpack.c.bf16 %v5761, %v5759
    %v5773 = vpack.c.bf16 %v5762, %v5760
    %v5774 = vpack.c.bf16 %v5763, %v5763
    %v5775 = vpack.c.bf16 %v5764, %v5764
    %v5777 = vsel %vm556, %v5765, 0
    %v5780 = vsel %vm74, %v5774, 0
    %v5783 = vsel %vm74, %v5775, 0
    %5785 = vmatprep.subr.bf16.mxu0 0
    %5786 = vmatpush1.bf16.msra.mxu0 0
    %5787 = vmatprep.subr.bf16.mxu0 0
    %5788 = vmatpush1.bf16.msra.mxu0 0
    %5789 = vmatprep.subr.bf16.mxu0 0
    %5790 = vmatpush1.bf16.msra.mxu0 0
    %5791 = vmatprep.subr.bf16.mxu0 %v5783
    %5792 = vmatpush1.bf16.msra.mxu0 %v5780
    %5793 = vmatprep.subr.bf16.mxu0 %v5773
    %5794 = vmatpush1.bf16.msra.mxu0 %v5772
    %5795 = vmatprep.subr.bf16.mxu0 %v5771
    %5796 = vmatpush1.bf16.msra.mxu0 %v5770
    %5797 = vmatprep.subr.bf16.mxu0 %v5769
    %5798 = vmatpush1.bf16.msra.mxu0 %v5768
    %5799 = vmatprep.subr.bf16.mxu0 %v5767
    %5800 = vmatpush1.bf16.msra.mxu0 %v5766
    %5801 = vmatprep.subr.bf16.mxu0 0
    %5802 = vmatpush2.bf16.msra.mxu0 0
    %5803 = vmatprep.subr.bf16.mxu0 0
    %5804 = vmatpush2.bf16.msra.mxu0 0
    %5805 = vmatprep.subr.bf16.mxu0 0
    %5806 = vmatpush2.bf16.msra.mxu0 0
    %5807 = vmatprep.subr.bf16.mxu0 0
    %5808 = vmatpush2.bf16.msra.mxu0 0
    %5809 = vmatprep.subr.bf16.mxu0 0
    %5810 = vmatpush2.bf16.msra.mxu0 0
    %5811 = vmatprep.subr.bf16.mxu0 0
    %5812 = vmatpush2.bf16.msra.mxu0 0
    %5813 = vmatprep.subr.bf16.mxu0 0
    %5814 = vmatpush2.bf16.msra.mxu0 0
    %5815 = vmatprep.subr.bf16.mxu0 0
    %5816 = vmatpush2.bf16.msra.mxu0 0
    %5817 = vmatprep.mubr.bf16.mxu0 0
    %5818 = vmatmul.mubr.bf16.gmra.mxu0 %v5777
    %v5819 = vpop.f32.mrf.mxu0
    %v5820 = vadd.f32 0.0, %v5819
    %v5821 = vpop.f32.mrf.mxu0
    %v5822 = vadd.f32 0.0, %v5821
    %v5823 = vpop.f32.mrf.mxu0
    %v5824 = vpop.f32.mrf.mxu0
    %5825 = vdwg.mxu0
    %v5826 = vld [vmem:[%s1] sm:$0x3]
    %v5828 = vlaneseq
    %v5829 = vshrl.u32 %v5828, 7
    %v5830 = vsub.s32 0, %v5829
    %v5831 = vrot.slane %v5826, %v5830
    %v5832 = vlaneseq
    %v5833 = vshrl.u32 %v5832, 7
    %v5834 = vsub.s32 1, %v5833
    %v5835 = vrot.slane %v5826, %v5834
    %v5838 = vmul.f32 %v5820, %v5831
    %v5839 = vmul.f32 %v5822, %v5835
    %v5840 = vlaneseq
    %v5841 = vshrl.u32 %v5840, 7
    %v5842 = vadd.s32 %v5841, 8
    %v5843 = vadd.s32 %v5841, 16
    %v5844 = vadd.s32 %v5841, 24
    %v5845 = vadd.s32 %v5841, 32
    %v5846 = vadd.s32 %v5841, 40
    %v5847 = vadd.s32 %v5841, 48
    %v5848 = vadd.s32 %v5841, 56
    %v5849 = vadd.s32 %v5841, 64
    %v5850 = vadd.s32 %v5841, 72
    %v5851 = vadd.s32 %v5841, 80
    %v5852 = vadd.s32 %v5841, 88
    %v5853 = vadd.s32 %v5841, 96
    %v5854 = vadd.s32 %v5841, 104
    %v5855 = vadd.s32 %v5841, 112
    %v5856 = vadd.s32 %v5841, 120
    %v5857 = vadd.s32 %v5841, 128
    %v5858 = vadd.s32 %v5841, 136
    %v5859 = vadd.s32 %v5841, 144
    %v5860 = vadd.s32 %v5841, 152
    %v5861 = vadd.s32 %v5841, 160
    %v5862 = vadd.s32 %v5841, 168
    %v5863 = vadd.s32 %v5841, 176
    %v5864 = vadd.s32 %v5841, 184
    %v5865 = vadd.s32 %v5841, 192
    %v5866 = vadd.s32 %v5841, 200
    %v5867 = vadd.s32 %v5841, 208
    %v5868 = vadd.s32 %v5841, 216
    %v5869 = vadd.s32 %v5841, 224
    %v5870 = vadd.s32 %v5841, 232
    %v5871 = vadd.s32 %v5841, 240
    %v5872 = vadd.s32 %v5841, 248
    %v5873 = vlaneseq
    %v5874 = vand.u32 %v5873, 127
    %v5875 = vmul.u32 %v5874, 128
    %vm5876 = vcmp.ge.s32.totalorder %v5841, %v5875
    %vm5877 = vcmp.ge.s32.totalorder %v5842, %v5875
    %vm5878 = vcmp.ge.s32.totalorder %v5843, %v5875
    %vm5879 = vcmp.ge.s32.totalorder %v5844, %v5875
    %vm5880 = vcmp.ge.s32.totalorder %v5845, %v5875
    %vm5881 = vcmp.ge.s32.totalorder %v5846, %v5875
    %vm5882 = vcmp.ge.s32.totalorder %v5847, %v5875
    %vm5883 = vcmp.ge.s32.totalorder %v5848, %v5875
    %vm5884 = vcmp.ge.s32.totalorder %v5849, %v5875
    %vm5885 = vcmp.ge.s32.totalorder %v5850, %v5875
    %vm5886 = vcmp.ge.s32.totalorder %v5851, %v5875
    %vm5887 = vcmp.ge.s32.totalorder %v5852, %v5875
    %vm5888 = vcmp.ge.s32.totalorder %v5853, %v5875
    %vm5889 = vcmp.ge.s32.totalorder %v5854, %v5875
    %vm5890 = vcmp.ge.s32.totalorder %v5855, %v5875
    %vm5891 = vcmp.ge.s32.totalorder %v5856, %v5875
    %vm5892 = vcmp.ge.s32.totalorder %v5857, %v5875
    %vm5893 = vcmp.ge.s32.totalorder %v5858, %v5875
    %vm5894 = vcmp.ge.s32.totalorder %v5859, %v5875
    %vm5895 = vcmp.ge.s32.totalorder %v5860, %v5875
    %vm5896 = vcmp.ge.s32.totalorder %v5861, %v5875
    %vm5897 = vcmp.ge.s32.totalorder %v5862, %v5875
    %vm5898 = vcmp.ge.s32.totalorder %v5863, %v5875
    %vm5899 = vcmp.ge.s32.totalorder %v5864, %v5875
    %vm5900 = vcmp.ge.s32.totalorder %v5865, %v5875
    %vm5901 = vcmp.ge.s32.totalorder %v5866, %v5875
    %vm5902 = vcmp.ge.s32.totalorder %v5867, %v5875
    %vm5903 = vcmp.ge.s32.totalorder %v5868, %v5875
    %vm5904 = vcmp.ge.s32.totalorder %v5869, %v5875
    %vm5905 = vcmp.ge.s32.totalorder %v5870, %v5875
    %vm5906 = vcmp.ge.s32.totalorder %v5871, %v5875
    %vm5907 = vcmp.ge.s32.totalorder %v5872, %v5875
    %v5908 = vadd.s32 %v5875, 128
    %vm5909 = vcmp.lt.s32.totalorder %v5841, %v5908
    %vm5910 = vcmp.lt.s32.totalorder %v5842, %v5908
    %vm5911 = vcmp.lt.s32.totalorder %v5843, %v5908
    %vm5912 = vcmp.lt.s32.totalorder %v5844, %v5908
    %vm5913 = vcmp.lt.s32.totalorder %v5845, %v5908
    %vm5914 = vcmp.lt.s32.totalorder %v5846, %v5908
    %vm5915 = vcmp.lt.s32.totalorder %v5847, %v5908
    %vm5916 = vcmp.lt.s32.totalorder %v5848, %v5908
    %vm5917 = vcmp.lt.s32.totalorder %v5849, %v5908
    %vm5918 = vcmp.lt.s32.totalorder %v5850, %v5908
    %vm5919 = vcmp.lt.s32.totalorder %v5851, %v5908
    %vm5920 = vcmp.lt.s32.totalorder %v5852, %v5908
    %vm5921 = vcmp.lt.s32.totalorder %v5853, %v5908
    %vm5922 = vcmp.lt.s32.totalorder %v5854, %v5908
    %vm5923 = vcmp.lt.s32.totalorder %v5855, %v5908
    %vm5924 = vcmp.lt.s32.totalorder %v5856, %v5908
    %vm5925 = vcmp.lt.s32.totalorder %v5857, %v5908
    %vm5926 = vcmp.lt.s32.totalorder %v5858, %v5908
    %vm5927 = vcmp.lt.s32.totalorder %v5859, %v5908
    %vm5928 = vcmp.lt.s32.totalorder %v5860, %v5908
    %vm5929 = vcmp.lt.s32.totalorder %v5861, %v5908
    %vm5930 = vcmp.lt.s32.totalorder %v5862, %v5908
    %vm5931 = vcmp.lt.s32.totalorder %v5863, %v5908
    %vm5932 = vcmp.lt.s32.totalorder %v5864, %v5908
    %vm5933 = vcmp.lt.s32.totalorder %v5865, %v5908
    %vm5934 = vcmp.lt.s32.totalorder %v5866, %v5908
    %vm5935 = vcmp.lt.s32.totalorder %v5867, %v5908
    %vm5936 = vcmp.lt.s32.totalorder %v5868, %v5908
    %vm5937 = vcmp.lt.s32.totalorder %v5869, %v5908
    %vm5938 = vcmp.lt.s32.totalorder %v5870, %v5908
    %vm5939 = vcmp.lt.s32.totalorder %v5871, %v5908
    %vm5940 = vcmp.lt.s32.totalorder %v5872, %v5908
    %vm5941 = vmand %vm5876, %vm5909
    %vm5942 = vmand %vm5877, %vm5910
    %vm5943 = vmand %vm5878, %vm5911
    %vm5944 = vmand %vm5879, %vm5912
    %vm5945 = vmand %vm5880, %vm5913
    %vm5946 = vmand %vm5881, %vm5914
    %vm5947 = vmand %vm5882, %vm5915
    %vm5948 = vmand %vm5883, %vm5916
    %vm5949 = vmand %vm5884, %vm5917
    %vm5950 = vmand %vm5885, %vm5918
    %vm5951 = vmand %vm5886, %vm5919
    %vm5952 = vmand %vm5887, %vm5920
    %vm5953 = vmand %vm5888, %vm5921
    %vm5954 = vmand %vm5889, %vm5922
    %vm5955 = vmand %vm5890, %vm5923
    %vm5956 = vmand %vm5891, %vm5924
    %vm5957 = vmand %vm5892, %vm5925
    %vm5958 = vmand %vm5893, %vm5926
    %vm5959 = vmand %vm5894, %vm5927
    %vm5960 = vmand %vm5895, %vm5928
    %vm5961 = vmand %vm5896, %vm5929
    %vm5962 = vmand %vm5897, %vm5930
    %vm5963 = vmand %vm5898, %vm5931
    %vm5964 = vmand %vm5899, %vm5932
    %vm5965 = vmand %vm5900, %vm5933
    %vm5966 = vmand %vm5901, %vm5934
    %vm5967 = vmand %vm5902, %vm5935
    %vm5968 = vmand %vm5903, %vm5936
    %vm5969 = vmand %vm5904, %vm5937
    %vm5970 = vmand %vm5905, %vm5938
    %vm5971 = vmand %vm5906, %vm5939
    %vm5972 = vmand %vm5907, %vm5940
    %v5973 = vsel %vm5941, 1, 0
    %v5974 = vsel %vm5942, 1, 0
    %v5975 = vsel %vm5943, 1, 0
    %v5976 = vsel %vm5944, 1, 0
    %v5977 = vsel %vm5945, 1, 0
    %v5978 = vsel %vm5946, 1, 0
    %v5979 = vsel %vm5947, 1, 0
    %v5980 = vsel %vm5948, 1, 0
    %v5981 = vsel %vm5949, 1, 0
    %v5982 = vsel %vm5950, 1, 0
    %v5983 = vsel %vm5951, 1, 0
    %v5984 = vsel %vm5952, 1, 0
    %v5985 = vsel %vm5953, 1, 0
    %v5986 = vsel %vm5954, 1, 0
    %v5987 = vsel %vm5955, 1, 0
    %v5988 = vsel %vm5956, 1, 0
    %v5989 = vsel %vm5957, 1, 0
    %v5990 = vsel %vm5958, 1, 0
    %v5991 = vsel %vm5959, 1, 0
    %v5992 = vsel %vm5960, 1, 0
    %v5993 = vsel %vm5961, 1, 0
    %v5994 = vsel %vm5962, 1, 0
    %v5995 = vsel %vm5963, 1, 0
    %v5996 = vsel %vm5964, 1, 0
    %v5997 = vsel %vm5965, 1, 0
    %v5998 = vsel %vm5966, 1, 0
    %v5999 = vsel %vm5967, 1, 0
    %v6000 = vsel %vm5968, 1, 0
    %v6001 = vsel %vm5969, 1, 0
    %v6002 = vsel %vm5970, 1, 0
    %v6003 = vsel %vm5971, 1, 0
    %v6004 = vsel %vm5972, 1, 0
    %v6005 = vcvt.s32.f32 %v5973
    %v6006 = vcvt.s32.f32 %v5974
    %v6007 = vcvt.s32.f32 %v5975
    %v6008 = vcvt.s32.f32 %v5976
    %v6009 = vcvt.s32.f32 %v5977
    %v6010 = vcvt.s32.f32 %v5978
    %v6011 = vcvt.s32.f32 %v5979
    %v6012 = vcvt.s32.f32 %v5980
    %v6013 = vcvt.s32.f32 %v5981
    %v6014 = vcvt.s32.f32 %v5982
    %v6015 = vcvt.s32.f32 %v5983
    %v6016 = vcvt.s32.f32 %v5984
    %v6017 = vcvt.s32.f32 %v5985
    %v6018 = vcvt.s32.f32 %v5986
    %v6019 = vcvt.s32.f32 %v5987
    %v6020 = vcvt.s32.f32 %v5988
    %v6021 = vcvt.s32.f32 %v5989
    %v6022 = vcvt.s32.f32 %v5990
    %v6023 = vcvt.s32.f32 %v5991
    %v6024 = vcvt.s32.f32 %v5992
    %v6025 = vcvt.s32.f32 %v5993
    %v6026 = vcvt.s32.f32 %v5994
    %v6027 = vcvt.s32.f32 %v5995
    %v6028 = vcvt.s32.f32 %v5996
    %v6029 = vcvt.s32.f32 %v5997
    %v6030 = vcvt.s32.f32 %v5998
    %v6031 = vcvt.s32.f32 %v5999
    %v6032 = vcvt.s32.f32 %v6000
    %v6033 = vcvt.s32.f32 %v6001
    %v6034 = vcvt.s32.f32 %v6002
    %v6035 = vcvt.s32.f32 %v6003
    %v6036 = vcvt.s32.f32 %v6004
    %v6037 = vpack.c.bf16 %v6006, %v6005
    %v6038 = vpack.c.bf16 %v6008, %v6007
    %v6039 = vpack.c.bf16 %v6010, %v6009
    %v6040 = vpack.c.bf16 %v6012, %v6011
    %v6041 = vpack.c.bf16 %v6014, %v6013
    %v6042 = vpack.c.bf16 %v6016, %v6015
    %v6043 = vpack.c.bf16 %v6018, %v6017
    %v6044 = vpack.c.bf16 %v6020, %v6019
    %v6045 = vpack.c.bf16 %v6022, %v6021
    %v6046 = vpack.c.bf16 %v6024, %v6023
    %v6047 = vpack.c.bf16 %v6026, %v6025
    %v6048 = vpack.c.bf16 %v6028, %v6027
    %v6049 = vpack.c.bf16 %v6030, %v6029
    %v6050 = vpack.c.bf16 %v6032, %v6031
    %v6051 = vpack.c.bf16 %v6034, %v6033
    %v6052 = vpack.c.bf16 %v6036, %v6035
    %v6053 = vpack.c.bf16 %v5838, %v5838
    %v6054 = vpack.c.bf16 %v5839, %v5839
    %6055 = vmatprep.subr.bf16.mxu0 0
    %6056 = vmatpush1.bf16.msra.mxu0 %v6044
    %6057 = vmatprep.subr.bf16.mxu0 0
    %6058 = vmatpush1.bf16.msra.mxu0 %v6043
    %6059 = vmatprep.subr.bf16.mxu0 0
    %6060 = vmatpush1.bf16.msra.mxu0 %v6042
    %6061 = vmatprep.subr.bf16.mxu0 0
    %6062 = vmatpush1.bf16.msra.mxu0 %v6041
    %6063 = vmatprep.subr.bf16.mxu0 0
    %6064 = vmatpush1.bf16.msra.mxu0 %v6040
    %6065 = vmatprep.subr.bf16.mxu0 0
    %6066 = vmatpush1.bf16.msra.mxu0 %v6039
    %6067 = vmatprep.subr.bf16.mxu0 0
    %6068 = vmatpush1.bf16.msra.mxu0 %v6038
    %6069 = vmatprep.subr.bf16.mxu0 0
    %6070 = vmatpush1.bf16.msra.mxu0 %v6037
    %6071 = vmatprep.subr.bf16.mxu0 0
    %6072 = vmatpush2.bf16.msra.mxu0 %v6052
    %6073 = vmatprep.subr.bf16.mxu0 0
    %6074 = vmatpush2.bf16.msra.mxu0 %v6051
    %6075 = vmatprep.subr.bf16.mxu0 0
    %6076 = vmatpush2.bf16.msra.mxu0 %v6050
    %6077 = vmatprep.subr.bf16.mxu0 0
    %6078 = vmatpush2.bf16.msra.mxu0 %v6049
    %6079 = vmatprep.subr.bf16.mxu0 0
    %6080 = vmatpush2.bf16.msra.mxu0 %v6048
    %6081 = vmatprep.subr.bf16.mxu0 0
    %6082 = vmatpush2.bf16.msra.mxu0 %v6047
    %6083 = vmatprep.subr.bf16.mxu0 0
    %6084 = vmatpush2.bf16.msra.mxu0 %v6046
    %6085 = vmatprep.subr.bf16.mxu0 0
    %6086 = vmatpush2.bf16.msra.mxu0 %v6045
    %6087 = vmatprep.mubr.bf16.mxu0 %v6054
    %6088 = vmatmul.mubr.bf16.gmra.mxu0 %v6053
    %v6089 = vpop.f32.mrf.mxu0
    %v6090 = vadd.f32 0.0, %v6089
    %v6091 = vpop.f32.mrf.mxu0
    %v6092 = vpop.f32.mrf.mxu0
    %v6093 = vpop.f32.mrf.mxu0
    %6094 = vdwg.mxu0
    %v6095 = vld [vmem:[%s4] sm:$0x1]
    %v6096 = vld [vmem:[%s4 + $0x1] sm:$0x1]
    %v6097 = vmul.f32 %v6090, %v6095
    %v6098 = vadd.f32 %v6097, %v6096
    %vm6099 = vcmask 8192
    %6100 = vst.msk [vmem:[#allocation2] sm:$0x1] %vm6099, %v6098
    // Predicated region
    $region22: #{tpu_custom_call.1} parent=1 // pred_check
      _
    $region23: #{tpu_custom_call.1} parent=1 // pred_check_branch
      %6102 = sbr.rel (0) target = $region25
    $region24: #{tpu_custom_call.1} parent=1 // pred_region
      %s6104 = ssub.s32 16, 16
      %6105 = vsyncadd [#allocation3], %s6104
      %s6107 = sshll.u32 [#allocation2], 4
      %s6108 = int_to_ptr.vmem [resolvable:$true] %s6107
      %6110 = dma.vmem_to_hbm [thread:$0]  %s6108, 16, %s5, [#allocation3]
    $region25: #{tpu_custom_call.1} parent=1 // pred_fallthru
      _
    // Predicated region
    $region26: #{tpu_custom_call.1} parent=1 // pred_check
      _
    $region27: #{tpu_custom_call.1} parent=1 // pred_check_branch
      %6112 = sbr.rel (0) target = $region29
    $region28: #{tpu_custom_call.1} parent=1 // pred_region
      %6113 = dma.done [#allocation3], 16
    $region29: #{tpu_custom_call.1} parent=1 // pred_fallthru
      _
    %6114 = vsyncpa [#allocation3], 1

</llo_original>
